<compile_context>
chip_gen: v7x
topology: tpu7x:2x2x1
jax: 0.10.0
libtpu: 0.0.40
codegen_flags: <defaults>
</compile_context>

<pallas_src>
import functools
import math

import jax
import jax.numpy as jnp
from jax import lax
from jax.experimental import pallas as pl
from jax.experimental.pallas import tpu as pltpu


def _bert_attention_kernel(x_ref, mask_ref,
                           wq_ref, bq_ref, wk_ref, bk_ref, wv_ref, bv_ref,
                           wo_ref, bo_ref, gamma_ref, beta_ref,
                           out_ref, *, num_heads, head_dim, eps):
    # x_ref:    (1, S, H)   one batch element
    # mask_ref: (1, 1, S)   additive attention mask (0 / -10000)
    # wq/wk/wv: (nh, hd, H) per-head projection weights (PyTorch [out, in] layout, pre-split)
    # bq/bk/bv: (nh, 1, hd)
    # wo_ref:   (nh, H, hd) output projection, pre-split along its input axis
    # bo/gamma/beta: (1, H)
    # out_ref:  (1, S, H)
    x = x_ref[0]                                   # (S, H), native dtype (bf16 stays bf16)
    in_dt = x.dtype
    S, H = x.shape
    scale = 1.0 / math.sqrt(head_dim)

    mask = mask_ref[0].astype(jnp.float32)         # (1, S), broadcasts over query rows

    # contract activation dim 1 (H_in) with weight dim 1 (H_in): y = x @ W^T
    dn_in = (((1,), (1,)), ((), ()))

    acc = jnp.zeros((S, H), jnp.float32)           # output-projection accumulator (f32)

    for h in range(num_heads):                     # static unroll over heads
        q = (lax.dot_general(x, wq_ref[h], dn_in, preferred_element_type=jnp.float32)
             + bq_ref[h].astype(jnp.float32)).astype(in_dt)            # (S, hd)
        k = (lax.dot_general(x, wk_ref[h], dn_in, preferred_element_type=jnp.float32)
             + bk_ref[h].astype(jnp.float32)).astype(in_dt)            # (S, hd)
        v = (lax.dot_general(x, wv_ref[h], dn_in, preferred_element_type=jnp.float32)
             + bv_ref[h].astype(jnp.float32)).astype(in_dt)            # (S, hd)

        # scores[i, j] = q_i . k_j / sqrt(hd) + mask_j
        s = lax.dot_general(q, k, dn_in, preferred_element_type=jnp.float32)
        s = s * scale + mask                                           # (S, S), f32

        # numerically-stable softmax over keys
        s = s - jnp.max(s, axis=-1, keepdims=True)
        p = jnp.exp(s)
        p = p / jnp.sum(p, axis=-1, keepdims=True)
        # TODO(synk): attention_probs dropout omitted (eval / inference semantics).

        ctx = lax.dot_general(p.astype(in_dt), v, (((1,), (0,)), ((), ())),
                              preferred_element_type=jnp.float32)      # (S, hd)

        # output projection contribution of this head: ctx_h @ Wo[:, h*hd:(h+1)*hd]^T
        acc = acc + lax.dot_general(ctx.astype(in_dt), wo_ref[h], dn_in,
                                    preferred_element_type=jnp.float32)  # (S, H)

    # dense bias + residual, then LayerNorm (all in f32)
    # TODO(synk): hidden_dropout omitted (eval / inference semantics).
    y = acc + bo_ref[...].astype(jnp.float32) + x.astype(jnp.float32)
    mean = jnp.mean(y, axis=-1, keepdims=True)
    centered = y - mean
    var = jnp.mean(centered * centered, axis=-1, keepdims=True)
    y = centered * lax.rsqrt(var + eps)
    y = y * gamma_ref[...].astype(jnp.float32) + beta_ref[...].astype(jnp.float32)

    out_ref[0] = y.astype(out_ref.dtype)


def bert_attention(hidden_states, attention_mask, params, *, num_heads, eps=1e-12):
    """hidden_states: [B, S, H]; attention_mask: [B, 1, 1, S] additive -> [B, S, H]."""
    B, S, H = hidden_states.shape
    assert H % num_heads == 0
    hd = H // num_heads

    # Pre-split weights per head in the wrapper (constant-foldable, no big transposes).
    wq = params["wq"].reshape(num_heads, hd, H)        # rows h*hd:(h+1)*hd of [out, in]
    wk = params["wk"].reshape(num_heads, hd, H)
    wv = params["wv"].reshape(num_heads, hd, H)
    bq = params["bq"].reshape(num_heads, 1, hd)
    bk = params["bk"].reshape(num_heads, 1, hd)
    bv = params["bv"].reshape(num_heads, 1, hd)
    wo = params["wo"].reshape(H, num_heads, hd).transpose(1, 0, 2)   # (nh, H, hd)
    bo = params["bo"].reshape(1, H)
    gamma = params["ln_gamma"].reshape(1, H)
    beta = params["ln_beta"].reshape(1, H)
    mask = attention_mask.reshape(B, 1, S)

    dbytes = jnp.dtype(hidden_states.dtype).itemsize
    flops = B * (8 * S * H * H + 4 * S * S * H)
    transcendentals = B * num_heads * S * S
    bytes_accessed = (2 * B * S * H * dbytes            # x in + out
                      + B * S * 4                        # mask
                      + (4 * H * H + 6 * H) * 4)         # weights / biases / LN params

    grid = (B,)
    out = pl.pallas_call(
        functools.partial(_bert_attention_kernel,
                          num_heads=num_heads, head_dim=hd, eps=eps),
        out_shape=jax.ShapeDtypeStruct((B, S, H), hidden_states.dtype),
        grid_spec=pltpu.PrefetchScalarGridSpec(
            num_scalar_prefetch=0,
            grid=grid,
            in_specs=[
                pl.BlockSpec((1, S, H), lambda b: (b, 0, 0)),            # x
                pl.BlockSpec((1, 1, S), lambda b: (b, 0, 0)),            # mask
                pl.BlockSpec((num_heads, hd, H), lambda b: (0, 0, 0)),   # Wq
                pl.BlockSpec((num_heads, 1, hd), lambda b: (0, 0, 0)),   # bq
                pl.BlockSpec((num_heads, hd, H), lambda b: (0, 0, 0)),   # Wk
                pl.BlockSpec((num_heads, 1, hd), lambda b: (0, 0, 0)),   # bk
                pl.BlockSpec((num_heads, hd, H), lambda b: (0, 0, 0)),   # Wv
                pl.BlockSpec((num_heads, 1, hd), lambda b: (0, 0, 0)),   # bv
                pl.BlockSpec((num_heads, H, hd), lambda b: (0, 0, 0)),   # Wo (per-head cols)
                pl.BlockSpec((1, H), lambda b: (0, 0)),                  # bo
                pl.BlockSpec((1, H), lambda b: (0, 0)),                  # ln gamma
                pl.BlockSpec((1, H), lambda b: (0, 0)),                  # ln beta
            ],
            out_specs=pl.BlockSpec((1, S, H), lambda b: (b, 0, 0)),
        ),
        compiler_params=pltpu.CompilerParams(
            dimension_semantics=("parallel",),
            vmem_limit_bytes=64 * 1024 * 1024),
        cost_estimate=pl.CostEstimate(flops=flops,
                                      transcendentals=transcendentals,
                                      bytes_accessed=bytes_accessed),
    )(hidden_states, mask, wq, bq, wk, bk, wv, bv, wo, bo, gamma, beta)

    return out


def _reference(x, attention_mask, params, num_heads, eps=1e-12):
    B, S, H = x.shape
    hd = H // num_heads
    xf = x.astype(jnp.float32)

    def lin(a, w, b):
        return a @ w.T.astype(jnp.float32) + b.astype(jnp.float32)

    def split(a):
        return a.reshape(B, S, num_heads, hd).transpose(0, 2, 1, 3)

    q = split(lin(xf, params["wq"], params["bq"]))
    k = split(lin(xf, params["wk"], params["bk"]))
    v = split(lin(xf, params["wv"], params["bv"]))
    scores = jnp.einsum("bhqd,bhkd->bhqk", q, k) / math.sqrt(hd)
    scores = scores + attention_mask.astype(jnp.float32)
    probs = jax.nn.softmax(scores, axis=-1)
    ctx = jnp.einsum("bhqk,bhkd->bhqd", probs, v).transpose(0, 2, 1, 3).reshape(B, S, H)
    y = lin(ctx, params["wo"], params["bo"]) + xf
    mean = y.mean(-1, keepdims=True)
    var = ((y - mean) ** 2).mean(-1, keepdims=True)
    y = (y - mean) / jnp.sqrt(var + eps)
    return y * params["ln_gamma"] + params["ln_beta"]


if __name__ == "__main__":
    B, S, H, NH = 2, 8, 32, 4   # small synthetic config (head_dim = 8)

    key = jax.random.PRNGKey(0)
    ks = jax.random.split(key, 10)

    hidden_states = jax.random.normal(ks[0], (B, S, H), dtype=jnp.float32)

    params = {
        "wq": 0.05 * jax.random.normal(ks[1], (H, H), dtype=jnp.float32),
        "bq": 0.01 * jax.random.normal(ks[2], (H,), dtype=jnp.float32),
        "wk": 0.05 * jax.random.normal(ks[3], (H, H), dtype=jnp.float32),
        "bk": 0.01 * jax.random.normal(ks[4], (H,), dtype=jnp.float32),
        "wv": 0.05 * jax.random.normal(ks[5], (H, H), dtype=jnp.float32),
        "bv": 0.01 * jax.random.normal(ks[6], (H,), dtype=jnp.float32),
        "wo": 0.05 * jax.random.normal(ks[7], (H, H), dtype=jnp.float32),
        "bo": 0.01 * jax.random.normal(ks[8], (H,), dtype=jnp.float32),
        "ln_gamma": jnp.ones((H,), dtype=jnp.float32),
        "ln_beta": jnp.zeros((H,), dtype=jnp.float32),
    }

    # BERT-style additive mask [B, 1, 1, S]: batch 1 has only 6 valid tokens.
    pad = jnp.zeros((B, S), dtype=jnp.float32).at[1, 6:].set(1.0)
    attention_mask = (pad * -10000.0).reshape(B, 1, 1, S)

    out = bert_attention(hidden_states, attention_mask, params, num_heads=NH)
    jax.block_until_ready(out)

    ref = _reference(hidden_states, attention_mask, params, NH)
    assert out.shape == (B, S, H)
    assert jnp.allclose(out, ref, atol=1e-4, rtol=1e-4), "mismatch vs reference"

    print("KERNEL_OK")
</pallas_src>

<mosaic_0001>
module attributes {stable_mosaic.version = 11 : i64} {
  func.func @_bert_attention_kernel(%arg0: i32, %arg1: memref<1x8x32xf32, #tpu.memory_space<vmem>>, %arg2: memref<1x1x8xf32, #tpu.memory_space<vmem>>, %arg3: memref<4x8x32xf32, #tpu.memory_space<vmem>>, %arg4: memref<4x1x8xf32, #tpu.memory_space<vmem>>, %arg5: memref<4x8x32xf32, #tpu.memory_space<vmem>>, %arg6: memref<4x1x8xf32, #tpu.memory_space<vmem>>, %arg7: memref<4x8x32xf32, #tpu.memory_space<vmem>>, %arg8: memref<4x1x8xf32, #tpu.memory_space<vmem>>, %arg9: memref<4x32x8xf32, #tpu.memory_space<vmem>>, %arg10: memref<1x32xf32, #tpu.memory_space<vmem>>, %arg11: memref<1x32xf32, #tpu.memory_space<vmem>>, %arg12: memref<1x32xf32, #tpu.memory_space<vmem>>, %arg13: memref<1x8x32xf32, #tpu.memory_space<vmem>>) attributes {dimension_semantics = [#tpu.dimension_semantics<parallel>], iteration_bounds = array<i64: 2>, scalar_prefetch = 0 : i64, scratch_operands = 0 : i64, tpu.core_type = #tpu.core_type<tc>, window_params = [{transform_indices = @transform_0, window_bounds = array<i64: 1, 8, 32>}, {transform_indices = @transform_1, window_bounds = array<i64: 1, 1, 8>}, {pipeline_mode = #tpu.pipeline_mode<synchronous>, transform_indices = @transform_2, window_bounds = array<i64: 4, 8, 32>}, {pipeline_mode = #tpu.pipeline_mode<synchronous>, transform_indices = @transform_3, window_bounds = array<i64: 4, 1, 8>}, {pipeline_mode = #tpu.pipeline_mode<synchronous>, transform_indices = @transform_4, window_bounds = array<i64: 4, 8, 32>}, {pipeline_mode = #tpu.pipeline_mode<synchronous>, transform_indices = @transform_5, window_bounds = array<i64: 4, 1, 8>}, {pipeline_mode = #tpu.pipeline_mode<synchronous>, transform_indices = @transform_6, window_bounds = array<i64: 4, 8, 32>}, {pipeline_mode = #tpu.pipeline_mode<synchronous>, transform_indices = @transform_7, window_bounds = array<i64: 4, 1, 8>}, {pipeline_mode = #tpu.pipeline_mode<synchronous>, transform_indices = @transform_8, window_bounds = array<i64: 4, 32, 8>}, {pipeline_mode = #tpu.pipeline_mode<synchronous>, transform_indices = @transform_9, window_bounds = array<i64: 1, 32>}, {pipeline_mode = #tpu.pipeline_mode<synchronous>, transform_indices = @transform_10, window_bounds = array<i64: 1, 32>}, {pipeline_mode = #tpu.pipeline_mode<synchronous>, transform_indices = @transform_11, window_bounds = array<i64: 1, 32>}, {transform_indices = @transform_12, window_bounds = array<i64: 1, 8, 32>}]} {
    %c0 = arith.constant 0 : index
    %c0_0 = arith.constant 0 : index
    %c0_1 = arith.constant 0 : index
    %0 = vector.load %arg1[%c0, %c0_0, %c0_1] : memref<1x8x32xf32, #tpu.memory_space<vmem>>, vector<1x8x32xf32>
    %1 = vector.shape_cast %0 : vector<1x8x32xf32> to vector<8x32xf32>
    %c0_2 = arith.constant 0 : index
    %c0_3 = arith.constant 0 : index
    %c0_4 = arith.constant 0 : index
    %2 = vector.load %arg2[%c0_2, %c0_3, %c0_4] : memref<1x1x8xf32, #tpu.memory_space<vmem>>, vector<1x1x8xf32>
    %3 = vector.shape_cast %2 : vector<1x1x8xf32> to vector<1x8xf32>
    %cst = arith.constant 0.000000e+00 : f32
    %4 = vector.broadcast %cst : f32 to vector<8x32xf32>
    %c0_5 = arith.constant 0 : index
    %c0_6 = arith.constant 0 : index
    %c0_7 = arith.constant 0 : index
    %5 = vector.load %arg3[%c0_5, %c0_6, %c0_7] : memref<4x8x32xf32, #tpu.memory_space<vmem>>, vector<1x8x32xf32>
    %6 = vector.shape_cast %5 : vector<1x8x32xf32> to vector<8x32xf32>
    %cst_8 = arith.constant dense<0.000000e+00> : vector<8x8xf32>
    %7 = tpu.matmul %1, %6, %cst_8 {dimension_numbers = #tpu.dot_dimension_numbers<[1], [1], [0], [0], [0, 0, 1, 0], [], []>} : vector<8x32xf32>, vector<8x32xf32>, vector<8x8xf32> -> vector<8x8xf32>
    %c0_9 = arith.constant 0 : index
    %c0_10 = arith.constant 0 : index
    %c0_11 = arith.constant 0 : index
    %8 = vector.load %arg4[%c0_9, %c0_10, %c0_11] : memref<4x1x8xf32, #tpu.memory_space<vmem>>, vector<1x1x8xf32>
    %9 = vector.shape_cast %8 : vector<1x1x8xf32> to vector<1x8xf32>
    %10 = vector.broadcast %9 : vector<1x8xf32> to vector<8x8xf32>
    %11 = arith.addf %7, %10 : vector<8x8xf32>
    %c0_12 = arith.constant 0 : index
    %c0_13 = arith.constant 0 : index
    %c0_14 = arith.constant 0 : index
    %12 = vector.load %arg5[%c0_12, %c0_13, %c0_14] : memref<4x8x32xf32, #tpu.memory_space<vmem>>, vector<1x8x32xf32>
    %13 = vector.shape_cast %12 : vector<1x8x32xf32> to vector<8x32xf32>
    %cst_15 = arith.constant dense<0.000000e+00> : vector<8x8xf32>
    %14 = tpu.matmul %1, %13, %cst_15 {dimension_numbers = #tpu.dot_dimension_numbers<[1], [1], [0], [0], [0, 0, 1, 0], [], []>} : vector<8x32xf32>, vector<8x32xf32>, vector<8x8xf32> -> vector<8x8xf32>
    %c0_16 = arith.constant 0 : index
    %c0_17 = arith.constant 0 : index
    %c0_18 = arith.constant 0 : index
    %15 = vector.load %arg6[%c0_16, %c0_17, %c0_18] : memref<4x1x8xf32, #tpu.memory_space<vmem>>, vector<1x1x8xf32>
    %16 = vector.shape_cast %15 : vector<1x1x8xf32> to vector<1x8xf32>
    %17 = vector.broadcast %16 : vector<1x8xf32> to vector<8x8xf32>
    %18 = arith.addf %14, %17 : vector<8x8xf32>
    %c0_19 = arith.constant 0 : index
    %c0_20 = arith.constant 0 : index
    %c0_21 = arith.constant 0 : index
    %19 = vector.load %arg7[%c0_19, %c0_20, %c0_21] : memref<4x8x32xf32, #tpu.memory_space<vmem>>, vector<1x8x32xf32>
    %20 = vector.shape_cast %19 : vector<1x8x32xf32> to vector<8x32xf32>
    %cst_22 = arith.constant dense<0.000000e+00> : vector<8x8xf32>
    %21 = tpu.matmul %1, %20, %cst_22 {dimension_numbers = #tpu.dot_dimension_numbers<[1], [1], [0], [0], [0, 0, 1, 0], [], []>} : vector<8x32xf32>, vector<8x32xf32>, vector<8x8xf32> -> vector<8x8xf32>
    %c0_23 = arith.constant 0 : index
    %c0_24 = arith.constant 0 : index
    %c0_25 = arith.constant 0 : index
    %22 = vector.load %arg8[%c0_23, %c0_24, %c0_25] : memref<4x1x8xf32, #tpu.memory_space<vmem>>, vector<1x1x8xf32>
    %23 = vector.shape_cast %22 : vector<1x1x8xf32> to vector<1x8xf32>
    %24 = vector.broadcast %23 : vector<1x8xf32> to vector<8x8xf32>
    %25 = arith.addf %21, %24 : vector<8x8xf32>
    %cst_26 = arith.constant dense<0.000000e+00> : vector<8x8xf32>
    %26 = tpu.matmul %11, %18, %cst_26 {dimension_numbers = #tpu.dot_dimension_numbers<[1], [1], [0], [0], [0, 0, 1, 0], [], []>} : vector<8x8xf32>, vector<8x8xf32>, vector<8x8xf32> -> vector<8x8xf32>
    %cst_27 = arith.constant 0.353553385 : f32
    %27 = vector.broadcast %cst_27 : f32 to vector<8x8xf32>
    %28 = arith.mulf %26, %27 : vector<8x8xf32>
    %29 = vector.broadcast %3 : vector<1x8xf32> to vector<8x8xf32>
    %30 = arith.addf %28, %29 : vector<8x8xf32>
    %cst_28 = arith.constant dense<0xFF800000> : vector<8xf32>
    %31 = vector.multi_reduction <maximumf>, %30, %cst_28 [1] : vector<8x8xf32> to vector<8xf32>
    %32 = vector.shape_cast %31 : vector<8xf32> to vector<8x1xf32>
    %33 = vector.broadcast %32 : vector<8x1xf32> to vector<8x8xf32>
    %34 = arith.subf %30, %33 : vector<8x8xf32>
    %35 = math.exp %34 : vector<8x8xf32>
    %cst_29 = arith.constant dense<0.000000e+00> : vector<8xf32>
    %36 = vector.multi_reduction <add>, %35, %cst_29 [1] : vector<8x8xf32> to vector<8xf32>
    %37 = vector.shape_cast %36 : vector<8xf32> to vector<8x1xf32>
    %38 = vector.broadcast %37 : vector<8x1xf32> to vector<8x8xf32>
    %39 = arith.divf %35, %38 : vector<8x8xf32>
    %cst_30 = arith.constant dense<0.000000e+00> : vector<8x8xf32>
    %40 = tpu.matmul %39, %25, %cst_30 {dimension_numbers = #tpu.dot_dimension_numbers<[1], [0], [0], [1], [0, 0, 1, 1], [], []>} : vector<8x8xf32>, vector<8x8xf32>, vector<8x8xf32> -> vector<8x8xf32>
    %c0_31 = arith.constant 0 : index
    %c0_32 = arith.constant 0 : index
    %c0_33 = arith.constant 0 : index
    %41 = vector.load %arg9[%c0_31, %c0_32, %c0_33] : memref<4x32x8xf32, #tpu.memory_space<vmem>>, vector<1x32x8xf32>
    %42 = vector.shape_cast %41 : vector<1x32x8xf32> to vector<32x8xf32>
    %cst_34 = arith.constant dense<0.000000e+00> : vector<8x32xf32>
    %43 = tpu.matmul %40, %42, %cst_34 {dimension_numbers = #tpu.dot_dimension_numbers<[1], [1], [0], [0], [0, 0, 1, 0], [], []>} : vector<8x8xf32>, vector<32x8xf32>, vector<8x32xf32> -> vector<8x32xf32>
    %44 = arith.addf %4, %43 : vector<8x32xf32>
    %c1 = arith.constant 1 : index
    %c0_35 = arith.constant 0 : index
    %c0_36 = arith.constant 0 : index
    %45 = vector.load %arg3[%c1, %c0_35, %c0_36] : memref<4x8x32xf32, #tpu.memory_space<vmem>>, vector<1x8x32xf32>
    %46 = vector.shape_cast %45 : vector<1x8x32xf32> to vector<8x32xf32>
    %cst_37 = arith.constant dense<0.000000e+00> : vector<8x8xf32>
    %47 = tpu.matmul %1, %46, %cst_37 {dimension_numbers = #tpu.dot_dimension_numbers<[1], [1], [0], [0], [0, 0, 1, 0], [], []>} : vector<8x32xf32>, vector<8x32xf32>, vector<8x8xf32> -> vector<8x8xf32>
    %c1_38 = arith.constant 1 : index
    %c0_39 = arith.constant 0 : index
    %c0_40 = arith.constant 0 : index
    %48 = vector.load %arg4[%c1_38, %c0_39, %c0_40] : memref<4x1x8xf32, #tpu.memory_space<vmem>>, vector<1x1x8xf32>
    %49 = vector.shape_cast %48 : vector<1x1x8xf32> to vector<1x8xf32>
    %50 = vector.broadcast %49 : vector<1x8xf32> to vector<8x8xf32>
    %51 = arith.addf %47, %50 : vector<8x8xf32>
    %c1_41 = arith.constant 1 : index
    %c0_42 = arith.constant 0 : index
    %c0_43 = arith.constant 0 : index
    %52 = vector.load %arg5[%c1_41, %c0_42, %c0_43] : memref<4x8x32xf32, #tpu.memory_space<vmem>>, vector<1x8x32xf32>
    %53 = vector.shape_cast %52 : vector<1x8x32xf32> to vector<8x32xf32>
    %cst_44 = arith.constant dense<0.000000e+00> : vector<8x8xf32>
    %54 = tpu.matmul %1, %53, %cst_44 {dimension_numbers = #tpu.dot_dimension_numbers<[1], [1], [0], [0], [0, 0, 1, 0], [], []>} : vector<8x32xf32>, vector<8x32xf32>, vector<8x8xf32> -> vector<8x8xf32>
    %c1_45 = arith.constant 1 : index
    %c0_46 = arith.constant 0 : index
    %c0_47 = arith.constant 0 : index
    %55 = vector.load %arg6[%c1_45, %c0_46, %c0_47] : memref<4x1x8xf32, #tpu.memory_space<vmem>>, vector<1x1x8xf32>
    %56 = vector.shape_cast %55 : vector<1x1x8xf32> to vector<1x8xf32>
    %57 = vector.broadcast %56 : vector<1x8xf32> to vector<8x8xf32>
    %58 = arith.addf %54, %57 : vector<8x8xf32>
    %c1_48 = arith.constant 1 : index
    %c0_49 = arith.constant 0 : index
    %c0_50 = arith.constant 0 : index
    %59 = vector.load %arg7[%c1_48, %c0_49, %c0_50] : memref<4x8x32xf32, #tpu.memory_space<vmem>>, vector<1x8x32xf32>
    %60 = vector.shape_cast %59 : vector<1x8x32xf32> to vector<8x32xf32>
    %cst_51 = arith.constant dense<0.000000e+00> : vector<8x8xf32>
    %61 = tpu.matmul %1, %60, %cst_51 {dimension_numbers = #tpu.dot_dimension_numbers<[1], [1], [0], [0], [0, 0, 1, 0], [], []>} : vector<8x32xf32>, vector<8x32xf32>, vector<8x8xf32> -> vector<8x8xf32>
    %c1_52 = arith.constant 1 : index
    %c0_53 = arith.constant 0 : index
    %c0_54 = arith.constant 0 : index
    %62 = vector.load %arg8[%c1_52, %c0_53, %c0_54] : memref<4x1x8xf32, #tpu.memory_space<vmem>>, vector<1x1x8xf32>
    %63 = vector.shape_cast %62 : vector<1x1x8xf32> to vector<1x8xf32>
    %64 = vector.broadcast %63 : vector<1x8xf32> to vector<8x8xf32>
    %65 = arith.addf %61, %64 : vector<8x8xf32>
    %cst_55 = arith.constant dense<0.000000e+00> : vector<8x8xf32>
    %66 = tpu.matmul %51, %58, %cst_55 {dimension_numbers = #tpu.dot_dimension_numbers<[1], [1], [0], [0], [0, 0, 1, 0], [], []>} : vector<8x8xf32>, vector<8x8xf32>, vector<8x8xf32> -> vector<8x8xf32>
    %cst_56 = arith.constant 0.353553385 : f32
    %67 = vector.broadcast %cst_56 : f32 to vector<8x8xf32>
    %68 = arith.mulf %66, %67 : vector<8x8xf32>
    %69 = vector.broadcast %3 : vector<1x8xf32> to vector<8x8xf32>
    %70 = arith.addf %68, %69 : vector<8x8xf32>
    %cst_57 = arith.constant dense<0xFF800000> : vector<8xf32>
    %71 = vector.multi_reduction <maximumf>, %70, %cst_57 [1] : vector<8x8xf32> to vector<8xf32>
    %72 = vector.shape_cast %71 : vector<8xf32> to vector<8x1xf32>
    %73 = vector.broadcast %72 : vector<8x1xf32> to vector<8x8xf32>
    %74 = arith.subf %70, %73 : vector<8x8xf32>
    %75 = math.exp %74 : vector<8x8xf32>
    %cst_58 = arith.constant dense<0.000000e+00> : vector<8xf32>
    %76 = vector.multi_reduction <add>, %75, %cst_58 [1] : vector<8x8xf32> to vector<8xf32>
    %77 = vector.shape_cast %76 : vector<8xf32> to vector<8x1xf32>
    %78 = vector.broadcast %77 : vector<8x1xf32> to vector<8x8xf32>
    %79 = arith.divf %75, %78 : vector<8x8xf32>
    %cst_59 = arith.constant dense<0.000000e+00> : vector<8x8xf32>
    %80 = tpu.matmul %79, %65, %cst_59 {dimension_numbers = #tpu.dot_dimension_numbers<[1], [0], [0], [1], [0, 0, 1, 1], [], []>} : vector<8x8xf32>, vector<8x8xf32>, vector<8x8xf32> -> vector<8x8xf32>
    %c1_60 = arith.constant 1 : index
    %c0_61 = arith.constant 0 : index
    %c0_62 = arith.constant 0 : index
    %81 = vector.load %arg9[%c1_60, %c0_61, %c0_62] : memref<4x32x8xf32, #tpu.memory_space<vmem>>, vector<1x32x8xf32>
    %82 = vector.shape_cast %81 : vector<1x32x8xf32> to vector<32x8xf32>
    %cst_63 = arith.constant dense<0.000000e+00> : vector<8x32xf32>
    %83 = tpu.matmul %80, %82, %cst_63 {dimension_numbers = #tpu.dot_dimension_numbers<[1], [1], [0], [0], [0, 0, 1, 0], [], []>} : vector<8x8xf32>, vector<32x8xf32>, vector<8x32xf32> -> vector<8x32xf32>
    %84 = arith.addf %44, %83 : vector<8x32xf32>
    %c2 = arith.constant 2 : index
    %c0_64 = arith.constant 0 : index
    %c0_65 = arith.constant 0 : index
    %85 = vector.load %arg3[%c2, %c0_64, %c0_65] : memref<4x8x32xf32, #tpu.memory_space<vmem>>, vector<1x8x32xf32>
    %86 = vector.shape_cast %85 : vector<1x8x32xf32> to vector<8x32xf32>
    %cst_66 = arith.constant dense<0.000000e+00> : vector<8x8xf32>
    %87 = tpu.matmul %1, %86, %cst_66 {dimension_numbers = #tpu.dot_dimension_numbers<[1], [1], [0], [0], [0, 0, 1, 0], [], []>} : vector<8x32xf32>, vector<8x32xf32>, vector<8x8xf32> -> vector<8x8xf32>
    %c2_67 = arith.constant 2 : index
    %c0_68 = arith.constant 0 : index
    %c0_69 = arith.constant 0 : index
    %88 = vector.load %arg4[%c2_67, %c0_68, %c0_69] : memref<4x1x8xf32, #tpu.memory_space<vmem>>, vector<1x1x8xf32>
    %89 = vector.shape_cast %88 : vector<1x1x8xf32> to vector<1x8xf32>
    %90 = vector.broadcast %89 : vector<1x8xf32> to vector<8x8xf32>
    %91 = arith.addf %87, %90 : vector<8x8xf32>
    %c2_70 = arith.constant 2 : index
    %c0_71 = arith.constant 0 : index
    %c0_72 = arith.constant 0 : index
    %92 = vector.load %arg5[%c2_70, %c0_71, %c0_72] : memref<4x8x32xf32, #tpu.memory_space<vmem>>, vector<1x8x32xf32>
    %93 = vector.shape_cast %92 : vector<1x8x32xf32> to vector<8x32xf32>
    %cst_73 = arith.constant dense<0.000000e+00> : vector<8x8xf32>
    %94 = tpu.matmul %1, %93, %cst_73 {dimension_numbers = #tpu.dot_dimension_numbers<[1], [1], [0], [0], [0, 0, 1, 0], [], []>} : vector<8x32xf32>, vector<8x32xf32>, vector<8x8xf32> -> vector<8x8xf32>
    %c2_74 = arith.constant 2 : index
    %c0_75 = arith.constant 0 : index
    %c0_76 = arith.constant 0 : index
    %95 = vector.load %arg6[%c2_74, %c0_75, %c0_76] : memref<4x1x8xf32, #tpu.memory_space<vmem>>, vector<1x1x8xf32>
    %96 = vector.shape_cast %95 : vector<1x1x8xf32> to vector<1x8xf32>
    %97 = vector.broadcast %96 : vector<1x8xf32> to vector<8x8xf32>
    %98 = arith.addf %94, %97 : vector<8x8xf32>
    %c2_77 = arith.constant 2 : index
    %c0_78 = arith.constant 0 : index
    %c0_79 = arith.constant 0 : index
    %99 = vector.load %arg7[%c2_77, %c0_78, %c0_79] : memref<4x8x32xf32, #tpu.memory_space<vmem>>, vector<1x8x32xf32>
    %100 = vector.shape_cast %99 : vector<1x8x32xf32> to vector<8x32xf32>
    %cst_80 = arith.constant dense<0.000000e+00> : vector<8x8xf32>
    %101 = tpu.matmul %1, %100, %cst_80 {dimension_numbers = #tpu.dot_dimension_numbers<[1], [1], [0], [0], [0, 0, 1, 0], [], []>} : vector<8x32xf32>, vector<8x32xf32>, vector<8x8xf32> -> vector<8x8xf32>
    %c2_81 = arith.constant 2 : index
    %c0_82 = arith.constant 0 : index
    %c0_83 = arith.constant 0 : index
    %102 = vector.load %arg8[%c2_81, %c0_82, %c0_83] : memref<4x1x8xf32, #tpu.memory_space<vmem>>, vector<1x1x8xf32>
    %103 = vector.shape_cast %102 : vector<1x1x8xf32> to vector<1x8xf32>
    %104 = vector.broadcast %103 : vector<1x8xf32> to vector<8x8xf32>
    %105 = arith.addf %101, %104 : vector<8x8xf32>
    %cst_84 = arith.constant dense<0.000000e+00> : vector<8x8xf32>
    %106 = tpu.matmul %91, %98, %cst_84 {dimension_numbers = #tpu.dot_dimension_numbers<[1], [1], [0], [0], [0, 0, 1, 0], [], []>} : vector<8x8xf32>, vector<8x8xf32>, vector<8x8xf32> -> vector<8x8xf32>
    %cst_85 = arith.constant 0.353553385 : f32
    %107 = vector.broadcast %cst_85 : f32 to vector<8x8xf32>
    %108 = arith.mulf %106, %107 : vector<8x8xf32>
    %109 = vector.broadcast %3 : vector<1x8xf32> to vector<8x8xf32>
    %110 = arith.addf %108, %109 : vector<8x8xf32>
    %cst_86 = arith.constant dense<0xFF800000> : vector<8xf32>
    %111 = vector.multi_reduction <maximumf>, %110, %cst_86 [1] : vector<8x8xf32> to vector<8xf32>
    %112 = vector.shape_cast %111 : vector<8xf32> to vector<8x1xf32>
    %113 = vector.broadcast %112 : vector<8x1xf32> to vector<8x8xf32>
    %114 = arith.subf %110, %113 : vector<8x8xf32>
    %115 = math.exp %114 : vector<8x8xf32>
    %cst_87 = arith.constant dense<0.000000e+00> : vector<8xf32>
    %116 = vector.multi_reduction <add>, %115, %cst_87 [1] : vector<8x8xf32> to vector<8xf32>
    %117 = vector.shape_cast %116 : vector<8xf32> to vector<8x1xf32>
    %118 = vector.broadcast %117 : vector<8x1xf32> to vector<8x8xf32>
    %119 = arith.divf %115, %118 : vector<8x8xf32>
    %cst_88 = arith.constant dense<0.000000e+00> : vector<8x8xf32>
    %120 = tpu.matmul %119, %105, %cst_88 {dimension_numbers = #tpu.dot_dimension_numbers<[1], [0], [0], [1], [0, 0, 1, 1], [], []>} : vector<8x8xf32>, vector<8x8xf32>, vector<8x8xf32> -> vector<8x8xf32>
    %c2_89 = arith.constant 2 : index
    %c0_90 = arith.constant 0 : index
    %c0_91 = arith.constant 0 : index
    %121 = vector.load %arg9[%c2_89, %c0_90, %c0_91] : memref<4x32x8xf32, #tpu.memory_space<vmem>>, vector<1x32x8xf32>
    %122 = vector.shape_cast %121 : vector<1x32x8xf32> to vector<32x8xf32>
    %cst_92 = arith.constant dense<0.000000e+00> : vector<8x32xf32>
    %123 = tpu.matmul %120, %122, %cst_92 {dimension_numbers = #tpu.dot_dimension_numbers<[1], [1], [0], [0], [0, 0, 1, 0], [], []>} : vector<8x8xf32>, vector<32x8xf32>, vector<8x32xf32> -> vector<8x32xf32>
    %124 = arith.addf %84, %123 : vector<8x32xf32>
    %c3 = arith.constant 3 : index
    %c0_93 = arith.constant 0 : index
    %c0_94 = arith.constant 0 : index
    %125 = vector.load %arg3[%c3, %c0_93, %c0_94] : memref<4x8x32xf32, #tpu.memory_space<vmem>>, vector<1x8x32xf32>
    %126 = vector.shape_cast %125 : vector<1x8x32xf32> to vector<8x32xf32>
    %cst_95 = arith.constant dense<0.000000e+00> : vector<8x8xf32>
    %127 = tpu.matmul %1, %126, %cst_95 {dimension_numbers = #tpu.dot_dimension_numbers<[1], [1], [0], [0], [0, 0, 1, 0], [], []>} : vector<8x32xf32>, vector<8x32xf32>, vector<8x8xf32> -> vector<8x8xf32>
    %c3_96 = arith.constant 3 : index
    %c0_97 = arith.constant 0 : index
    %c0_98 = arith.constant 0 : index
    %128 = vector.load %arg4[%c3_96, %c0_97, %c0_98] : memref<4x1x8xf32, #tpu.memory_space<vmem>>, vector<1x1x8xf32>
    %129 = vector.shape_cast %128 : vector<1x1x8xf32> to vector<1x8xf32>
    %130 = vector.broadcast %129 : vector<1x8xf32> to vector<8x8xf32>
    %131 = arith.addf %127, %130 : vector<8x8xf32>
    %c3_99 = arith.constant 3 : index
    %c0_100 = arith.constant 0 : index
    %c0_101 = arith.constant 0 : index
    %132 = vector.load %arg5[%c3_99, %c0_100, %c0_101] : memref<4x8x32xf32, #tpu.memory_space<vmem>>, vector<1x8x32xf32>
    %133 = vector.shape_cast %132 : vector<1x8x32xf32> to vector<8x32xf32>
    %cst_102 = arith.constant dense<0.000000e+00> : vector<8x8xf32>
    %134 = tpu.matmul %1, %133, %cst_102 {dimension_numbers = #tpu.dot_dimension_numbers<[1], [1], [0], [0], [0, 0, 1, 0], [], []>} : vector<8x32xf32>, vector<8x32xf32>, vector<8x8xf32> -> vector<8x8xf32>
    %c3_103 = arith.constant 3 : index
    %c0_104 = arith.constant 0 : index
    %c0_105 = arith.constant 0 : index
    %135 = vector.load %arg6[%c3_103, %c0_104, %c0_105] : memref<4x1x8xf32, #tpu.memory_space<vmem>>, vector<1x1x8xf32>
    %136 = vector.shape_cast %135 : vector<1x1x8xf32> to vector<1x8xf32>
    %137 = vector.broadcast %136 : vector<1x8xf32> to vector<8x8xf32>
    %138 = arith.addf %134, %137 : vector<8x8xf32>
    %c3_106 = arith.constant 3 : index
    %c0_107 = arith.constant 0 : index
    %c0_108 = arith.constant 0 : index
    %139 = vector.load %arg7[%c3_106, %c0_107, %c0_108] : memref<4x8x32xf32, #tpu.memory_space<vmem>>, vector<1x8x32xf32>
    %140 = vector.shape_cast %139 : vector<1x8x32xf32> to vector<8x32xf32>
    %cst_109 = arith.constant dense<0.000000e+00> : vector<8x8xf32>
    %141 = tpu.matmul %1, %140, %cst_109 {dimension_numbers = #tpu.dot_dimension_numbers<[1], [1], [0], [0], [0, 0, 1, 0], [], []>} : vector<8x32xf32>, vector<8x32xf32>, vector<8x8xf32> -> vector<8x8xf32>
    %c3_110 = arith.constant 3 : index
    %c0_111 = arith.constant 0 : index
    %c0_112 = arith.constant 0 : index
    %142 = vector.load %arg8[%c3_110, %c0_111, %c0_112] : memref<4x1x8xf32, #tpu.memory_space<vmem>>, vector<1x1x8xf32>
    %143 = vector.shape_cast %142 : vector<1x1x8xf32> to vector<1x8xf32>
    %144 = vector.broadcast %143 : vector<1x8xf32> to vector<8x8xf32>
    %145 = arith.addf %141, %144 : vector<8x8xf32>
    %cst_113 = arith.constant dense<0.000000e+00> : vector<8x8xf32>
    %146 = tpu.matmul %131, %138, %cst_113 {dimension_numbers = #tpu.dot_dimension_numbers<[1], [1], [0], [0], [0, 0, 1, 0], [], []>} : vector<8x8xf32>, vector<8x8xf32>, vector<8x8xf32> -> vector<8x8xf32>
    %cst_114 = arith.constant 0.353553385 : f32
    %147 = vector.broadcast %cst_114 : f32 to vector<8x8xf32>
    %148 = arith.mulf %146, %147 : vector<8x8xf32>
    %149 = vector.broadcast %3 : vector<1x8xf32> to vector<8x8xf32>
    %150 = arith.addf %148, %149 : vector<8x8xf32>
    %cst_115 = arith.constant dense<0xFF800000> : vector<8xf32>
    %151 = vector.multi_reduction <maximumf>, %150, %cst_115 [1] : vector<8x8xf32> to vector<8xf32>
    %152 = vector.shape_cast %151 : vector<8xf32> to vector<8x1xf32>
    %153 = vector.broadcast %152 : vector<8x1xf32> to vector<8x8xf32>
    %154 = arith.subf %150, %153 : vector<8x8xf32>
    %155 = math.exp %154 : vector<8x8xf32>
    %cst_116 = arith.constant dense<0.000000e+00> : vector<8xf32>
    %156 = vector.multi_reduction <add>, %155, %cst_116 [1] : vector<8x8xf32> to vector<8xf32>
    %157 = vector.shape_cast %156 : vector<8xf32> to vector<8x1xf32>
    %158 = vector.broadcast %157 : vector<8x1xf32> to vector<8x8xf32>
    %159 = arith.divf %155, %158 : vector<8x8xf32>
    %cst_117 = arith.constant dense<0.000000e+00> : vector<8x8xf32>
    %160 = tpu.matmul %159, %145, %cst_117 {dimension_numbers = #tpu.dot_dimension_numbers<[1], [0], [0], [1], [0, 0, 1, 1], [], []>} : vector<8x8xf32>, vector<8x8xf32>, vector<8x8xf32> -> vector<8x8xf32>
    %c3_118 = arith.constant 3 : index
    %c0_119 = arith.constant 0 : index
    %c0_120 = arith.constant 0 : index
    %161 = vector.load %arg9[%c3_118, %c0_119, %c0_120] : memref<4x32x8xf32, #tpu.memory_space<vmem>>, vector<1x32x8xf32>
    %162 = vector.shape_cast %161 : vector<1x32x8xf32> to vector<32x8xf32>
    %cst_121 = arith.constant dense<0.000000e+00> : vector<8x32xf32>
    %163 = tpu.matmul %160, %162, %cst_121 {dimension_numbers = #tpu.dot_dimension_numbers<[1], [1], [0], [0], [0, 0, 1, 0], [], []>} : vector<8x8xf32>, vector<32x8xf32>, vector<8x32xf32> -> vector<8x32xf32>
    %164 = arith.addf %124, %163 : vector<8x32xf32>
    %c0_122 = arith.constant 0 : index
    %c0_123 = arith.constant 0 : index
    %165 = vector.load %arg10[%c0_122, %c0_123] : memref<1x32xf32, #tpu.memory_space<vmem>>, vector<1x32xf32>
    %166 = vector.broadcast %165 : vector<1x32xf32> to vector<8x32xf32>
    %167 = arith.addf %164, %166 : vector<8x32xf32>
    %168 = arith.addf %167, %1 : vector<8x32xf32>
    %cst_124 = arith.constant dense<0.000000e+00> : vector<8xf32>
    %169 = vector.multi_reduction <add>, %168, %cst_124 [1] : vector<8x32xf32> to vector<8xf32>
    %170 = vector.shape_cast %169 : vector<8xf32> to vector<8x1xf32>
    %cst_125 = arith.constant 3.200000e+01 : f32
    %171 = vector.broadcast %cst_125 : f32 to vector<8x1xf32>
    %172 = arith.divf %170, %171 : vector<8x1xf32>
    %173 = vector.broadcast %172 : vector<8x1xf32> to vector<8x32xf32>
    %174 = arith.subf %168, %173 : vector<8x32xf32>
    %175 = arith.mulf %174, %174 : vector<8x32xf32>
    %cst_126 = arith.constant dense<0.000000e+00> : vector<8xf32>
    %176 = vector.multi_reduction <add>, %175, %cst_126 [1] : vector<8x32xf32> to vector<8xf32>
    %177 = vector.shape_cast %176 : vector<8xf32> to vector<8x1xf32>
    %cst_127 = arith.constant 3.200000e+01 : f32
    %178 = vector.broadcast %cst_127 : f32 to vector<8x1xf32>
    %179 = arith.divf %177, %178 : vector<8x1xf32>
    %cst_128 = arith.constant 9.99999996E-13 : f32
    %180 = vector.broadcast %cst_128 : f32 to vector<8x1xf32>
    %181 = arith.addf %179, %180 : vector<8x1xf32>
    %182 = math.rsqrt %181 : vector<8x1xf32>
    %183 = vector.broadcast %182 : vector<8x1xf32> to vector<8x32xf32>
    %184 = arith.mulf %174, %183 : vector<8x32xf32>
    %c0_129 = arith.constant 0 : index
    %c0_130 = arith.constant 0 : index
    %185 = vector.load %arg11[%c0_129, %c0_130] : memref<1x32xf32, #tpu.memory_space<vmem>>, vector<1x32xf32>
    %186 = vector.broadcast %185 : vector<1x32xf32> to vector<8x32xf32>
    %187 = arith.mulf %184, %186 : vector<8x32xf32>
    %c0_131 = arith.constant 0 : index
    %c0_132 = arith.constant 0 : index
    %188 = vector.load %arg12[%c0_131, %c0_132] : memref<1x32xf32, #tpu.memory_space<vmem>>, vector<1x32xf32>
    %189 = vector.broadcast %188 : vector<1x32xf32> to vector<8x32xf32>
    %190 = arith.addf %187, %189 : vector<8x32xf32>
    %c0_133 = arith.constant 0 : index
    %c0_134 = arith.constant 0 : index
    %c0_135 = arith.constant 0 : index
    %191 = vector.load %arg13[%c0_133, %c0_134, %c0_135] : memref<1x8x32xf32, #tpu.memory_space<vmem>>, vector<1x8x32xf32>
    %192 = vector.shape_cast %191 : vector<1x8x32xf32> to vector<8x32xf32>
    %193 = vector.shape_cast %190 : vector<8x32xf32> to vector<1x8x32xf32>
    tpu.vector_store %arg13[%c0_133, %c0_134, %c0_135], %193 {strides = array<i32>} : memref<1x8x32xf32, #tpu.memory_space<vmem>>, vector<1x8x32xf32>,
    return
  }
  func.func @transform_0(%arg0: i32) -> (i32, i32, i32) {
    %c0_i32 = arith.constant 0 : i32
    %c0_i32_0 = arith.constant 0 : i32
    %c0_i32_1 = arith.constant 0 : i32
    return %arg0, %c0_i32, %c0_i32_0 : i32, i32, i32
  }
  func.func @transform_1(%arg0: i32) -> (i32, i32, i32) {
    %c0_i32 = arith.constant 0 : i32
    %c0_i32_0 = arith.constant 0 : i32
    %c0_i32_1 = arith.constant 0 : i32
    return %arg0, %c0_i32, %c0_i32_0 : i32, i32, i32
  }
  func.func @transform_2(%arg0: i32) -> (i32, i32, i32) {
    %c0_i32 = arith.constant 0 : i32
    %c0_i32_0 = arith.constant 0 : i32
    %c0_i32_1 = arith.constant 0 : i32
    %c0_i32_2 = arith.constant 0 : i32
    return %c0_i32, %c0_i32_0, %c0_i32_1 : i32, i32, i32
  }
  func.func @transform_3(%arg0: i32) -> (i32, i32, i32) {
    %c0_i32 = arith.constant 0 : i32
    %c0_i32_0 = arith.constant 0 : i32
    %c0_i32_1 = arith.constant 0 : i32
    %c0_i32_2 = arith.constant 0 : i32
    return %c0_i32, %c0_i32_0, %c0_i32_1 : i32, i32, i32
  }
  func.func @transform_4(%arg0: i32) -> (i32, i32, i32) {
    %c0_i32 = arith.constant 0 : i32
    %c0_i32_0 = arith.constant 0 : i32
    %c0_i32_1 = arith.constant 0 : i32
    %c0_i32_2 = arith.constant 0 : i32
    return %c0_i32, %c0_i32_0, %c0_i32_1 : i32, i32, i32
  }
  func.func @transform_5(%arg0: i32) -> (i32, i32, i32) {
    %c0_i32 = arith.constant 0 : i32
    %c0_i32_0 = arith.constant 0 : i32
    %c0_i32_1 = arith.constant 0 : i32
    %c0_i32_2 = arith.constant 0 : i32
    return %c0_i32, %c0_i32_0, %c0_i32_1 : i32, i32, i32
  }
  func.func @transform_6(%arg0: i32) -> (i32, i32, i32) {
    %c0_i32 = arith.constant 0 : i32
    %c0_i32_0 = arith.constant 0 : i32
    %c0_i32_1 = arith.constant 0 : i32
    %c0_i32_2 = arith.constant 0 : i32
    return %c0_i32, %c0_i32_0, %c0_i32_1 : i32, i32, i32
  }
  func.func @transform_7(%arg0: i32) -> (i32, i32, i32) {
    %c0_i32 = arith.constant 0 : i32
    %c0_i32_0 = arith.constant 0 : i32
    %c0_i32_1 = arith.constant 0 : i32
    %c0_i32_2 = arith.constant 0 : i32
    return %c0_i32, %c0_i32_0, %c0_i32_1 : i32, i32, i32
  }
  func.func @transform_8(%arg0: i32) -> (i32, i32, i32) {
    %c0_i32 = arith.constant 0 : i32
    %c0_i32_0 = arith.constant 0 : i32
    %c0_i32_1 = arith.constant 0 : i32
    %c0_i32_2 = arith.constant 0 : i32
    return %c0_i32, %c0_i32_0, %c0_i32_1 : i32, i32, i32
  }
  func.func @transform_9(%arg0: i32) -> (i32, i32) {
    %c0_i32 = arith.constant 0 : i32
    %c0_i32_0 = arith.constant 0 : i32
    %c0_i32_1 = arith.constant 0 : i32
    return %c0_i32, %c0_i32_0 : i32, i32
  }
  func.func @transform_10(%arg0: i32) -> (i32, i32) {
    %c0_i32 = arith.constant 0 : i32
    %c0_i32_0 = arith.constant 0 : i32
    %c0_i32_1 = arith.constant 0 : i32
    return %c0_i32, %c0_i32_0 : i32, i32
  }
  func.func @transform_11(%arg0: i32) -> (i32, i32) {
    %c0_i32 = arith.constant 0 : i32
    %c0_i32_0 = arith.constant 0 : i32
    %c0_i32_1 = arith.constant 0 : i32
    return %c0_i32, %c0_i32_0 : i32, i32
  }
  func.func @transform_12(%arg0: i32) -> (i32, i32, i32) {
    %c0_i32 = arith.constant 0 : i32
    %c0_i32_0 = arith.constant 0 : i32
    %c0_i32_1 = arith.constant 0 : i32
    return %arg0, %c0_i32, %c0_i32_0 : i32, i32, i32
  }
}

</mosaic_0001>

<llo_original>
// kernel: tpu_custom_call.1
$region0: #{tpu_custom_call.1}
  #allocation0 [shape = 'u32[]', space=smem, size = 0x4, offset = 0x4, fixed_abs, tag = 'smem constant byte address 0x4 - core index']
  #allocation1 [shape = 'u32[144,128]{1,0:T(1,128)}', space=vmem, size = 0x12000, scoped, tag = 'internal scratch']
  %s0 = inlined_call_operand.hbm [shape: f32[2,8,32], index: 0, kind: input, shape index: {}]
  %s1 = inlined_call_operand.hbm [shape: f32[2,1,8], index: 1, kind: input, shape index: {}]
  %s2 = inlined_call_operand.hbm [shape: f32[4,8,32], index: 2, kind: input, shape index: {}]
  %s3 = inlined_call_operand.hbm [shape: f32[4,1,8], index: 3, kind: input, shape index: {}]
  %s4 = inlined_call_operand.hbm [shape: f32[4,8,32], index: 4, kind: input, shape index: {}]
  %s5 = inlined_call_operand.hbm [shape: f32[4,1,8], index: 5, kind: input, shape index: {}]
  %s6 = inlined_call_operand.hbm [shape: f32[4,8,32], index: 6, kind: input, shape index: {}]
  %s7 = inlined_call_operand.hbm [shape: f32[4,1,8], index: 7, kind: input, shape index: {}]
  %s8 = inlined_call_operand.hbm [shape: f32[4,32,8], index: 8, kind: input, shape index: {}]
  %s9 = inlined_call_operand.hbm [shape: f32[1,32], index: 9, kind: input, shape index: {}]
  %s10 = inlined_call_operand.hbm [shape: f32[1,32], index: 10, kind: input, shape index: {}]
  %s11 = inlined_call_operand.hbm [shape: f32[1,32], index: 11, kind: input, shape index: {}]
  %s12 = inlined_call_operand.hbm [shape: f32[2,8,32], index: 12, kind: output, shape index: {}]
  %s13 = sld [smem:[#allocation0]]
  $region129: #{tpu_custom_call.1} parent=0
    _
  %s15 = ssub.s32 1, %s13
  %s16 = scalar_select 0, %s15, %s13
  $region1: #{tpu_custom_call.1} parent=0
    #allocation2 [shape = 'u8[8192]{0}', space=vmem, size = 0x2000, scoped, tag = 'input window, operand 0']
    #allocation3 [shape = 's32[2]{0}', space=sflag, size = 0x8, scoped, tag = 'scoped memory for tpu_custom_call.1']
    #allocation4 [shape = 's32[2]{0}', space=sflag, size = 0x8, scoped, tag = 'scoped memory for tpu_custom_call.1']
    #allocation5 [shape = 'u8[1024]{0}', space=vmem, size = 0x400, scoped, tag = 'input window, operand 1']
    #allocation6 [shape = 's32[2]{0}', space=sflag, size = 0x8, scoped, tag = 'scoped memory for tpu_custom_call.1']
    #allocation7 [shape = 'u8[16384]{0}', space=vmem, size = 0x4000, scoped, tag = 'input window, operand 2, single buffered']
    #allocation8 [shape = 'u8[2048]{0}', space=vmem, size = 0x800, scoped, tag = 'input window, operand 3, single buffered']
    #allocation9 [shape = 's32[1]{0}', space=sflag, size = 0x4, scoped, tag = 'scoped memory for tpu_custom_call.1']
    #allocation10 [shape = 'u8[16384]{0}', space=vmem, size = 0x4000, scoped, tag = 'input window, operand 4, single buffered']
    #allocation11 [shape = 'u8[2048]{0}', space=vmem, size = 0x800, scoped, tag = 'input window, operand 5, single buffered']
    #allocation12 [shape = 's32[1]{0}', space=sflag, size = 0x4, scoped, tag = 'scoped memory for tpu_custom_call.1']
    #allocation13 [shape = 'u8[16384]{0}', space=vmem, size = 0x4000, scoped, tag = 'input window, operand 6, single buffered']
    #allocation14 [shape = 'u8[2048]{0}', space=vmem, size = 0x800, scoped, tag = 'input window, operand 7, single buffered']
    #allocation15 [shape = 's32[1]{0}', space=sflag, size = 0x4, scoped, tag = 'scoped memory for tpu_custom_call.1']
    #allocation16 [shape = 'u8[65536]{0}', space=vmem, size = 0x10000, scoped, tag = 'input window, operand 8, single buffered']
    #allocation17 [shape = 'u8[512]{0}', space=vmem, size = 0x400, scoped, tag = 'input window, operand 9, single buffered']
    #allocation18 [shape = 's32[1]{0}', space=sflag, size = 0x4, scoped, tag = 'scoped memory for tpu_custom_call.1']
    #allocation19 [shape = 'u8[512]{0}', space=vmem, size = 0x400, scoped, tag = 'input window, operand 10, single buffered']
    #allocation20 [shape = 'u8[512]{0}', space=vmem, size = 0x400, scoped, tag = 'input window, operand 11, single buffered']
    #allocation21 [shape = 's32[1]{0}', space=sflag, size = 0x4, scoped, tag = 'scoped memory for tpu_custom_call.1']
    #allocation22 [shape = 'u8[8192]{0}', space=vmem, size = 0x2000, scoped, tag = 'output window, operand 0']
    %17 = vsyncpa [#allocation3], 0
    %s18 = scalar_lea.sflag [#allocation3], 1
    %19 = vsyncpa %s18, 0
    %20 = vsyncpa [#allocation6], 0
    %s21 = scalar_lea.sflag [#allocation6], 1
    %22 = vsyncpa %s21, 0
    %23 = vsyncpa [#allocation9], 0
    %24 = vsyncpa [#allocation12], 0
    %25 = vsyncpa [#allocation15], 0
    %26 = vsyncpa [#allocation18], 0
    %27 = vsyncpa [#allocation21], 0
    %28 = vsyncpa [#allocation4], 0
    %s29 = scalar_lea.sflag [#allocation4], 1
    %30 = vsyncpa %s29, 0
    loop: start=0, step=1, limit=4
    $region2: #{tpu_custom_call.1} parent=1 // loop_pre_header
      _
    $region3: #{tpu_custom_call.1} parent=1 // loop_header
      %s32 = sphi 0, %s36
      %p33 = scmp.ge.s32.totalorder %s32, 4
      %s42 = sphi 0, %s44
      %s45 = sphi 0, %s42
      %s46 = sphi 0, %s45
      %s62 = sphi 0, %s46
      %s68 = sphi 0, %s70
      %s71 = sphi 0, %s68
      %s72 = sphi 0, %s71
      %s88 = sphi 0, %s72
      %s92 = sphi 0, %s92
      %s94 = sphi 0, %s92
      %s95 = sphi 0, %s94
      %s109 = sphi 0, %s95
      %s113 = sphi 0, %s113
      %s115 = sphi 0, %s113
      %s116 = sphi 0, %s115
      %s130 = sphi 0, %s116
      %s134 = sphi 0, %s134
      %s136 = sphi 0, %s134
      %s137 = sphi 0, %s136
      %s151 = sphi 0, %s137
      %s155 = sphi 0, %s155
      %s157 = sphi 0, %s155
      %s158 = sphi 0, %s157
      %s172 = sphi 0, %s158
      %s176 = sphi 0, %s176
      %s178 = sphi 0, %s176
      %s179 = sphi 0, %s178
      %s193 = sphi 0, %s179
      %s197 = sphi 0, %s197
      %s199 = sphi 0, %s197
      %s200 = sphi 0, %s199
      %s214 = sphi 0, %s200
      %s218 = sphi 0, %s218
      %s220 = sphi 0, %s218
      %s221 = sphi 0, %s220
      %s235 = sphi 0, %s221
      %s239 = sphi 0, %s239
      %s241 = sphi 0, %s239
      %s242 = sphi 0, %s241
      %s256 = sphi 0, %s242
      %s260 = sphi 0, %s260
      %s262 = sphi 0, %s260
      %s263 = sphi 0, %s262
      %s277 = sphi 0, %s263
      %s281 = sphi 0, %s281
      %s283 = sphi 0, %s281
      %s284 = sphi 0, %s283
      %s298 = sphi 0, %s284
      %s304 = sphi 0, %s306
      %s307 = sphi 0, %s304
      %s308 = sphi 0, %s307
      %s324 = sphi 0, %s308
    $region4: #{tpu_custom_call.1} parent=1 // loop_header_branch
      %35 = sbr.rel (%p33) target = $region8
    $region5: #{tpu_custom_call.1} parent=1 // loop_body
      %s37 = ssub.s32 %s32, 1
      %s38 = ssub.s32 %s32, 2
      %s39 = sadd.s32 %s32, 1
      %s40 = ssub.s32 %s32, %s39
      %p41 = scmp.eq.s32.totalorder %s40, 0
      %s43 = sadd.s32 %s42, 1
      %s44 = scalar_select %p41, %s42, %s43
      %p47 = pneg %p41
      %p48 = scmp.eq.s32.totalorder %s32, 1
      %p49 = por %p47, %p48
      %p50 = scmp.ne.s32.totalorder %s42, %s45
      %p51 = scmp.eq.s32.totalorder %s32, 0
      %p52 = por %p50, %p51
      %p53 = scmp.ne.s32.totalorder %s42, %s45
      %p54 = scmp.eq.s32.totalorder %s37, 1
      %p55 = por %p53, %p54
      %p56 = scmp.ne.s32.totalorder %s45, %s46
      %p57 = scmp.eq.s32.totalorder %s37, 0
      %p58 = por %p56, %p57
      %p59 = scmp.ne.s32.totalorder %s45, %s46
      %p60 = scmp.eq.s32.totalorder %s38, 1
      %p61 = por %p59, %p60
      %p63 = scmp.ne.s32.totalorder %s46, %s62
      %p64 = scmp.eq.s32.totalorder %s38, 0
      %p65 = por %p63, %p64
      %s66 = ssub.s32 %s32, %s39
      %p67 = scmp.eq.s32.totalorder %s66, 0
      %s69 = sadd.s32 %s68, 1
      %s70 = scalar_select %p67, %s68, %s69
      %p73 = pneg %p67
      %p74 = scmp.eq.s32.totalorder %s32, 1
      %p75 = por %p73, %p74
      %p76 = scmp.ne.s32.totalorder %s68, %s71
      %p77 = scmp.eq.s32.totalorder %s32, 0
      %p78 = por %p76, %p77
      %p79 = scmp.ne.s32.totalorder %s68, %s71
      %p80 = scmp.eq.s32.totalorder %s37, 1
      %p81 = por %p79, %p80
      %p82 = scmp.ne.s32.totalorder %s71, %s72
      %p83 = scmp.eq.s32.totalorder %s37, 0
      %p84 = por %p82, %p83
      %p85 = scmp.ne.s32.totalorder %s71, %s72
      %p86 = scmp.eq.s32.totalorder %s38, 1
      %p87 = por %p85, %p86
      %p89 = scmp.ne.s32.totalorder %s72, %s88
      %p90 = scmp.eq.s32.totalorder %s38, 0
      %p91 = por %p89, %p90
      %s93 = sadd.s32 %s92, 1
      %p96 = scmp.eq.s32.totalorder %s32, 1
      %p97 = scmp.ne.s32.totalorder %s92, %s94
      %p98 = scmp.eq.s32.totalorder %s32, 0
      %p99 = por %p97, %p98
      %p100 = scmp.ne.s32.totalorder %s92, %s94
      %p101 = scmp.eq.s32.totalorder %s37, 1
      %p102 = por %p100, %p101
      %p103 = scmp.ne.s32.totalorder %s94, %s95
      %p104 = scmp.eq.s32.totalorder %s37, 0
      %p105 = por %p103, %p104
      %p106 = scmp.ne.s32.totalorder %s94, %s95
      %p107 = scmp.eq.s32.totalorder %s38, 1
      %p108 = por %p106, %p107
      %p110 = scmp.ne.s32.totalorder %s95, %s109
      %p111 = scmp.eq.s32.totalorder %s38, 0
      %p112 = por %p110, %p111
      %s114 = sadd.s32 %s113, 1
      %p117 = scmp.eq.s32.totalorder %s32, 1
      %p118 = scmp.ne.s32.totalorder %s113, %s115
      %p119 = scmp.eq.s32.totalorder %s32, 0
      %p120 = por %p118, %p119
      %p121 = scmp.ne.s32.totalorder %s113, %s115
      %p122 = scmp.eq.s32.totalorder %s37, 1
      %p123 = por %p121, %p122
      %p124 = scmp.ne.s32.totalorder %s115, %s116
      %p125 = scmp.eq.s32.totalorder %s37, 0
      %p126 = por %p124, %p125
      %p127 = scmp.ne.s32.totalorder %s115, %s116
      %p128 = scmp.eq.s32.totalorder %s38, 1
      %p129 = por %p127, %p128
      %p131 = scmp.ne.s32.totalorder %s116, %s130
      %p132 = scmp.eq.s32.totalorder %s38, 0
      %p133 = por %p131, %p132
      %s135 = sadd.s32 %s134, 1
      %p138 = scmp.eq.s32.totalorder %s32, 1
      %p139 = scmp.ne.s32.totalorder %s134, %s136
      %p140 = scmp.eq.s32.totalorder %s32, 0
      %p141 = por %p139, %p140
      %p142 = scmp.ne.s32.totalorder %s134, %s136
      %p143 = scmp.eq.s32.totalorder %s37, 1
      %p144 = por %p142, %p143
      %p145 = scmp.ne.s32.totalorder %s136, %s137
      %p146 = scmp.eq.s32.totalorder %s37, 0
      %p147 = por %p145, %p146
      %p148 = scmp.ne.s32.totalorder %s136, %s137
      %p149 = scmp.eq.s32.totalorder %s38, 1
      %p150 = por %p148, %p149
      %p152 = scmp.ne.s32.totalorder %s137, %s151
      %p153 = scmp.eq.s32.totalorder %s38, 0
      %p154 = por %p152, %p153
      %s156 = sadd.s32 %s155, 1
      %p159 = scmp.eq.s32.totalorder %s32, 1
      %p160 = scmp.ne.s32.totalorder %s155, %s157
      %p161 = scmp.eq.s32.totalorder %s32, 0
      %p162 = por %p160, %p161
      %p163 = scmp.ne.s32.totalorder %s155, %s157
      %p164 = scmp.eq.s32.totalorder %s37, 1
      %p165 = por %p163, %p164
      %p166 = scmp.ne.s32.totalorder %s157, %s158
      %p167 = scmp.eq.s32.totalorder %s37, 0
      %p168 = por %p166, %p167
      %p169 = scmp.ne.s32.totalorder %s157, %s158
      %p170 = scmp.eq.s32.totalorder %s38, 1
      %p171 = por %p169, %p170
      %p173 = scmp.ne.s32.totalorder %s158, %s172
      %p174 = scmp.eq.s32.totalorder %s38, 0
      %p175 = por %p173, %p174
      %s177 = sadd.s32 %s176, 1
      %p180 = scmp.eq.s32.totalorder %s32, 1
      %p181 = scmp.ne.s32.totalorder %s176, %s178
      %p182 = scmp.eq.s32.totalorder %s32, 0
      %p183 = por %p181, %p182
      %p184 = scmp.ne.s32.totalorder %s176, %s178
      %p185 = scmp.eq.s32.totalorder %s37, 1
      %p186 = por %p184, %p185
      %p187 = scmp.ne.s32.totalorder %s178, %s179
      %p188 = scmp.eq.s32.totalorder %s37, 0
      %p189 = por %p187, %p188
      %p190 = scmp.ne.s32.totalorder %s178, %s179
      %p191 = scmp.eq.s32.totalorder %s38, 1
      %p192 = por %p190, %p191
      %p194 = scmp.ne.s32.totalorder %s179, %s193
      %p195 = scmp.eq.s32.totalorder %s38, 0
      %p196 = por %p194, %p195
      %s198 = sadd.s32 %s197, 1
      %p201 = scmp.eq.s32.totalorder %s32, 1
      %p202 = scmp.ne.s32.totalorder %s197, %s199
      %p203 = scmp.eq.s32.totalorder %s32, 0
      %p204 = por %p202, %p203
      %p205 = scmp.ne.s32.totalorder %s197, %s199
      %p206 = scmp.eq.s32.totalorder %s37, 1
      %p207 = por %p205, %p206
      %p208 = scmp.ne.s32.totalorder %s199, %s200
      %p209 = scmp.eq.s32.totalorder %s37, 0
      %p210 = por %p208, %p209
      %p211 = scmp.ne.s32.totalorder %s199, %s200
      %p212 = scmp.eq.s32.totalorder %s38, 1
      %p213 = por %p211, %p212
      %p215 = scmp.ne.s32.totalorder %s200, %s214
      %p216 = scmp.eq.s32.totalorder %s38, 0
      %p217 = por %p215, %p216
      %s219 = sadd.s32 %s218, 1
      %p222 = scmp.eq.s32.totalorder %s32, 1
      %p223 = scmp.ne.s32.totalorder %s218, %s220
      %p224 = scmp.eq.s32.totalorder %s32, 0
      %p225 = por %p223, %p224
      %p226 = scmp.ne.s32.totalorder %s218, %s220
      %p227 = scmp.eq.s32.totalorder %s37, 1
      %p228 = por %p226, %p227
      %p229 = scmp.ne.s32.totalorder %s220, %s221
      %p230 = scmp.eq.s32.totalorder %s37, 0
      %p231 = por %p229, %p230
      %p232 = scmp.ne.s32.totalorder %s220, %s221
      %p233 = scmp.eq.s32.totalorder %s38, 1
      %p234 = por %p232, %p233
      %p236 = scmp.ne.s32.totalorder %s221, %s235
      %p237 = scmp.eq.s32.totalorder %s38, 0
      %p238 = por %p236, %p237
      %s240 = sadd.s32 %s239, 1
      %p243 = scmp.eq.s32.totalorder %s32, 1
      %p244 = scmp.ne.s32.totalorder %s239, %s241
      %p245 = scmp.eq.s32.totalorder %s32, 0
      %p246 = por %p244, %p245
      %p247 = scmp.ne.s32.totalorder %s239, %s241
      %p248 = scmp.eq.s32.totalorder %s37, 1
      %p249 = por %p247, %p248
      %p250 = scmp.ne.s32.totalorder %s241, %s242
      %p251 = scmp.eq.s32.totalorder %s37, 0
      %p252 = por %p250, %p251
      %p253 = scmp.ne.s32.totalorder %s241, %s242
      %p254 = scmp.eq.s32.totalorder %s38, 1
      %p255 = por %p253, %p254
      %p257 = scmp.ne.s32.totalorder %s242, %s256
      %p258 = scmp.eq.s32.totalorder %s38, 0
      %p259 = por %p257, %p258
      %s261 = sadd.s32 %s260, 1
      %p264 = scmp.eq.s32.totalorder %s32, 1
      %p265 = scmp.ne.s32.totalorder %s260, %s262
      %p266 = scmp.eq.s32.totalorder %s32, 0
      %p267 = por %p265, %p266
      %p268 = scmp.ne.s32.totalorder %s260, %s262
      %p269 = scmp.eq.s32.totalorder %s37, 1
      %p270 = por %p268, %p269
      %p271 = scmp.ne.s32.totalorder %s262, %s263
      %p272 = scmp.eq.s32.totalorder %s37, 0
      %p273 = por %p271, %p272
      %p274 = scmp.ne.s32.totalorder %s262, %s263
      %p275 = scmp.eq.s32.totalorder %s38, 1
      %p276 = por %p274, %p275
      %p278 = scmp.ne.s32.totalorder %s263, %s277
      %p279 = scmp.eq.s32.totalorder %s38, 0
      %p280 = por %p278, %p279
      %s282 = sadd.s32 %s281, 1
      %p285 = scmp.eq.s32.totalorder %s32, 1
      %p286 = scmp.ne.s32.totalorder %s281, %s283
      %p287 = scmp.eq.s32.totalorder %s32, 0
      %p288 = por %p286, %p287
      %p289 = scmp.ne.s32.totalorder %s281, %s283
      %p290 = scmp.eq.s32.totalorder %s37, 1
      %p291 = por %p289, %p290
      %p292 = scmp.ne.s32.totalorder %s283, %s284
      %p293 = scmp.eq.s32.totalorder %s37, 0
      %p294 = por %p292, %p293
      %p295 = scmp.ne.s32.totalorder %s283, %s284
      %p296 = scmp.eq.s32.totalorder %s38, 1
      %p297 = por %p295, %p296
      %p299 = scmp.ne.s32.totalorder %s284, %s298
      %p300 = scmp.eq.s32.totalorder %s38, 0
      %p301 = por %p299, %p300
      %s302 = ssub.s32 %s32, %s39
      %p303 = scmp.eq.s32.totalorder %s302, 0
      %s305 = sadd.s32 %s304, 1
      %s306 = scalar_select %p303, %s304, %s305
      %p309 = pneg %p303
      %p310 = scmp.eq.s32.totalorder %s32, 1
      %p311 = por %p309, %p310
      %p312 = scmp.ne.s32.totalorder %s304, %s307
      %p313 = scmp.eq.s32.totalorder %s32, 0
      %p314 = por %p312, %p313
      %p315 = scmp.ne.s32.totalorder %s304, %s307
      %p316 = scmp.eq.s32.totalorder %s37, 1
      %p317 = por %p315, %p316
      %p318 = scmp.ne.s32.totalorder %s307, %s308
      %p319 = scmp.eq.s32.totalorder %s37, 0
      %p320 = por %p318, %p319
      %p321 = scmp.ne.s32.totalorder %s307, %s308
      %p322 = scmp.eq.s32.totalorder %s38, 1
      %p323 = por %p321, %p322
      %p325 = scmp.ne.s32.totalorder %s308, %s324
      %p326 = scmp.eq.s32.totalorder %s38, 0
      %p327 = por %p325, %p326
      %p328 = scmp.le.s32.totalorder 1, %s32
      %p329 = scmp.lt.s32.totalorder %s32, 3
      %p330 = pnand %p328, %p329
      %p331 = pneg %p330
      // Predicated region
      $region9: #{tpu_custom_call.1} parent=5 // pred_check
        _
      $region10: #{tpu_custom_call.1} parent=5 // pred_check_branch
        %333 = sbr.rel (%p330) target = $region12
      $region11: #{tpu_custom_call.1} parent=5 // pred_region
        %s334 = ssub.s32 %s32, 1
        // Predicated region
        $region13: #{tpu_custom_call.1} parent=11 // pred_check
          %p335 = pneg %p105
        $region14: #{tpu_custom_call.1} parent=11 // pred_check_branch
          %337 = sbr.rel (%p335) target = $region16
        $region15: #{tpu_custom_call.1} parent=11 // pred_region
          %s339 = ssub.s32 512, 512
          %340 = vsyncadd [#allocation6], %s339
          %s341 = sshll.u32 [#allocation7], 4
          %s342 = int_to_ptr.vmem [resolvable:$true] %s341
          %347 = dma.hbm_to_vmem [thread:$0]  %s2, 512, %s342, [#allocation6], 128, 128, 8
        $region16: #{tpu_custom_call.1} parent=11 // pred_fallthru
          _
        // Predicated region
        $region17: #{tpu_custom_call.1} parent=11 // pred_check
          %p348 = pneg %p126
        $region18: #{tpu_custom_call.1} parent=11 // pred_check_branch
          %350 = sbr.rel (%p348) target = $region20
        $region19: #{tpu_custom_call.1} parent=11 // pred_region
          %s352 = ssub.s32 64, 64
          %353 = vsyncadd [#allocation9], %s352
          %s354 = sshll.u32 [#allocation8], 4
          %s355 = int_to_ptr.vmem [resolvable:$true] %s354
          %360 = dma.hbm_to_vmem [thread:$0]  %s3, 64, %s355, [#allocation9], 16, 16, 1
        $region20: #{tpu_custom_call.1} parent=11 // pred_fallthru
          _
        // Predicated region
        $region21: #{tpu_custom_call.1} parent=11 // pred_check
          %p361 = pneg %p147
        $region22: #{tpu_custom_call.1} parent=11 // pred_check_branch
          %363 = sbr.rel (%p361) target = $region24
        $region23: #{tpu_custom_call.1} parent=11 // pred_region
          %s365 = ssub.s32 512, 512
          %366 = vsyncadd [#allocation9], %s365
          %s367 = sshll.u32 [#allocation10], 4
          %s368 = int_to_ptr.vmem [resolvable:$true] %s367
          %373 = dma.hbm_to_vmem [thread:$0]  %s4, 512, %s368, [#allocation9], 128, 128, 8
        $region24: #{tpu_custom_call.1} parent=11 // pred_fallthru
          _
        // Predicated region
        $region25: #{tpu_custom_call.1} parent=11 // pred_check
          %p374 = pneg %p168
        $region26: #{tpu_custom_call.1} parent=11 // pred_check_branch
          %376 = sbr.rel (%p374) target = $region28
        $region27: #{tpu_custom_call.1} parent=11 // pred_region
          %s378 = ssub.s32 64, 64
          %379 = vsyncadd [#allocation12], %s378
          %s380 = sshll.u32 [#allocation11], 4
          %s381 = int_to_ptr.vmem [resolvable:$true] %s380
          %386 = dma.hbm_to_vmem [thread:$0]  %s5, 64, %s381, [#allocation12], 16, 16, 1
        $region28: #{tpu_custom_call.1} parent=11 // pred_fallthru
          _
        // Predicated region
        $region29: #{tpu_custom_call.1} parent=11 // pred_check
          %p387 = pneg %p189
        $region30: #{tpu_custom_call.1} parent=11 // pred_check_branch
          %389 = sbr.rel (%p387) target = $region32
        $region31: #{tpu_custom_call.1} parent=11 // pred_region
          %s391 = ssub.s32 512, 512
          %392 = vsyncadd [#allocation12], %s391
          %s393 = sshll.u32 [#allocation13], 4
          %s394 = int_to_ptr.vmem [resolvable:$true] %s393
          %399 = dma.hbm_to_vmem [thread:$0]  %s6, 512, %s394, [#allocation12], 128, 128, 8
        $region32: #{tpu_custom_call.1} parent=11 // pred_fallthru
          _
        // Predicated region
        $region33: #{tpu_custom_call.1} parent=11 // pred_check
          %p400 = pneg %p210
        $region34: #{tpu_custom_call.1} parent=11 // pred_check_branch
          %402 = sbr.rel (%p400) target = $region36
        $region35: #{tpu_custom_call.1} parent=11 // pred_region
          %s404 = ssub.s32 64, 64
          %405 = vsyncadd [#allocation15], %s404
          %s406 = sshll.u32 [#allocation14], 4
          %s407 = int_to_ptr.vmem [resolvable:$true] %s406
          %412 = dma.hbm_to_vmem [thread:$0]  %s7, 64, %s407, [#allocation15], 16, 16, 1
        $region36: #{tpu_custom_call.1} parent=11 // pred_fallthru
          _
        // Predicated region
        $region37: #{tpu_custom_call.1} parent=11 // pred_check
          %p413 = pneg %p231
        $region38: #{tpu_custom_call.1} parent=11 // pred_check_branch
          %415 = sbr.rel (%p413) target = $region40
        $region39: #{tpu_custom_call.1} parent=11 // pred_region
          %s417 = ssub.s32 2048, 2048
          %418 = vsyncadd [#allocation15], %s417
          %s419 = sshll.u32 [#allocation16], 4
          %s420 = int_to_ptr.vmem [resolvable:$true] %s419
          %425 = dma.hbm_to_vmem [thread:$0]  %s8, 2048, %s420, [#allocation15], 128, 128, 8
        $region40: #{tpu_custom_call.1} parent=11 // pred_fallthru
          _
        // Predicated region
        $region41: #{tpu_custom_call.1} parent=11 // pred_check
          %p426 = pneg %p252
        $region42: #{tpu_custom_call.1} parent=11 // pred_check_branch
          %428 = sbr.rel (%p426) target = $region44
        $region43: #{tpu_custom_call.1} parent=11 // pred_region
          %s430 = ssub.s32 16, 16
          %431 = vsyncadd [#allocation18], %s430
          %s433 = sshll.u32 [#allocation17], 4
          %s434 = int_to_ptr.vmem [resolvable:$true] %s433
          %436 = dma.hbm_to_vmem [thread:$0]  %s9, 16, %s434, [#allocation18]
        $region44: #{tpu_custom_call.1} parent=11 // pred_fallthru
          _
        // Predicated region
        $region45: #{tpu_custom_call.1} parent=11 // pred_check
          %p437 = pneg %p273
        $region46: #{tpu_custom_call.1} parent=11 // pred_check_branch
          %439 = sbr.rel (%p437) target = $region48
        $region47: #{tpu_custom_call.1} parent=11 // pred_region
          %s441 = ssub.s32 16, 16
          %442 = vsyncadd [#allocation18], %s441
          %s444 = sshll.u32 [#allocation19], 4
          %s445 = int_to_ptr.vmem [resolvable:$true] %s444
          %447 = dma.hbm_to_vmem [thread:$0]  %s10, 16, %s445, [#allocation18]
        $region48: #{tpu_custom_call.1} parent=11 // pred_fallthru
          _
        // Predicated region
        $region49: #{tpu_custom_call.1} parent=11 // pred_check
          %p448 = pneg %p294
        $region50: #{tpu_custom_call.1} parent=11 // pred_check_branch
          %450 = sbr.rel (%p448) target = $region52
        $region51: #{tpu_custom_call.1} parent=11 // pred_region
          %s452 = ssub.s32 16, 16
          %453 = vsyncadd [#allocation21], %s452
          %s455 = sshll.u32 [#allocation20], 4
          %s456 = int_to_ptr.vmem [resolvable:$true] %s455
          %458 = dma.hbm_to_vmem [thread:$0]  %s11, 16, %s456, [#allocation21]
        $region52: #{tpu_custom_call.1} parent=11 // pred_fallthru
          _
      $region12: #{tpu_custom_call.1} parent=5 // pred_fallthru
        _
      %p459 = scmp.lt.s32.totalorder %s32, 2
      // Predicated region
      $region53: #{tpu_custom_call.1} parent=5 // pred_check
        %p460 = pneg %p459
      $region54: #{tpu_custom_call.1} parent=5 // pred_check_branch
        %462 = sbr.rel (%p460) target = $region56
      $region55: #{tpu_custom_call.1} parent=5 // pred_region
        // Predicated region
        $region57: #{tpu_custom_call.1} parent=55 // pred_check
          %p463 = pneg %p52
        $region58: #{tpu_custom_call.1} parent=55 // pred_check_branch
          %465 = sbr.rel (%p463) target = $region60
        $region59: #{tpu_custom_call.1} parent=55 // pred_region
          %s466 = sand.u32 %s42, 1
          %s467 = scalar_lea.sflag [#allocation3], %s466
          %s468 = sand.u32 %s42, 1
          %s469 = smul.addr %s468, 8
          %s470 = scalar_lea.vmem [#allocation2], %s469
          %s472 = ssub.s32 128, 128
          %473 = vsyncadd %s467, %s472
          %s474 = smul.addr %s32, 128
          %s475 = scalar_lea.hbm %s0, %s474
          %s477 = sshll.u32 %s470, 4
          %s478 = int_to_ptr.vmem [resolvable:$true] %s477
          %480 = dma.hbm_to_vmem [thread:$0]  %s475, 128, %s478, %s467
        $region60: #{tpu_custom_call.1} parent=55 // pred_fallthru
          _
        // Predicated region
        $region61: #{tpu_custom_call.1} parent=55 // pred_check
          %p481 = pneg %p78
        $region62: #{tpu_custom_call.1} parent=55 // pred_check_branch
          %483 = sbr.rel (%p481) target = $region64
        $region63: #{tpu_custom_call.1} parent=55 // pred_region
          %s484 = sand.u32 %s32, 1
          %s485 = scalar_lea.sflag [#allocation6], %s484
          %s486 = sand.u32 %s68, 1
          %s487 = scalar_lea.vmem [#allocation5], %s486
          %s489 = ssub.s32 16, 16
          %490 = vsyncadd %s485, %s489
          %s491 = smul.addr %s32, 16
          %s492 = scalar_lea.hbm %s1, %s491
          %s494 = sshll.u32 %s487, 4
          %s495 = int_to_ptr.vmem [resolvable:$true] %s494
          %497 = dma.hbm_to_vmem [thread:$0]  %s492, 16, %s495, %s485
        $region64: #{tpu_custom_call.1} parent=55 // pred_fallthru
          _
      $region56: #{tpu_custom_call.1} parent=5 // pred_fallthru
        _
      %p498 = scmp.le.s32.totalorder 1, %s32
      %p499 = scmp.lt.s32.totalorder %s32, 3
      %p500 = pnand %p498, %p499
      %p501 = pneg %p500
      // Predicated region
      $region65: #{tpu_custom_call.1} parent=5 // pred_check
        _
      $region66: #{tpu_custom_call.1} parent=5 // pred_check_branch
        %503 = sbr.rel (%p500) target = $region68
      $region67: #{tpu_custom_call.1} parent=5 // pred_region
        %s504 = ssub.s32 %s32, 1
        %s505 = sand.u32 %s45, 1
        %s506 = scalar_lea.sflag [#allocation3], %s505
        %s507 = sand.u32 %s45, 1
        %s508 = smul.addr %s507, 8
        %s509 = scalar_lea.vmem [#allocation2], %s508
        // Predicated region
        $region69: #{tpu_custom_call.1} parent=67 // pred_check
          %p510 = pneg %p58
        $region70: #{tpu_custom_call.1} parent=67 // pred_check_branch
          %512 = sbr.rel (%p510) target = $region72
        $region71: #{tpu_custom_call.1} parent=67 // pred_region
          %513 = dma.done %s506, 128
        $region72: #{tpu_custom_call.1} parent=67 // pred_fallthru
          _
        %s514 = sand.u32 %s37, 1
        %s515 = scalar_lea.sflag [#allocation6], %s514
        %s516 = sand.u32 %s71, 1
        %s517 = scalar_lea.vmem [#allocation5], %s516
        // Predicated region
        $region73: #{tpu_custom_call.1} parent=67 // pred_check
          %p518 = pneg %p84
        $region74: #{tpu_custom_call.1} parent=67 // pred_check_branch
          %520 = sbr.rel (%p518) target = $region76
        $region75: #{tpu_custom_call.1} parent=67 // pred_region
          %521 = dma.done %s515, 16
        $region76: #{tpu_custom_call.1} parent=67 // pred_fallthru
          _
        // Predicated region
        $region77: #{tpu_custom_call.1} parent=67 // pred_check
          %p522 = pneg %p105
        $region78: #{tpu_custom_call.1} parent=67 // pred_check_branch
          %524 = sbr.rel (%p522) target = $region80
        $region79: #{tpu_custom_call.1} parent=67 // pred_region
          %525 = dma.done [#allocation6], 512
        $region80: #{tpu_custom_call.1} parent=67 // pred_fallthru
          _
        // Predicated region
        $region81: #{tpu_custom_call.1} parent=67 // pred_check
          %p526 = pneg %p126
        $region82: #{tpu_custom_call.1} parent=67 // pred_check_branch
          %528 = sbr.rel (%p526) target = $region84
        $region83: #{tpu_custom_call.1} parent=67 // pred_region
          %529 = dma.done [#allocation9], 64
        $region84: #{tpu_custom_call.1} parent=67 // pred_fallthru
          _
        // Predicated region
        $region85: #{tpu_custom_call.1} parent=67 // pred_check
          %p530 = pneg %p147
        $region86: #{tpu_custom_call.1} parent=67 // pred_check_branch
          %532 = sbr.rel (%p530) target = $region88
        $region87: #{tpu_custom_call.1} parent=67 // pred_region
          %533 = dma.done [#allocation9], 512
        $region88: #{tpu_custom_call.1} parent=67 // pred_fallthru
          _
        // Predicated region
        $region89: #{tpu_custom_call.1} parent=67 // pred_check
          %p534 = pneg %p168
        $region90: #{tpu_custom_call.1} parent=67 // pred_check_branch
          %536 = sbr.rel (%p534) target = $region92
        $region91: #{tpu_custom_call.1} parent=67 // pred_region
          %537 = dma.done [#allocation12], 64
        $region92: #{tpu_custom_call.1} parent=67 // pred_fallthru
          _
        // Predicated region
        $region93: #{tpu_custom_call.1} parent=67 // pred_check
          %p538 = pneg %p189
        $region94: #{tpu_custom_call.1} parent=67 // pred_check_branch
          %540 = sbr.rel (%p538) target = $region96
        $region95: #{tpu_custom_call.1} parent=67 // pred_region
          %541 = dma.done [#allocation12], 512
        $region96: #{tpu_custom_call.1} parent=67 // pred_fallthru
          _
        // Predicated region
        $region97: #{tpu_custom_call.1} parent=67 // pred_check
          %p542 = pneg %p210
        $region98: #{tpu_custom_call.1} parent=67 // pred_check_branch
          %544 = sbr.rel (%p542) target = $region100
        $region99: #{tpu_custom_call.1} parent=67 // pred_region
          %545 = dma.done [#allocation15], 64
        $region100: #{tpu_custom_call.1} parent=67 // pred_fallthru
          _
        // Predicated region
        $region101: #{tpu_custom_call.1} parent=67 // pred_check
          %p546 = pneg %p231
        $region102: #{tpu_custom_call.1} parent=67 // pred_check_branch
          %548 = sbr.rel (%p546) target = $region104
        $region103: #{tpu_custom_call.1} parent=67 // pred_region
          %549 = dma.done [#allocation15], 2048
        $region104: #{tpu_custom_call.1} parent=67 // pred_fallthru
          _
        // Predicated region
        $region105: #{tpu_custom_call.1} parent=67 // pred_check
          %p550 = pneg %p252
        $region106: #{tpu_custom_call.1} parent=67 // pred_check_branch
          %552 = sbr.rel (%p550) target = $region108
        $region107: #{tpu_custom_call.1} parent=67 // pred_region
          %553 = dma.done [#allocation18], 16
        $region108: #{tpu_custom_call.1} parent=67 // pred_fallthru
          _
        // Predicated region
        $region109: #{tpu_custom_call.1} parent=67 // pred_check
          %p554 = pneg %p273
        $region110: #{tpu_custom_call.1} parent=67 // pred_check_branch
          %556 = sbr.rel (%p554) target = $region112
        $region111: #{tpu_custom_call.1} parent=67 // pred_region
          %557 = dma.done [#allocation18], 16
        $region112: #{tpu_custom_call.1} parent=67 // pred_fallthru
          _
        // Predicated region
        $region113: #{tpu_custom_call.1} parent=67 // pred_check
          %p558 = pneg %p294
        $region114: #{tpu_custom_call.1} parent=67 // pred_check_branch
          %560 = sbr.rel (%p558) target = $region116
        $region115: #{tpu_custom_call.1} parent=67 // pred_region
          %561 = dma.done [#allocation21], 16
        $region116: #{tpu_custom_call.1} parent=67 // pred_fallthru
          _
        %s562 = sand.u32 %s45, 1
        %s563 = scalar_lea.sflag [#allocation3], %s562
        %s564 = sand.u32 %s45, 1
        %s565 = smul.addr %s564, 8
        %s566 = scalar_lea.vmem [#allocation2], %s565
        %p567 = pneg %p58
        %p568 = pneg %p55
        %s569 = sand.u32 %s37, 1
        %s570 = scalar_lea.sflag [#allocation6], %s569
        %s571 = sand.u32 %s71, 1
        %s572 = scalar_lea.vmem [#allocation5], %s571
        %p573 = pneg %p84
        %p574 = pneg %p81
        %p575 = pneg %p105
        %p576 = pneg %p102
        %p577 = pneg %p126
        %p578 = pneg %p123
        %p579 = pneg %p147
        %p580 = pneg %p144
        %p581 = pneg %p168
        %p582 = pneg %p165
        %p583 = pneg %p189
        %p584 = pneg %p186
        %p585 = pneg %p210
        %p586 = pneg %p207
        %p587 = pneg %p231
        %p588 = pneg %p228
        %p589 = pneg %p252
        %p590 = pneg %p249
        %p591 = pneg %p273
        %p592 = pneg %p270
        %p593 = pneg %p294
        %p594 = pneg %p291
        %p595 = pneg %p320
        %p596 = pneg %p317
        %s597 = sand.u32 %s307, 1
        %s598 = scalar_lea.sflag [#allocation4], %s597
        %s599 = sand.u32 %s307, 1
        %s600 = smul.addr %s599, 8
        %s601 = scalar_lea.vmem [#allocation22], %s600
        %v602 = vld [vmem:[%s509] sm:$0xff]
        %v603 = vld [vmem:[%s517] sm:$0x1]
        %v604 = vld [vmem:[#allocation7] sm:$0xff]
        %v605 = vld [vmem:[#allocation8] sm:$0x1]
        %v607 = vlaneseq
        %v608 = vshrl.u32 %v607, 7
        %v609 = vsub.s32 0, %v608
        %v610 = vrot.slane %v605, %v609
        %vm612 = vcmask 261120
        %v614 = vsel %vm612, %v602, 0
        %v617 = vsel %vm612, %v604, 0
        %619 = vmatprep.subr.mxu0 0.0
        %620 = vmatpush1.xpose.msra.mxu0 %v617
        %621 = vmatprep.subr.mxu0 0.0
        %622 = vmatpush1.xpose.msra.mxu0 0.0
        %623 = vmatprep.subr.mxu0 0.0
        %624 = vmatpush1.xpose.msra.mxu0 0.0
        %625 = vmatprep.subr.mxu0 0.0
        %626 = vmatpush1.xpose.msra.mxu0 0.0
        %627 = vmatprep.subr.mxu0 0.0
        %628 = vmatpush1.xpose.msra.mxu0 0.0
        %629 = vmatprep.subr.mxu0 0.0
        %630 = vmatpush1.xpose.msra.mxu0 0.0
        %631 = vmatprep.subr.mxu0 0.0
        %632 = vmatpush1.xpose.msra.mxu0 0.0
        %633 = vmatprep.subr.mxu0 0.0
        %634 = vmatpush1.xpose.msra.mxu0 0.0
        %635 = vmatprep.subr.mxu0 0.0
        %636 = vmatpush1.xpose.msra.mxu0 0.0
        %637 = vmatprep.subr.mxu0 0.0
        %638 = vmatpush1.xpose.msra.mxu0 0.0
        %639 = vmatprep.subr.mxu0 0.0
        %640 = vmatpush1.xpose.msra.mxu0 0.0
        %641 = vmatprep.subr.mxu0 0.0
        %642 = vmatpush1.xpose.msra.mxu0 0.0
        %643 = vmatprep.subr.mxu0 0.0
        %644 = vmatpush1.xpose.msra.mxu0 0.0
        %645 = vmatprep.subr.mxu0 0.0
        %646 = vmatpush1.xpose.msra.mxu0 0.0
        %647 = vmatprep.subr.mxu0 0.0
        %648 = vmatpush1.xpose.msra.mxu0 0.0
        %649 = vmatprep.subr.mxu0 0.0
        %650 = vmatpush1.xpose.msra.mxu0 0.0
        %651 = vmatprep.subr.mxu0 0.0
        %652 = vmatpush1.xpose.msra.mxu0 0.0
        %653 = vmatprep.subr.mxu0 0.0
        %654 = vmatpush1.xpose.msra.mxu0 0.0
        %655 = vmatprep.subr.mxu0 0.0
        %656 = vmatpush1.xpose.msra.mxu0 0.0
        %657 = vmatprep.subr.mxu0 0.0
        %658 = vmatpush1.xpose.msra.mxu0 0.0
        %659 = vmatprep.subr.mxu0 0.0
        %660 = vmatpush1.xpose.msra.mxu0 0.0
        %661 = vmatprep.subr.mxu0 0.0
        %662 = vmatpush1.xpose.msra.mxu0 0.0
        %663 = vmatprep.subr.mxu0 0.0
        %664 = vmatpush1.xpose.msra.mxu0 0.0
        %665 = vmatprep.subr.mxu0 0.0
        %666 = vmatpush1.xpose.msra.mxu0 0.0
        %667 = vmatprep.subr.mxu0 0.0
        %668 = vmatpush1.xpose.msra.mxu0 0.0
        %669 = vmatprep.subr.mxu0 0.0
        %670 = vmatpush1.xpose.msra.mxu0 0.0
        %671 = vmatprep.subr.mxu0 0.0
        %672 = vmatpush1.xpose.msra.mxu0 0.0
        %673 = vmatprep.subr.mxu0 0.0
        %674 = vmatpush1.xpose.msra.mxu0 0.0
        %675 = vmatprep.subr.mxu0 0.0
        %676 = vmatpush1.xpose.msra.mxu0 0.0
        %677 = vmatprep.subr.mxu0 0.0
        %678 = vmatpush1.xpose.msra.mxu0 0.0
        %679 = vmatprep.subr.mxu0 0.0
        %680 = vmatpush1.xpose.msra.mxu0 0.0
        %681 = vmatprep.subr.mxu0 0.0
        %682 = vmatpush1.xpose.msra.mxu0 0.0
        %683 = vmatprep.mubr.f32.mxu0 0.0
        %684 = vmatmul.mubr.f32.gmra.mrb[0].mxu0 %v614
        %v685 = vpop.f32.mrb[0].mxu0
        %v686 = vadd.f32 %v610, %v685
        %v687 = vpop.f32.mrb[0].mxu0
        %688 = vdwg.mxu0
        %v689 = vld [vmem:[#allocation10] sm:$0xff]
        %v690 = vld [vmem:[#allocation11] sm:$0x1]
        %v692 = vlaneseq
        %v693 = vshrl.u32 %v692, 7
        %v694 = vsub.s32 0, %v693
        %v695 = vrot.slane %v690, %v694
        %v698 = vsel %vm612, %v689, 0
        %700 = vmatprep.subr.mxu0 0.0
        %701 = vmatpush1.xpose.msra.mxu0 %v698
        %702 = vmatprep.subr.mxu0 0.0
        %703 = vmatpush1.xpose.msra.mxu0 0.0
        %704 = vmatprep.subr.mxu0 0.0
        %705 = vmatpush1.xpose.msra.mxu0 0.0
        %706 = vmatprep.subr.mxu0 0.0
        %707 = vmatpush1.xpose.msra.mxu0 0.0
        %708 = vmatprep.subr.mxu0 0.0
        %709 = vmatpush1.xpose.msra.mxu0 0.0
        %710 = vmatprep.subr.mxu0 0.0
        %711 = vmatpush1.xpose.msra.mxu0 0.0
        %712 = vmatprep.subr.mxu0 0.0
        %713 = vmatpush1.xpose.msra.mxu0 0.0
        %714 = vmatprep.subr.mxu0 0.0
        %715 = vmatpush1.xpose.msra.mxu0 0.0
        %716 = vmatprep.subr.mxu0 0.0
        %717 = vmatpush1.xpose.msra.mxu0 0.0
        %718 = vmatprep.subr.mxu0 0.0
        %719 = vmatpush1.xpose.msra.mxu0 0.0
        %720 = vmatprep.subr.mxu0 0.0
        %721 = vmatpush1.xpose.msra.mxu0 0.0
        %722 = vmatprep.subr.mxu0 0.0
        %723 = vmatpush1.xpose.msra.mxu0 0.0
        %724 = vmatprep.subr.mxu0 0.0
        %725 = vmatpush1.xpose.msra.mxu0 0.0
        %726 = vmatprep.subr.mxu0 0.0
        %727 = vmatpush1.xpose.msra.mxu0 0.0
        %728 = vmatprep.subr.mxu0 0.0
        %729 = vmatpush1.xpose.msra.mxu0 0.0
        %730 = vmatprep.subr.mxu0 0.0
        %731 = vmatpush1.xpose.msra.mxu0 0.0
        %732 = vmatprep.subr.mxu0 0.0
        %733 = vmatpush1.xpose.msra.mxu0 0.0
        %734 = vmatprep.subr.mxu0 0.0
        %735 = vmatpush1.xpose.msra.mxu0 0.0
        %736 = vmatprep.subr.mxu0 0.0
        %737 = vmatpush1.xpose.msra.mxu0 0.0
        %738 = vmatprep.subr.mxu0 0.0
        %739 = vmatpush1.xpose.msra.mxu0 0.0
        %740 = vmatprep.subr.mxu0 0.0
        %741 = vmatpush1.xpose.msra.mxu0 0.0
        %742 = vmatprep.subr.mxu0 0.0
        %743 = vmatpush1.xpose.msra.mxu0 0.0
        %744 = vmatprep.subr.mxu0 0.0
        %745 = vmatpush1.xpose.msra.mxu0 0.0
        %746 = vmatprep.subr.mxu0 0.0
        %747 = vmatpush1.xpose.msra.mxu0 0.0
        %748 = vmatprep.subr.mxu0 0.0
        %749 = vmatpush1.xpose.msra.mxu0 0.0
        %750 = vmatprep.subr.mxu0 0.0
        %751 = vmatpush1.xpose.msra.mxu0 0.0
        %752 = vmatprep.subr.mxu0 0.0
        %753 = vmatpush1.xpose.msra.mxu0 0.0
        %754 = vmatprep.subr.mxu0 0.0
        %755 = vmatpush1.xpose.msra.mxu0 0.0
        %756 = vmatprep.subr.mxu0 0.0
        %757 = vmatpush1.xpose.msra.mxu0 0.0
        %758 = vmatprep.subr.mxu0 0.0
        %759 = vmatpush1.xpose.msra.mxu0 0.0
        %760 = vmatprep.subr.mxu0 0.0
        %761 = vmatpush1.xpose.msra.mxu0 0.0
        %762 = vmatprep.subr.mxu0 0.0
        %763 = vmatpush1.xpose.msra.mxu0 0.0
        %764 = vmatprep.mubr.f32.mxu0 0.0
        %765 = vmatmul.mubr.f32.gmra.mrb[0].mxu0 %v614
        %v766 = vpop.f32.mrb[0].mxu0
        %v767 = vadd.f32 %v695, %v766
        %v768 = vpop.f32.mrb[0].mxu0
        %769 = vdwg.mxu0
        %v770 = vld [vmem:[#allocation13] sm:$0xff]
        %v771 = vld [vmem:[#allocation14] sm:$0x1]
        %v773 = vlaneseq
        %v774 = vshrl.u32 %v773, 7
        %v775 = vsub.s32 0, %v774
        %v776 = vrot.slane %v771, %v775
        %v779 = vsel %vm612, %v770, 0
        %781 = vmatprep.subr.mxu0 0.0
        %782 = vmatpush1.xpose.msra.mxu0 %v779
        %783 = vmatprep.subr.mxu0 0.0
        %784 = vmatpush1.xpose.msra.mxu0 0.0
        %785 = vmatprep.subr.mxu0 0.0
        %786 = vmatpush1.xpose.msra.mxu0 0.0
        %787 = vmatprep.subr.mxu0 0.0
        %788 = vmatpush1.xpose.msra.mxu0 0.0
        %789 = vmatprep.subr.mxu0 0.0
        %790 = vmatpush1.xpose.msra.mxu0 0.0
        %791 = vmatprep.subr.mxu0 0.0
        %792 = vmatpush1.xpose.msra.mxu0 0.0
        %793 = vmatprep.subr.mxu0 0.0
        %794 = vmatpush1.xpose.msra.mxu0 0.0
        %795 = vmatprep.subr.mxu0 0.0
        %796 = vmatpush1.xpose.msra.mxu0 0.0
        %797 = vmatprep.subr.mxu0 0.0
        %798 = vmatpush1.xpose.msra.mxu0 0.0
        %799 = vmatprep.subr.mxu0 0.0
        %800 = vmatpush1.xpose.msra.mxu0 0.0
        %801 = vmatprep.subr.mxu0 0.0
        %802 = vmatpush1.xpose.msra.mxu0 0.0
        %803 = vmatprep.subr.mxu0 0.0
        %804 = vmatpush1.xpose.msra.mxu0 0.0
        %805 = vmatprep.subr.mxu0 0.0
        %806 = vmatpush1.xpose.msra.mxu0 0.0
        %807 = vmatprep.subr.mxu0 0.0
        %808 = vmatpush1.xpose.msra.mxu0 0.0
        %809 = vmatprep.subr.mxu0 0.0
        %810 = vmatpush1.xpose.msra.mxu0 0.0
        %811 = vmatprep.subr.mxu0 0.0
        %812 = vmatpush1.xpose.msra.mxu0 0.0
        %813 = vmatprep.subr.mxu0 0.0
        %814 = vmatpush1.xpose.msra.mxu0 0.0
        %815 = vmatprep.subr.mxu0 0.0
        %816 = vmatpush1.xpose.msra.mxu0 0.0
        %817 = vmatprep.subr.mxu0 0.0
        %818 = vmatpush1.xpose.msra.mxu0 0.0
        %819 = vmatprep.subr.mxu0 0.0
        %820 = vmatpush1.xpose.msra.mxu0 0.0
        %821 = vmatprep.subr.mxu0 0.0
        %822 = vmatpush1.xpose.msra.mxu0 0.0
        %823 = vmatprep.subr.mxu0 0.0
        %824 = vmatpush1.xpose.msra.mxu0 0.0
        %825 = vmatprep.subr.mxu0 0.0
        %826 = vmatpush1.xpose.msra.mxu0 0.0
        %827 = vmatprep.subr.mxu0 0.0
        %828 = vmatpush1.xpose.msra.mxu0 0.0
        %829 = vmatprep.subr.mxu0 0.0
        %830 = vmatpush1.xpose.msra.mxu0 0.0
        %831 = vmatprep.subr.mxu0 0.0
        %832 = vmatpush1.xpose.msra.mxu0 0.0
        %833 = vmatprep.subr.mxu0 0.0
        %834 = vmatpush1.xpose.msra.mxu0 0.0
        %835 = vmatprep.subr.mxu0 0.0
        %836 = vmatpush1.xpose.msra.mxu0 0.0
        %837 = vmatprep.subr.mxu0 0.0
        %838 = vmatpush1.xpose.msra.mxu0 0.0
        %839 = vmatprep.subr.mxu0 0.0
        %840 = vmatpush1.xpose.msra.mxu0 0.0
        %841 = vmatprep.subr.mxu0 0.0
        %842 = vmatpush1.xpose.msra.mxu0 0.0
        %843 = vmatprep.subr.mxu0 0.0
        %844 = vmatpush1.xpose.msra.mxu0 0.0
        %845 = vmatprep.mubr.f32.mxu0 0.0
        %846 = vmatmul.mubr.f32.gmra.mrb[0].mxu0 %v614
        %v847 = vpop.f32.mrb[0].mxu0
        %v848 = vadd.f32 %v776, %v847
        %v849 = vpop.f32.mrb[0].mxu0
        %850 = vdwg.mxu0
        %vm851 = vcmask 64512
        %v853 = vsel %vm851, %v686, 0
        %v856 = vsel %vm851, %v767, 0
        %858 = vmatprep.subr.mxu0 0.0
        %859 = vmatpush1.xpose.msra.mxu0 %v856
        %860 = vmatprep.subr.mxu0 0.0
        %861 = vmatpush1.xpose.msra.mxu0 0.0
        %862 = vmatprep.subr.mxu0 0.0
        %863 = vmatpush1.xpose.msra.mxu0 0.0
        %864 = vmatprep.subr.mxu0 0.0
        %865 = vmatpush1.xpose.msra.mxu0 0.0
        %866 = vmatprep.subr.mxu0 0.0
        %867 = vmatpush1.xpose.msra.mxu0 0.0
        %868 = vmatprep.subr.mxu0 0.0
        %869 = vmatpush1.xpose.msra.mxu0 0.0
        %870 = vmatprep.subr.mxu0 0.0
        %871 = vmatpush1.xpose.msra.mxu0 0.0
        %872 = vmatprep.subr.mxu0 0.0
        %873 = vmatpush1.xpose.msra.mxu0 0.0
        %874 = vmatprep.subr.mxu0 0.0
        %875 = vmatpush1.xpose.msra.mxu0 0.0
        %876 = vmatprep.subr.mxu0 0.0
        %877 = vmatpush1.xpose.msra.mxu0 0.0
        %878 = vmatprep.subr.mxu0 0.0
        %879 = vmatpush1.xpose.msra.mxu0 0.0
        %880 = vmatprep.subr.mxu0 0.0
        %881 = vmatpush1.xpose.msra.mxu0 0.0
        %882 = vmatprep.subr.mxu0 0.0
        %883 = vmatpush1.xpose.msra.mxu0 0.0
        %884 = vmatprep.subr.mxu0 0.0
        %885 = vmatpush1.xpose.msra.mxu0 0.0
        %886 = vmatprep.subr.mxu0 0.0
        %887 = vmatpush1.xpose.msra.mxu0 0.0
        %888 = vmatprep.subr.mxu0 0.0
        %889 = vmatpush1.xpose.msra.mxu0 0.0
        %890 = vmatprep.subr.mxu0 0.0
        %891 = vmatpush1.xpose.msra.mxu0 0.0
        %892 = vmatprep.subr.mxu0 0.0
        %893 = vmatpush1.xpose.msra.mxu0 0.0
        %894 = vmatprep.subr.mxu0 0.0
        %895 = vmatpush1.xpose.msra.mxu0 0.0
        %896 = vmatprep.subr.mxu0 0.0
        %897 = vmatpush1.xpose.msra.mxu0 0.0
        %898 = vmatprep.subr.mxu0 0.0
        %899 = vmatpush1.xpose.msra.mxu0 0.0
        %900 = vmatprep.subr.mxu0 0.0
        %901 = vmatpush1.xpose.msra.mxu0 0.0
        %902 = vmatprep.subr.mxu0 0.0
        %903 = vmatpush1.xpose.msra.mxu0 0.0
        %904 = vmatprep.subr.mxu0 0.0
        %905 = vmatpush1.xpose.msra.mxu0 0.0
        %906 = vmatprep.subr.mxu0 0.0
        %907 = vmatpush1.xpose.msra.mxu0 0.0
        %908 = vmatprep.subr.mxu0 0.0
        %909 = vmatpush1.xpose.msra.mxu0 0.0
        %910 = vmatprep.subr.mxu0 0.0
        %911 = vmatpush1.xpose.msra.mxu0 0.0
        %912 = vmatprep.subr.mxu0 0.0
        %913 = vmatpush1.xpose.msra.mxu0 0.0
        %914 = vmatprep.subr.mxu0 0.0
        %915 = vmatpush1.xpose.msra.mxu0 0.0
        %916 = vmatprep.subr.mxu0 0.0
        %917 = vmatpush1.xpose.msra.mxu0 0.0
        %918 = vmatprep.subr.mxu0 0.0
        %919 = vmatpush1.xpose.msra.mxu0 0.0
        %920 = vmatprep.subr.mxu0 0.0
        %921 = vmatpush1.xpose.msra.mxu0 0.0
        %922 = vmatprep.mubr.f32.mxu0 0.0
        %923 = vmatmul.mubr.f32.gmra.mrb[0].mxu0 %v853
        %v924 = vpop.f32.mrb[0].mxu0
        %v925 = vadd.f32 0.0, %v924
        %v926 = vpop.f32.mrb[0].mxu0
        %927 = vdwg.mxu0
        %v928 = vmul.f32 %v925, 0.35355338
        %v930 = vlaneseq
        %v931 = vshrl.u32 %v930, 7
        %v932 = vsub.s32 0, %v931
        %v933 = vrot.slane %v603, %v932
        %v935 = vadd.f32 %v928, %v933
        %v936 = vsel %vm851, %v935, -inf
        %937 = vmax.xlane.f32.xlu0 %v936
        %v938 = vpop.xlane.xlu0 %937
        %v939 = vsub.f32 %v935, %v938
        %v940 = vmul.f32 %v939, 1.442695
        %v941 = vpow.pop %v940
        %v942 = vsel %vm851, %v941, 0.0
        %943 = vadd.xlane.f32.xlu0 %v942
        %v944 = vpop.xlane.xlu0 %943
        %v945 = vrcp.pop %v944
        %v946 = vmul.f32 %v941, %v945
        %v948 = vsel %vm851, %v946, 0
        %950 = vmatprep.subr.mxu0 0.0
        %951 = vmatpush1.msra.mxu0 %v848
        %952 = vmatprep.subr.mxu0 0.0
        %953 = vmatpush1.msra.mxu0 0.0
        %954 = vmatprep.subr.mxu0 0.0
        %955 = vmatpush1.msra.mxu0 0.0
        %956 = vmatprep.subr.mxu0 0.0
        %957 = vmatpush1.msra.mxu0 0.0
        %958 = vmatprep.subr.mxu0 0.0
        %959 = vmatpush1.msra.mxu0 0.0
        %960 = vmatprep.subr.mxu0 0.0
        %961 = vmatpush1.msra.mxu0 0.0
        %962 = vmatprep.subr.mxu0 0.0
        %963 = vmatpush1.msra.mxu0 0.0
        %964 = vmatprep.subr.mxu0 0.0
        %965 = vmatpush1.msra.mxu0 0.0
        %966 = vmatprep.subr.mxu0 0.0
        %967 = vmatpush1.msra.mxu0 0.0
        %968 = vmatprep.subr.mxu0 0.0
        %969 = vmatpush1.msra.mxu0 0.0
        %970 = vmatprep.subr.mxu0 0.0
        %971 = vmatpush1.msra.mxu0 0.0
        %972 = vmatprep.subr.mxu0 0.0
        %973 = vmatpush1.msra.mxu0 0.0
        %974 = vmatprep.subr.mxu0 0.0
        %975 = vmatpush1.msra.mxu0 0.0
        %976 = vmatprep.subr.mxu0 0.0
        %977 = vmatpush1.msra.mxu0 0.0
        %978 = vmatprep.subr.mxu0 0.0
        %979 = vmatpush1.msra.mxu0 0.0
        %980 = vmatprep.subr.mxu0 0.0
        %981 = vmatpush1.msra.mxu0 0.0
        %982 = vmatprep.subr.mxu0 0.0
        %983 = vmatpush1.msra.mxu0 0.0
        %984 = vmatprep.subr.mxu0 0.0
        %985 = vmatpush1.msra.mxu0 0.0
        %986 = vmatprep.subr.mxu0 0.0
        %987 = vmatpush1.msra.mxu0 0.0
        %988 = vmatprep.subr.mxu0 0.0
        %989 = vmatpush1.msra.mxu0 0.0
        %990 = vmatprep.subr.mxu0 0.0
        %991 = vmatpush1.msra.mxu0 0.0
        %992 = vmatprep.subr.mxu0 0.0
        %993 = vmatpush1.msra.mxu0 0.0
        %994 = vmatprep.subr.mxu0 0.0
        %995 = vmatpush1.msra.mxu0 0.0
        %996 = vmatprep.subr.mxu0 0.0
        %997 = vmatpush1.msra.mxu0 0.0
        %998 = vmatprep.subr.mxu0 0.0
        %999 = vmatpush1.msra.mxu0 0.0
        %1000 = vmatprep.subr.mxu0 0.0
        %1001 = vmatpush1.msra.mxu0 0.0
        %1002 = vmatprep.subr.mxu0 0.0
        %1003 = vmatpush1.msra.mxu0 0.0
        %1004 = vmatprep.subr.mxu0 0.0
        %1005 = vmatpush1.msra.mxu0 0.0
        %1006 = vmatprep.subr.mxu0 0.0
        %1007 = vmatpush1.msra.mxu0 0.0
        %1008 = vmatprep.subr.mxu0 0.0
        %1009 = vmatpush1.msra.mxu0 0.0
        %1010 = vmatprep.subr.mxu0 0.0
        %1011 = vmatpush1.msra.mxu0 0.0
        %1012 = vmatprep.subr.mxu0 0.0
        %1013 = vmatpush1.msra.mxu0 0.0
        %1014 = vmatprep.mubr.f32.mxu0 0.0
        %1015 = vmatmul.mubr.f32.gmra.mrb[0].mxu0 %v948
        %v1016 = vpop.f32.mrb[0].mxu0
        %v1017 = vadd.f32 0.0, %v1016
        %v1018 = vpop.f32.mrb[0].mxu0
        %1019 = vdwg.mxu0
        %v1020 = vld [vmem:[#allocation16] sm:$0xff]
        %v1021 = vld [vmem:[#allocation16 + $0x8] sm:$0xff]
        %v1022 = vld [vmem:[#allocation16 + $0x10] sm:$0xff]
        %v1023 = vld [vmem:[#allocation16 + $0x18] sm:$0xff]
        %s1024 = scalar_lea.vmem [#allocation7], 8
        %v1025 = vld [vmem:[%s1024] sm:$0xff]
        %s1026 = scalar_lea.vmem [#allocation8], 1
        %v1027 = vld [vmem:[%s1026] sm:$0x1]
        %v1029 = vlaneseq
        %v1030 = vshrl.u32 %v1029, 7
        %v1031 = vsub.s32 0, %v1030
        %v1032 = vrot.slane %v1027, %v1031
        %v1035 = vsel %vm612, %v1025, 0
        %1037 = vmatprep.subr.mxu0 0.0
        %1038 = vmatpush1.xpose.msra.mxu0 %v1035
        %1039 = vmatprep.subr.mxu0 0.0
        %1040 = vmatpush1.xpose.msra.mxu0 0.0
        %1041 = vmatprep.subr.mxu0 0.0
        %1042 = vmatpush1.xpose.msra.mxu0 0.0
        %1043 = vmatprep.subr.mxu0 0.0
        %1044 = vmatpush1.xpose.msra.mxu0 0.0
        %1045 = vmatprep.subr.mxu0 0.0
        %1046 = vmatpush1.xpose.msra.mxu0 0.0
        %1047 = vmatprep.subr.mxu0 0.0
        %1048 = vmatpush1.xpose.msra.mxu0 0.0
        %1049 = vmatprep.subr.mxu0 0.0
        %1050 = vmatpush1.xpose.msra.mxu0 0.0
        %1051 = vmatprep.subr.mxu0 0.0
        %1052 = vmatpush1.xpose.msra.mxu0 0.0
        %1053 = vmatprep.subr.mxu0 0.0
        %1054 = vmatpush1.xpose.msra.mxu0 0.0
        %1055 = vmatprep.subr.mxu0 0.0
        %1056 = vmatpush1.xpose.msra.mxu0 0.0
        %1057 = vmatprep.subr.mxu0 0.0
        %1058 = vmatpush1.xpose.msra.mxu0 0.0
        %1059 = vmatprep.subr.mxu0 0.0
        %1060 = vmatpush1.xpose.msra.mxu0 0.0
        %1061 = vmatprep.subr.mxu0 0.0
        %1062 = vmatpush1.xpose.msra.mxu0 0.0
        %1063 = vmatprep.subr.mxu0 0.0
        %1064 = vmatpush1.xpose.msra.mxu0 0.0
        %1065 = vmatprep.subr.mxu0 0.0
        %1066 = vmatpush1.xpose.msra.mxu0 0.0
        %1067 = vmatprep.subr.mxu0 0.0
        %1068 = vmatpush1.xpose.msra.mxu0 0.0
        %1069 = vmatprep.subr.mxu0 0.0
        %1070 = vmatpush1.xpose.msra.mxu0 0.0
        %1071 = vmatprep.subr.mxu0 0.0
        %1072 = vmatpush1.xpose.msra.mxu0 0.0
        %1073 = vmatprep.subr.mxu0 0.0
        %1074 = vmatpush1.xpose.msra.mxu0 0.0
        %1075 = vmatprep.subr.mxu0 0.0
        %1076 = vmatpush1.xpose.msra.mxu0 0.0
        %1077 = vmatprep.subr.mxu0 0.0
        %1078 = vmatpush1.xpose.msra.mxu0 0.0
        %1079 = vmatprep.subr.mxu0 0.0
        %1080 = vmatpush1.xpose.msra.mxu0 0.0
        %1081 = vmatprep.subr.mxu0 0.0
        %1082 = vmatpush1.xpose.msra.mxu0 0.0
        %1083 = vmatprep.subr.mxu0 0.0
        %1084 = vmatpush1.xpose.msra.mxu0 0.0
        %1085 = vmatprep.subr.mxu0 0.0
        %1086 = vmatpush1.xpose.msra.mxu0 0.0
        %1087 = vmatprep.subr.mxu0 0.0
        %1088 = vmatpush1.xpose.msra.mxu0 0.0
        %1089 = vmatprep.subr.mxu0 0.0
        %1090 = vmatpush1.xpose.msra.mxu0 0.0
        %1091 = vmatprep.subr.mxu0 0.0
        %1092 = vmatpush1.xpose.msra.mxu0 0.0
        %1093 = vmatprep.subr.mxu0 0.0
        %1094 = vmatpush1.xpose.msra.mxu0 0.0
        %1095 = vmatprep.subr.mxu0 0.0
        %1096 = vmatpush1.xpose.msra.mxu0 0.0
        %1097 = vmatprep.subr.mxu0 0.0
        %1098 = vmatpush1.xpose.msra.mxu0 0.0
        %1099 = vmatprep.subr.mxu0 0.0
        %1100 = vmatpush1.xpose.msra.mxu0 0.0
        %1101 = vmatprep.mubr.f32.mxu0 0.0
        %1102 = vmatmul.mubr.f32.gmra.mrb[0].mxu0 %v614
        %v1103 = vpop.f32.mrb[0].mxu0
        %v1104 = vadd.f32 %v1032, %v1103
        %v1105 = vpop.f32.mrb[0].mxu0
        %1106 = vdwg.mxu0
        %s1107 = scalar_lea.vmem [#allocation10], 8
        %v1108 = vld [vmem:[%s1107] sm:$0xff]
        %s1109 = scalar_lea.vmem [#allocation11], 1
        %v1110 = vld [vmem:[%s1109] sm:$0x1]
        %v1112 = vlaneseq
        %v1113 = vshrl.u32 %v1112, 7
        %v1114 = vsub.s32 0, %v1113
        %v1115 = vrot.slane %v1110, %v1114
        %v1118 = vsel %vm612, %v1108, 0
        %1120 = vmatprep.subr.mxu0 0.0
        %1121 = vmatpush1.xpose.msra.mxu0 %v1118
        %1122 = vmatprep.subr.mxu0 0.0
        %1123 = vmatpush1.xpose.msra.mxu0 0.0
        %1124 = vmatprep.subr.mxu0 0.0
        %1125 = vmatpush1.xpose.msra.mxu0 0.0
        %1126 = vmatprep.subr.mxu0 0.0
        %1127 = vmatpush1.xpose.msra.mxu0 0.0
        %1128 = vmatprep.subr.mxu0 0.0
        %1129 = vmatpush1.xpose.msra.mxu0 0.0
        %1130 = vmatprep.subr.mxu0 0.0
        %1131 = vmatpush1.xpose.msra.mxu0 0.0
        %1132 = vmatprep.subr.mxu0 0.0
        %1133 = vmatpush1.xpose.msra.mxu0 0.0
        %1134 = vmatprep.subr.mxu0 0.0
        %1135 = vmatpush1.xpose.msra.mxu0 0.0
        %1136 = vmatprep.subr.mxu0 0.0
        %1137 = vmatpush1.xpose.msra.mxu0 0.0
        %1138 = vmatprep.subr.mxu0 0.0
        %1139 = vmatpush1.xpose.msra.mxu0 0.0
        %1140 = vmatprep.subr.mxu0 0.0
        %1141 = vmatpush1.xpose.msra.mxu0 0.0
        %1142 = vmatprep.subr.mxu0 0.0
        %1143 = vmatpush1.xpose.msra.mxu0 0.0
        %1144 = vmatprep.subr.mxu0 0.0
        %1145 = vmatpush1.xpose.msra.mxu0 0.0
        %1146 = vmatprep.subr.mxu0 0.0
        %1147 = vmatpush1.xpose.msra.mxu0 0.0
        %1148 = vmatprep.subr.mxu0 0.0
        %1149 = vmatpush1.xpose.msra.mxu0 0.0
        %1150 = vmatprep.subr.mxu0 0.0
        %1151 = vmatpush1.xpose.msra.mxu0 0.0
        %1152 = vmatprep.subr.mxu0 0.0
        %1153 = vmatpush1.xpose.msra.mxu0 0.0
        %1154 = vmatprep.subr.mxu0 0.0
        %1155 = vmatpush1.xpose.msra.mxu0 0.0
        %1156 = vmatprep.subr.mxu0 0.0
        %1157 = vmatpush1.xpose.msra.mxu0 0.0
        %1158 = vmatprep.subr.mxu0 0.0
        %1159 = vmatpush1.xpose.msra.mxu0 0.0
        %1160 = vmatprep.subr.mxu0 0.0
        %1161 = vmatpush1.xpose.msra.mxu0 0.0
        %1162 = vmatprep.subr.mxu0 0.0
        %1163 = vmatpush1.xpose.msra.mxu0 0.0
        %1164 = vmatprep.subr.mxu0 0.0
        %1165 = vmatpush1.xpose.msra.mxu0 0.0
        %1166 = vmatprep.subr.mxu0 0.0
        %1167 = vmatpush1.xpose.msra.mxu0 0.0
        %1168 = vmatprep.subr.mxu0 0.0
        %1169 = vmatpush1.xpose.msra.mxu0 0.0
        %1170 = vmatprep.subr.mxu0 0.0
        %1171 = vmatpush1.xpose.msra.mxu0 0.0
        %1172 = vmatprep.subr.mxu0 0.0
        %1173 = vmatpush1.xpose.msra.mxu0 0.0
        %1174 = vmatprep.subr.mxu0 0.0
        %1175 = vmatpush1.xpose.msra.mxu0 0.0
        %1176 = vmatprep.subr.mxu0 0.0
        %1177 = vmatpush1.xpose.msra.mxu0 0.0
        %1178 = vmatprep.subr.mxu0 0.0
        %1179 = vmatpush1.xpose.msra.mxu0 0.0
        %1180 = vmatprep.subr.mxu0 0.0
        %1181 = vmatpush1.xpose.msra.mxu0 0.0
        %1182 = vmatprep.subr.mxu0 0.0
        %1183 = vmatpush1.xpose.msra.mxu0 0.0
        %1184 = vmatprep.mubr.f32.mxu0 0.0
        %1185 = vmatmul.mubr.f32.gmra.mrb[0].mxu0 %v614
        %v1186 = vpop.f32.mrb[0].mxu0
        %v1187 = vadd.f32 %v1115, %v1186
        %v1188 = vpop.f32.mrb[0].mxu0
        %1189 = vdwg.mxu0
        %s1190 = scalar_lea.vmem [#allocation13], 8
        %v1191 = vld [vmem:[%s1190] sm:$0xff]
        %s1192 = scalar_lea.vmem [#allocation14], 1
        %v1193 = vld [vmem:[%s1192] sm:$0x1]
        %v1195 = vlaneseq
        %v1196 = vshrl.u32 %v1195, 7
        %v1197 = vsub.s32 0, %v1196
        %v1198 = vrot.slane %v1193, %v1197
        %v1201 = vsel %vm612, %v1191, 0
        %1203 = vmatprep.subr.mxu0 0.0
        %1204 = vmatpush1.xpose.msra.mxu0 %v1201
        %1205 = vmatprep.subr.mxu0 0.0
        %1206 = vmatpush1.xpose.msra.mxu0 0.0
        %1207 = vmatprep.subr.mxu0 0.0
        %1208 = vmatpush1.xpose.msra.mxu0 0.0
        %1209 = vmatprep.subr.mxu0 0.0
        %1210 = vmatpush1.xpose.msra.mxu0 0.0
        %1211 = vmatprep.subr.mxu0 0.0
        %1212 = vmatpush1.xpose.msra.mxu0 0.0
        %1213 = vmatprep.subr.mxu0 0.0
        %1214 = vmatpush1.xpose.msra.mxu0 0.0
        %1215 = vmatprep.subr.mxu0 0.0
        %1216 = vmatpush1.xpose.msra.mxu0 0.0
        %1217 = vmatprep.subr.mxu0 0.0
        %1218 = vmatpush1.xpose.msra.mxu0 0.0
        %1219 = vmatprep.subr.mxu0 0.0
        %1220 = vmatpush1.xpose.msra.mxu0 0.0
        %1221 = vmatprep.subr.mxu0 0.0
        %1222 = vmatpush1.xpose.msra.mxu0 0.0
        %1223 = vmatprep.subr.mxu0 0.0
        %1224 = vmatpush1.xpose.msra.mxu0 0.0
        %1225 = vmatprep.subr.mxu0 0.0
        %1226 = vmatpush1.xpose.msra.mxu0 0.0
        %1227 = vmatprep.subr.mxu0 0.0
        %1228 = vmatpush1.xpose.msra.mxu0 0.0
        %1229 = vmatprep.subr.mxu0 0.0
        %1230 = vmatpush1.xpose.msra.mxu0 0.0
        %1231 = vmatprep.subr.mxu0 0.0
        %1232 = vmatpush1.xpose.msra.mxu0 0.0
        %1233 = vmatprep.subr.mxu0 0.0
        %1234 = vmatpush1.xpose.msra.mxu0 0.0
        %1235 = vmatprep.subr.mxu0 0.0
        %1236 = vmatpush1.xpose.msra.mxu0 0.0
        %1237 = vmatprep.subr.mxu0 0.0
        %1238 = vmatpush1.xpose.msra.mxu0 0.0
        %1239 = vmatprep.subr.mxu0 0.0
        %1240 = vmatpush1.xpose.msra.mxu0 0.0
        %1241 = vmatprep.subr.mxu0 0.0
        %1242 = vmatpush1.xpose.msra.mxu0 0.0
        %1243 = vmatprep.subr.mxu0 0.0
        %1244 = vmatpush1.xpose.msra.mxu0 0.0
        %1245 = vmatprep.subr.mxu0 0.0
        %1246 = vmatpush1.xpose.msra.mxu0 0.0
        %1247 = vmatprep.subr.mxu0 0.0
        %1248 = vmatpush1.xpose.msra.mxu0 0.0
        %1249 = vmatprep.subr.mxu0 0.0
        %1250 = vmatpush1.xpose.msra.mxu0 0.0
        %1251 = vmatprep.subr.mxu0 0.0
        %1252 = vmatpush1.xpose.msra.mxu0 0.0
        %1253 = vmatprep.subr.mxu0 0.0
        %1254 = vmatpush1.xpose.msra.mxu0 0.0
        %1255 = vmatprep.subr.mxu0 0.0
        %1256 = vmatpush1.xpose.msra.mxu0 0.0
        %1257 = vmatprep.subr.mxu0 0.0
        %1258 = vmatpush1.xpose.msra.mxu0 0.0
        %1259 = vmatprep.subr.mxu0 0.0
        %1260 = vmatpush1.xpose.msra.mxu0 0.0
        %1261 = vmatprep.subr.mxu0 0.0
        %1262 = vmatpush1.xpose.msra.mxu0 0.0
        %1263 = vmatprep.subr.mxu0 0.0
        %1264 = vmatpush1.xpose.msra.mxu0 0.0
        %1265 = vmatprep.subr.mxu0 0.0
        %1266 = vmatpush1.xpose.msra.mxu0 0.0
        %1267 = vmatprep.mubr.f32.mxu0 0.0
        %1268 = vmatmul.mubr.f32.gmra.mrb[0].mxu0 %v614
        %v1269 = vpop.f32.mrb[0].mxu0
        %v1270 = vadd.f32 %v1198, %v1269
        %v1271 = vpop.f32.mrb[0].mxu0
        %1272 = vdwg.mxu0
        %v1274 = vsel %vm851, %v1104, 0
        %v1277 = vsel %vm851, %v1187, 0
        %1279 = vmatprep.subr.mxu0 0.0
        %1280 = vmatpush1.xpose.msra.mxu0 %v1277
        %1281 = vmatprep.subr.mxu0 0.0
        %1282 = vmatpush1.xpose.msra.mxu0 0.0
        %1283 = vmatprep.subr.mxu0 0.0
        %1284 = vmatpush1.xpose.msra.mxu0 0.0
        %1285 = vmatprep.subr.mxu0 0.0
        %1286 = vmatpush1.xpose.msra.mxu0 0.0
        %1287 = vmatprep.subr.mxu0 0.0
        %1288 = vmatpush1.xpose.msra.mxu0 0.0
        %1289 = vmatprep.subr.mxu0 0.0
        %1290 = vmatpush1.xpose.msra.mxu0 0.0
        %1291 = vmatprep.subr.mxu0 0.0
        %1292 = vmatpush1.xpose.msra.mxu0 0.0
        %1293 = vmatprep.subr.mxu0 0.0
        %1294 = vmatpush1.xpose.msra.mxu0 0.0
        %1295 = vmatprep.subr.mxu0 0.0
        %1296 = vmatpush1.xpose.msra.mxu0 0.0
        %1297 = vmatprep.subr.mxu0 0.0
        %1298 = vmatpush1.xpose.msra.mxu0 0.0
        %1299 = vmatprep.subr.mxu0 0.0
        %1300 = vmatpush1.xpose.msra.mxu0 0.0
        %1301 = vmatprep.subr.mxu0 0.0
        %1302 = vmatpush1.xpose.msra.mxu0 0.0
        %1303 = vmatprep.subr.mxu0 0.0
        %1304 = vmatpush1.xpose.msra.mxu0 0.0
        %1305 = vmatprep.subr.mxu0 0.0
        %1306 = vmatpush1.xpose.msra.mxu0 0.0
        %1307 = vmatprep.subr.mxu0 0.0
        %1308 = vmatpush1.xpose.msra.mxu0 0.0
        %1309 = vmatprep.subr.mxu0 0.0
        %1310 = vmatpush1.xpose.msra.mxu0 0.0
        %1311 = vmatprep.subr.mxu0 0.0
        %1312 = vmatpush1.xpose.msra.mxu0 0.0
        %1313 = vmatprep.subr.mxu0 0.0
        %1314 = vmatpush1.xpose.msra.mxu0 0.0
        %1315 = vmatprep.subr.mxu0 0.0
        %1316 = vmatpush1.xpose.msra.mxu0 0.0
        %1317 = vmatprep.subr.mxu0 0.0
        %1318 = vmatpush1.xpose.msra.mxu0 0.0
        %1319 = vmatprep.subr.mxu0 0.0
        %1320 = vmatpush1.xpose.msra.mxu0 0.0
        %1321 = vmatprep.subr.mxu0 0.0
        %1322 = vmatpush1.xpose.msra.mxu0 0.0
        %1323 = vmatprep.subr.mxu0 0.0
        %1324 = vmatpush1.xpose.msra.mxu0 0.0
        %1325 = vmatprep.subr.mxu0 0.0
        %1326 = vmatpush1.xpose.msra.mxu0 0.0
        %1327 = vmatprep.subr.mxu0 0.0
        %1328 = vmatpush1.xpose.msra.mxu0 0.0
        %1329 = vmatprep.subr.mxu0 0.0
        %1330 = vmatpush1.xpose.msra.mxu0 0.0
        %1331 = vmatprep.subr.mxu0 0.0
        %1332 = vmatpush1.xpose.msra.mxu0 0.0
        %1333 = vmatprep.subr.mxu0 0.0
        %1334 = vmatpush1.xpose.msra.mxu0 0.0
        %1335 = vmatprep.subr.mxu0 0.0
        %1336 = vmatpush1.xpose.msra.mxu0 0.0
        %1337 = vmatprep.subr.mxu0 0.0
        %1338 = vmatpush1.xpose.msra.mxu0 0.0
        %1339 = vmatprep.subr.mxu0 0.0
        %1340 = vmatpush1.xpose.msra.mxu0 0.0
        %1341 = vmatprep.subr.mxu0 0.0
        %1342 = vmatpush1.xpose.msra.mxu0 0.0
        %1343 = vmatprep.mubr.f32.mxu0 0.0
        %1344 = vmatmul.mubr.f32.gmra.mrb[0].mxu0 %v1274
        %v1345 = vpop.f32.mrb[0].mxu0
        %v1346 = vadd.f32 0.0, %v1345
        %v1347 = vpop.f32.mrb[0].mxu0
        %1348 = vdwg.mxu0
        %v1349 = vmul.f32 %v1346, 0.35355338
        %v1350 = vadd.f32 %v1349, %v933
        %v1351 = vsel %vm851, %v1350, -inf
        %1352 = vmax.xlane.f32.xlu0 %v1351
        %v1353 = vpop.xlane.xlu0 %1352
        %v1354 = vsub.f32 %v1350, %v1353
        %v1355 = vmul.f32 %v1354, 1.442695
        %v1356 = vpow.pop %v1355
        %v1357 = vsel %vm851, %v1356, 0.0
        %1358 = vadd.xlane.f32.xlu0 %v1357
        %v1359 = vpop.xlane.xlu0 %1358
        %v1360 = vrcp.pop %v1359
        %v1361 = vmul.f32 %v1356, %v1360
        %v1363 = vsel %vm851, %v1361, 0
        %1365 = vmatprep.subr.mxu0 0.0
        %1366 = vmatpush1.msra.mxu0 %v1270
        %1367 = vmatprep.subr.mxu0 0.0
        %1368 = vmatpush1.msra.mxu0 0.0
        %1369 = vmatprep.subr.mxu0 0.0
        %1370 = vmatpush1.msra.mxu0 0.0
        %1371 = vmatprep.subr.mxu0 0.0
        %1372 = vmatpush1.msra.mxu0 0.0
        %1373 = vmatprep.subr.mxu0 0.0
        %1374 = vmatpush1.msra.mxu0 0.0
        %1375 = vmatprep.subr.mxu0 0.0
        %1376 = vmatpush1.msra.mxu0 0.0
        %1377 = vmatprep.subr.mxu0 0.0
        %1378 = vmatpush1.msra.mxu0 0.0
        %1379 = vmatprep.subr.mxu0 0.0
        %1380 = vmatpush1.msra.mxu0 0.0
        %1381 = vmatprep.subr.mxu0 0.0
        %1382 = vmatpush1.msra.mxu0 0.0
        %1383 = vmatprep.subr.mxu0 0.0
        %1384 = vmatpush1.msra.mxu0 0.0
        %1385 = vmatprep.subr.mxu0 0.0
        %1386 = vmatpush1.msra.mxu0 0.0
        %1387 = vmatprep.subr.mxu0 0.0
        %1388 = vmatpush1.msra.mxu0 0.0
        %1389 = vmatprep.subr.mxu0 0.0
        %1390 = vmatpush1.msra.mxu0 0.0
        %1391 = vmatprep.subr.mxu0 0.0
        %1392 = vmatpush1.msra.mxu0 0.0
        %1393 = vmatprep.subr.mxu0 0.0
        %1394 = vmatpush1.msra.mxu0 0.0
        %1395 = vmatprep.subr.mxu0 0.0
        %1396 = vmatpush1.msra.mxu0 0.0
        %1397 = vmatprep.subr.mxu0 0.0
        %1398 = vmatpush1.msra.mxu0 0.0
        %1399 = vmatprep.subr.mxu0 0.0
        %1400 = vmatpush1.msra.mxu0 0.0
        %1401 = vmatprep.subr.mxu0 0.0
        %1402 = vmatpush1.msra.mxu0 0.0
        %1403 = vmatprep.subr.mxu0 0.0
        %1404 = vmatpush1.msra.mxu0 0.0
        %1405 = vmatprep.subr.mxu0 0.0
        %1406 = vmatpush1.msra.mxu0 0.0
        %1407 = vmatprep.subr.mxu0 0.0
        %1408 = vmatpush1.msra.mxu0 0.0
        %1409 = vmatprep.subr.mxu0 0.0
        %1410 = vmatpush1.msra.mxu0 0.0
        %1411 = vmatprep.subr.mxu0 0.0
        %1412 = vmatpush1.msra.mxu0 0.0
        %1413 = vmatprep.subr.mxu0 0.0
        %1414 = vmatpush1.msra.mxu0 0.0
        %1415 = vmatprep.subr.mxu0 0.0
        %1416 = vmatpush1.msra.mxu0 0.0
        %1417 = vmatprep.subr.mxu0 0.0
        %1418 = vmatpush1.msra.mxu0 0.0
        %1419 = vmatprep.subr.mxu0 0.0
        %1420 = vmatpush1.msra.mxu0 0.0
        %1421 = vmatprep.subr.mxu0 0.0
        %1422 = vmatpush1.msra.mxu0 0.0
        %1423 = vmatprep.subr.mxu0 0.0
        %1424 = vmatpush1.msra.mxu0 0.0
        %1425 = vmatprep.subr.mxu0 0.0
        %1426 = vmatpush1.msra.mxu0 0.0
        %1427 = vmatprep.subr.mxu0 0.0
        %1428 = vmatpush1.msra.mxu0 0.0
        %1429 = vmatprep.mubr.f32.mxu0 0.0
        %1430 = vmatmul.mubr.f32.gmra.mrb[0].mxu0 %v1363
        %v1431 = vpop.f32.mrb[0].mxu0
        %v1432 = vadd.f32 0.0, %v1431
        %v1433 = vpop.f32.mrb[0].mxu0
        %1434 = vdwg.mxu0
        %s1435 = scalar_lea.vmem [#allocation16], 32
        %v1436 = vld [vmem:[%s1435] sm:$0xff]
        %v1437 = vld [vmem:[%s1435 + $0x8] sm:$0xff]
        %v1438 = vld [vmem:[%s1435 + $0x10] sm:$0xff]
        %v1439 = vld [vmem:[%s1435 + $0x18] sm:$0xff]
        %v1441 = vsel %vm851, %v1432, 0
        %v1444 = vsel %vm851, %v1436, 0
        %v1447 = vsel %vm851, %v1437, 0
        %v1450 = vsel %vm851, %v1438, 0
        %v1453 = vsel %vm851, %v1439, 0
        %1455 = vmatprep.subr.mxu0 0.0
        %1456 = vmatpush1.xpose.msra.mxu0 %v1444
        %1457 = vmatprep.subr.mxu0 0.0
        %1458 = vmatpush1.xpose.msra.mxu0 %v1447
        %1459 = vmatprep.subr.mxu0 0.0
        %1460 = vmatpush1.xpose.msra.mxu0 %v1450
        %1461 = vmatprep.subr.mxu0 0.0
        %1462 = vmatpush1.xpose.msra.mxu0 %v1453
        %1463 = vmatprep.subr.mxu0 0.0
        %1464 = vmatpush1.xpose.msra.mxu0 0.0
        %1465 = vmatprep.subr.mxu0 0.0
        %1466 = vmatpush1.xpose.msra.mxu0 0.0
        %1467 = vmatprep.subr.mxu0 0.0
        %1468 = vmatpush1.xpose.msra.mxu0 0.0
        %1469 = vmatprep.subr.mxu0 0.0
        %1470 = vmatpush1.xpose.msra.mxu0 0.0
        %1471 = vmatprep.subr.mxu0 0.0
        %1472 = vmatpush1.xpose.msra.mxu0 0.0
        %1473 = vmatprep.subr.mxu0 0.0
        %1474 = vmatpush1.xpose.msra.mxu0 0.0
        %1475 = vmatprep.subr.mxu0 0.0
        %1476 = vmatpush1.xpose.msra.mxu0 0.0
        %1477 = vmatprep.subr.mxu0 0.0
        %1478 = vmatpush1.xpose.msra.mxu0 0.0
        %1479 = vmatprep.subr.mxu0 0.0
        %1480 = vmatpush1.xpose.msra.mxu0 0.0
        %1481 = vmatprep.subr.mxu0 0.0
        %1482 = vmatpush1.xpose.msra.mxu0 0.0
        %1483 = vmatprep.subr.mxu0 0.0
        %1484 = vmatpush1.xpose.msra.mxu0 0.0
        %1485 = vmatprep.subr.mxu0 0.0
        %1486 = vmatpush1.xpose.msra.mxu0 0.0
        %1487 = vmatprep.subr.mxu0 0.0
        %1488 = vmatpush1.xpose.msra.mxu0 0.0
        %1489 = vmatprep.subr.mxu0 0.0
        %1490 = vmatpush1.xpose.msra.mxu0 0.0
        %1491 = vmatprep.subr.mxu0 0.0
        %1492 = vmatpush1.xpose.msra.mxu0 0.0
        %1493 = vmatprep.subr.mxu0 0.0
        %1494 = vmatpush1.xpose.msra.mxu0 0.0
        %1495 = vmatprep.subr.mxu0 0.0
        %1496 = vmatpush1.xpose.msra.mxu0 0.0
        %1497 = vmatprep.subr.mxu0 0.0
        %1498 = vmatpush1.xpose.msra.mxu0 0.0
        %1499 = vmatprep.subr.mxu0 0.0
        %1500 = vmatpush1.xpose.msra.mxu0 0.0
        %1501 = vmatprep.subr.mxu0 0.0
        %1502 = vmatpush1.xpose.msra.mxu0 0.0
        %1503 = vmatprep.subr.mxu0 0.0
        %1504 = vmatpush1.xpose.msra.mxu0 0.0
        %1505 = vmatprep.subr.mxu0 0.0
        %1506 = vmatpush1.xpose.msra.mxu0 0.0
        %1507 = vmatprep.subr.mxu0 0.0
        %1508 = vmatpush1.xpose.msra.mxu0 0.0
        %1509 = vmatprep.subr.mxu0 0.0
        %1510 = vmatpush1.xpose.msra.mxu0 0.0
        %1511 = vmatprep.subr.mxu0 0.0
        %1512 = vmatpush1.xpose.msra.mxu0 0.0
        %1513 = vmatprep.subr.mxu0 0.0
        %1514 = vmatpush1.xpose.msra.mxu0 0.0
        %1515 = vmatprep.subr.mxu0 0.0
        %1516 = vmatpush1.xpose.msra.mxu0 0.0
        %1517 = vmatprep.subr.mxu0 0.0
        %1518 = vmatpush1.xpose.msra.mxu0 0.0
        %1519 = vmatprep.mubr.f32.mxu0 0.0
        %1520 = vmatmul.mubr.f32.gmra.mrb[0].mxu0 %v1441
        %v1521 = vpop.f32.mrb[0].mxu0
        %v1522 = vadd.f32 0.0, %v1521
        %v1523 = vpop.f32.mrb[0].mxu0
        %1524 = vdwg.mxu0
        %v1526 = vsel %vm851, %v1017, 0
        %v1529 = vsel %vm851, %v1020, 0
        %v1532 = vsel %vm851, %v1021, 0
        %v1535 = vsel %vm851, %v1022, 0
        %v1538 = vsel %vm851, %v1023, 0
        %1540 = vmatprep.subr.mxu0 0.0
        %1541 = vmatpush1.xpose.msra.mxu0 %v1529
        %1542 = vmatprep.subr.mxu0 0.0
        %1543 = vmatpush1.xpose.msra.mxu0 %v1532
        %1544 = vmatprep.subr.mxu0 0.0
        %1545 = vmatpush1.xpose.msra.mxu0 %v1535
        %1546 = vmatprep.subr.mxu0 0.0
        %1547 = vmatpush1.xpose.msra.mxu0 %v1538
        %1548 = vmatprep.subr.mxu0 0.0
        %1549 = vmatpush1.xpose.msra.mxu0 0.0
        %1550 = vmatprep.subr.mxu0 0.0
        %1551 = vmatpush1.xpose.msra.mxu0 0.0
        %1552 = vmatprep.subr.mxu0 0.0
        %1553 = vmatpush1.xpose.msra.mxu0 0.0
        %1554 = vmatprep.subr.mxu0 0.0
        %1555 = vmatpush1.xpose.msra.mxu0 0.0
        %1556 = vmatprep.subr.mxu0 0.0
        %1557 = vmatpush1.xpose.msra.mxu0 0.0
        %1558 = vmatprep.subr.mxu0 0.0
        %1559 = vmatpush1.xpose.msra.mxu0 0.0
        %1560 = vmatprep.subr.mxu0 0.0
        %1561 = vmatpush1.xpose.msra.mxu0 0.0
        %1562 = vmatprep.subr.mxu0 0.0
        %1563 = vmatpush1.xpose.msra.mxu0 0.0
        %1564 = vmatprep.subr.mxu0 0.0
        %1565 = vmatpush1.xpose.msra.mxu0 0.0
        %1566 = vmatprep.subr.mxu0 0.0
        %1567 = vmatpush1.xpose.msra.mxu0 0.0
        %1568 = vmatprep.subr.mxu0 0.0
        %1569 = vmatpush1.xpose.msra.mxu0 0.0
        %1570 = vmatprep.subr.mxu0 0.0
        %1571 = vmatpush1.xpose.msra.mxu0 0.0
        %1572 = vmatprep.subr.mxu0 0.0
        %1573 = vmatpush1.xpose.msra.mxu0 0.0
        %1574 = vmatprep.subr.mxu0 0.0
        %1575 = vmatpush1.xpose.msra.mxu0 0.0
        %1576 = vmatprep.subr.mxu0 0.0
        %1577 = vmatpush1.xpose.msra.mxu0 0.0
        %1578 = vmatprep.subr.mxu0 0.0
        %1579 = vmatpush1.xpose.msra.mxu0 0.0
        %1580 = vmatprep.subr.mxu0 0.0
        %1581 = vmatpush1.xpose.msra.mxu0 0.0
        %1582 = vmatprep.subr.mxu0 0.0
        %1583 = vmatpush1.xpose.msra.mxu0 0.0
        %1584 = vmatprep.subr.mxu0 0.0
        %1585 = vmatpush1.xpose.msra.mxu0 0.0
        %1586 = vmatprep.subr.mxu0 0.0
        %1587 = vmatpush1.xpose.msra.mxu0 0.0
        %1588 = vmatprep.subr.mxu0 0.0
        %1589 = vmatpush1.xpose.msra.mxu0 0.0
        %1590 = vmatprep.subr.mxu0 0.0
        %1591 = vmatpush1.xpose.msra.mxu0 0.0
        %1592 = vmatprep.subr.mxu0 0.0
        %1593 = vmatpush1.xpose.msra.mxu0 0.0
        %1594 = vmatprep.subr.mxu0 0.0
        %1595 = vmatpush1.xpose.msra.mxu0 0.0
        %1596 = vmatprep.subr.mxu0 0.0
        %1597 = vmatpush1.xpose.msra.mxu0 0.0
        %1598 = vmatprep.subr.mxu0 0.0
        %1599 = vmatpush1.xpose.msra.mxu0 0.0
        %1600 = vmatprep.subr.mxu0 0.0
        %1601 = vmatpush1.xpose.msra.mxu0 0.0
        %1602 = vmatprep.subr.mxu0 0.0
        %1603 = vmatpush1.xpose.msra.mxu0 0.0
        %1604 = vmatprep.mubr.f32.mxu0 0.0
        %1605 = vmatmul.mubr.f32.gmra.mrb[0].mxu0 %v1526
        %v1606 = vpop.f32.mrb[0].mxu0
        %v1607 = vadd.f32 %v1522, %v1606
        %v1608 = vpop.f32.mrb[0].mxu0
        %1609 = vdwg.mxu0
        %s1610 = scalar_lea.vmem [#allocation7], 16
        %v1611 = vld [vmem:[%s1610] sm:$0xff]
        %s1612 = scalar_lea.vmem [#allocation8], 2
        %v1613 = vld [vmem:[%s1612] sm:$0x1]
        %v1615 = vlaneseq
        %v1616 = vshrl.u32 %v1615, 7
        %v1617 = vsub.s32 0, %v1616
        %v1618 = vrot.slane %v1613, %v1617
        %v1621 = vsel %vm612, %v1611, 0
        %1623 = vmatprep.subr.mxu0 0.0
        %1624 = vmatpush1.xpose.msra.mxu0 %v1621
        %1625 = vmatprep.subr.mxu0 0.0
        %1626 = vmatpush1.xpose.msra.mxu0 0.0
        %1627 = vmatprep.subr.mxu0 0.0
        %1628 = vmatpush1.xpose.msra.mxu0 0.0
        %1629 = vmatprep.subr.mxu0 0.0
        %1630 = vmatpush1.xpose.msra.mxu0 0.0
        %1631 = vmatprep.subr.mxu0 0.0
        %1632 = vmatpush1.xpose.msra.mxu0 0.0
        %1633 = vmatprep.subr.mxu0 0.0
        %1634 = vmatpush1.xpose.msra.mxu0 0.0
        %1635 = vmatprep.subr.mxu0 0.0
        %1636 = vmatpush1.xpose.msra.mxu0 0.0
        %1637 = vmatprep.subr.mxu0 0.0
        %1638 = vmatpush1.xpose.msra.mxu0 0.0
        %1639 = vmatprep.subr.mxu0 0.0
        %1640 = vmatpush1.xpose.msra.mxu0 0.0
        %1641 = vmatprep.subr.mxu0 0.0
        %1642 = vmatpush1.xpose.msra.mxu0 0.0
        %1643 = vmatprep.subr.mxu0 0.0
        %1644 = vmatpush1.xpose.msra.mxu0 0.0
        %1645 = vmatprep.subr.mxu0 0.0
        %1646 = vmatpush1.xpose.msra.mxu0 0.0
        %1647 = vmatprep.subr.mxu0 0.0
        %1648 = vmatpush1.xpose.msra.mxu0 0.0
        %1649 = vmatprep.subr.mxu0 0.0
        %1650 = vmatpush1.xpose.msra.mxu0 0.0
        %1651 = vmatprep.subr.mxu0 0.0
        %1652 = vmatpush1.xpose.msra.mxu0 0.0
        %1653 = vmatprep.subr.mxu0 0.0
        %1654 = vmatpush1.xpose.msra.mxu0 0.0
        %1655 = vmatprep.subr.mxu0 0.0
        %1656 = vmatpush1.xpose.msra.mxu0 0.0
        %1657 = vmatprep.subr.mxu0 0.0
        %1658 = vmatpush1.xpose.msra.mxu0 0.0
        %1659 = vmatprep.subr.mxu0 0.0
        %1660 = vmatpush1.xpose.msra.mxu0 0.0
        %1661 = vmatprep.subr.mxu0 0.0
        %1662 = vmatpush1.xpose.msra.mxu0 0.0
        %1663 = vmatprep.subr.mxu0 0.0
        %1664 = vmatpush1.xpose.msra.mxu0 0.0
        %1665 = vmatprep.subr.mxu0 0.0
        %1666 = vmatpush1.xpose.msra.mxu0 0.0
        %1667 = vmatprep.subr.mxu0 0.0
        %1668 = vmatpush1.xpose.msra.mxu0 0.0
        %1669 = vmatprep.subr.mxu0 0.0
        %1670 = vmatpush1.xpose.msra.mxu0 0.0
        %1671 = vmatprep.subr.mxu0 0.0
        %1672 = vmatpush1.xpose.msra.mxu0 0.0
        %1673 = vmatprep.subr.mxu0 0.0
        %1674 = vmatpush1.xpose.msra.mxu0 0.0
        %1675 = vmatprep.subr.mxu0 0.0
        %1676 = vmatpush1.xpose.msra.mxu0 0.0
        %1677 = vmatprep.subr.mxu0 0.0
        %1678 = vmatpush1.xpose.msra.mxu0 0.0
        %1679 = vmatprep.subr.mxu0 0.0
        %1680 = vmatpush1.xpose.msra.mxu0 0.0
        %1681 = vmatprep.subr.mxu0 0.0
        %1682 = vmatpush1.xpose.msra.mxu0 0.0
        %1683 = vmatprep.subr.mxu0 0.0
        %1684 = vmatpush1.xpose.msra.mxu0 0.0
        %1685 = vmatprep.subr.mxu0 0.0
        %1686 = vmatpush1.xpose.msra.mxu0 0.0
        %1687 = vmatprep.mubr.f32.mxu0 0.0
        %1688 = vmatmul.mubr.f32.gmra.mrb[0].mxu0 %v614
        %v1689 = vpop.f32.mrb[0].mxu0
        %v1690 = vadd.f32 %v1618, %v1689
        %v1691 = vpop.f32.mrb[0].mxu0
        %1692 = vdwg.mxu0
        %s1693 = scalar_lea.vmem [#allocation10], 16
        %v1694 = vld [vmem:[%s1693] sm:$0xff]
        %s1695 = scalar_lea.vmem [#allocation11], 2
        %v1696 = vld [vmem:[%s1695] sm:$0x1]
        %v1698 = vlaneseq
        %v1699 = vshrl.u32 %v1698, 7
        %v1700 = vsub.s32 0, %v1699
        %v1701 = vrot.slane %v1696, %v1700
        %v1704 = vsel %vm612, %v1694, 0
        %1706 = vmatprep.subr.mxu0 0.0
        %1707 = vmatpush1.xpose.msra.mxu0 %v1704
        %1708 = vmatprep.subr.mxu0 0.0
        %1709 = vmatpush1.xpose.msra.mxu0 0.0
        %1710 = vmatprep.subr.mxu0 0.0
        %1711 = vmatpush1.xpose.msra.mxu0 0.0
        %1712 = vmatprep.subr.mxu0 0.0
        %1713 = vmatpush1.xpose.msra.mxu0 0.0
        %1714 = vmatprep.subr.mxu0 0.0
        %1715 = vmatpush1.xpose.msra.mxu0 0.0
        %1716 = vmatprep.subr.mxu0 0.0
        %1717 = vmatpush1.xpose.msra.mxu0 0.0
        %1718 = vmatprep.subr.mxu0 0.0
        %1719 = vmatpush1.xpose.msra.mxu0 0.0
        %1720 = vmatprep.subr.mxu0 0.0
        %1721 = vmatpush1.xpose.msra.mxu0 0.0
        %1722 = vmatprep.subr.mxu0 0.0
        %1723 = vmatpush1.xpose.msra.mxu0 0.0
        %1724 = vmatprep.subr.mxu0 0.0
        %1725 = vmatpush1.xpose.msra.mxu0 0.0
        %1726 = vmatprep.subr.mxu0 0.0
        %1727 = vmatpush1.xpose.msra.mxu0 0.0
        %1728 = vmatprep.subr.mxu0 0.0
        %1729 = vmatpush1.xpose.msra.mxu0 0.0
        %1730 = vmatprep.subr.mxu0 0.0
        %1731 = vmatpush1.xpose.msra.mxu0 0.0
        %1732 = vmatprep.subr.mxu0 0.0
        %1733 = vmatpush1.xpose.msra.mxu0 0.0
        %1734 = vmatprep.subr.mxu0 0.0
        %1735 = vmatpush1.xpose.msra.mxu0 0.0
        %1736 = vmatprep.subr.mxu0 0.0
        %1737 = vmatpush1.xpose.msra.mxu0 0.0
        %1738 = vmatprep.subr.mxu0 0.0
        %1739 = vmatpush1.xpose.msra.mxu0 0.0
        %1740 = vmatprep.subr.mxu0 0.0
        %1741 = vmatpush1.xpose.msra.mxu0 0.0
        %1742 = vmatprep.subr.mxu0 0.0
        %1743 = vmatpush1.xpose.msra.mxu0 0.0
        %1744 = vmatprep.subr.mxu0 0.0
        %1745 = vmatpush1.xpose.msra.mxu0 0.0
        %1746 = vmatprep.subr.mxu0 0.0
        %1747 = vmatpush1.xpose.msra.mxu0 0.0
        %1748 = vmatprep.subr.mxu0 0.0
        %1749 = vmatpush1.xpose.msra.mxu0 0.0
        %1750 = vmatprep.subr.mxu0 0.0
        %1751 = vmatpush1.xpose.msra.mxu0 0.0
        %1752 = vmatprep.subr.mxu0 0.0
        %1753 = vmatpush1.xpose.msra.mxu0 0.0
        %1754 = vmatprep.subr.mxu0 0.0
        %1755 = vmatpush1.xpose.msra.mxu0 0.0
        %1756 = vmatprep.subr.mxu0 0.0
        %1757 = vmatpush1.xpose.msra.mxu0 0.0
        %1758 = vmatprep.subr.mxu0 0.0
        %1759 = vmatpush1.xpose.msra.mxu0 0.0
        %1760 = vmatprep.subr.mxu0 0.0
        %1761 = vmatpush1.xpose.msra.mxu0 0.0
        %1762 = vmatprep.subr.mxu0 0.0
        %1763 = vmatpush1.xpose.msra.mxu0 0.0
        %1764 = vmatprep.subr.mxu0 0.0
        %1765 = vmatpush1.xpose.msra.mxu0 0.0
        %1766 = vmatprep.subr.mxu0 0.0
        %1767 = vmatpush1.xpose.msra.mxu0 0.0
        %1768 = vmatprep.subr.mxu0 0.0
        %1769 = vmatpush1.xpose.msra.mxu0 0.0
        %1770 = vmatprep.mubr.f32.mxu0 0.0
        %1771 = vmatmul.mubr.f32.gmra.mrb[0].mxu0 %v614
        %v1772 = vpop.f32.mrb[0].mxu0
        %v1773 = vadd.f32 %v1701, %v1772
        %v1774 = vpop.f32.mrb[0].mxu0
        %1775 = vdwg.mxu0
        %s1776 = scalar_lea.vmem [#allocation13], 16
        %v1777 = vld [vmem:[%s1776] sm:$0xff]
        %s1778 = scalar_lea.vmem [#allocation14], 2
        %v1779 = vld [vmem:[%s1778] sm:$0x1]
        %v1781 = vlaneseq
        %v1782 = vshrl.u32 %v1781, 7
        %v1783 = vsub.s32 0, %v1782
        %v1784 = vrot.slane %v1779, %v1783
        %v1787 = vsel %vm612, %v1777, 0
        %1789 = vmatprep.subr.mxu0 0.0
        %1790 = vmatpush1.xpose.msra.mxu0 %v1787
        %1791 = vmatprep.subr.mxu0 0.0
        %1792 = vmatpush1.xpose.msra.mxu0 0.0
        %1793 = vmatprep.subr.mxu0 0.0
        %1794 = vmatpush1.xpose.msra.mxu0 0.0
        %1795 = vmatprep.subr.mxu0 0.0
        %1796 = vmatpush1.xpose.msra.mxu0 0.0
        %1797 = vmatprep.subr.mxu0 0.0
        %1798 = vmatpush1.xpose.msra.mxu0 0.0
        %1799 = vmatprep.subr.mxu0 0.0
        %1800 = vmatpush1.xpose.msra.mxu0 0.0
        %1801 = vmatprep.subr.mxu0 0.0
        %1802 = vmatpush1.xpose.msra.mxu0 0.0
        %1803 = vmatprep.subr.mxu0 0.0
        %1804 = vmatpush1.xpose.msra.mxu0 0.0
        %1805 = vmatprep.subr.mxu0 0.0
        %1806 = vmatpush1.xpose.msra.mxu0 0.0
        %1807 = vmatprep.subr.mxu0 0.0
        %1808 = vmatpush1.xpose.msra.mxu0 0.0
        %1809 = vmatprep.subr.mxu0 0.0
        %1810 = vmatpush1.xpose.msra.mxu0 0.0
        %1811 = vmatprep.subr.mxu0 0.0
        %1812 = vmatpush1.xpose.msra.mxu0 0.0
        %1813 = vmatprep.subr.mxu0 0.0
        %1814 = vmatpush1.xpose.msra.mxu0 0.0
        %1815 = vmatprep.subr.mxu0 0.0
        %1816 = vmatpush1.xpose.msra.mxu0 0.0
        %1817 = vmatprep.subr.mxu0 0.0
        %1818 = vmatpush1.xpose.msra.mxu0 0.0
        %1819 = vmatprep.subr.mxu0 0.0
        %1820 = vmatpush1.xpose.msra.mxu0 0.0
        %1821 = vmatprep.subr.mxu0 0.0
        %1822 = vmatpush1.xpose.msra.mxu0 0.0
        %1823 = vmatprep.subr.mxu0 0.0
        %1824 = vmatpush1.xpose.msra.mxu0 0.0
        %1825 = vmatprep.subr.mxu0 0.0
        %1826 = vmatpush1.xpose.msra.mxu0 0.0
        %1827 = vmatprep.subr.mxu0 0.0
        %1828 = vmatpush1.xpose.msra.mxu0 0.0
        %1829 = vmatprep.subr.mxu0 0.0
        %1830 = vmatpush1.xpose.msra.mxu0 0.0
        %1831 = vmatprep.subr.mxu0 0.0
        %1832 = vmatpush1.xpose.msra.mxu0 0.0
        %1833 = vmatprep.subr.mxu0 0.0
        %1834 = vmatpush1.xpose.msra.mxu0 0.0
        %1835 = vmatprep.subr.mxu0 0.0
        %1836 = vmatpush1.xpose.msra.mxu0 0.0
        %1837 = vmatprep.subr.mxu0 0.0
        %1838 = vmatpush1.xpose.msra.mxu0 0.0
        %1839 = vmatprep.subr.mxu0 0.0
        %1840 = vmatpush1.xpose.msra.mxu0 0.0
        %1841 = vmatprep.subr.mxu0 0.0
        %1842 = vmatpush1.xpose.msra.mxu0 0.0
        %1843 = vmatprep.subr.mxu0 0.0
        %1844 = vmatpush1.xpose.msra.mxu0 0.0
        %1845 = vmatprep.subr.mxu0 0.0
        %1846 = vmatpush1.xpose.msra.mxu0 0.0
        %1847 = vmatprep.subr.mxu0 0.0
        %1848 = vmatpush1.xpose.msra.mxu0 0.0
        %1849 = vmatprep.subr.mxu0 0.0
        %1850 = vmatpush1.xpose.msra.mxu0 0.0
        %1851 = vmatprep.subr.mxu0 0.0
        %1852 = vmatpush1.xpose.msra.mxu0 0.0
        %1853 = vmatprep.mubr.f32.mxu0 0.0
        %1854 = vmatmul.mubr.f32.gmra.mrb[0].mxu0 %v614
        %v1855 = vpop.f32.mrb[0].mxu0
        %v1856 = vadd.f32 %v1784, %v1855
        %v1857 = vpop.f32.mrb[0].mxu0
        %1858 = vdwg.mxu0
        %v1860 = vsel %vm851, %v1690, 0
        %v1863 = vsel %vm851, %v1773, 0
        %1865 = vmatprep.subr.mxu0 0.0
        %1866 = vmatpush1.xpose.msra.mxu0 %v1863
        %1867 = vmatprep.subr.mxu0 0.0
        %1868 = vmatpush1.xpose.msra.mxu0 0.0
        %1869 = vmatprep.subr.mxu0 0.0
        %1870 = vmatpush1.xpose.msra.mxu0 0.0
        %1871 = vmatprep.subr.mxu0 0.0
        %1872 = vmatpush1.xpose.msra.mxu0 0.0
        %1873 = vmatprep.subr.mxu0 0.0
        %1874 = vmatpush1.xpose.msra.mxu0 0.0
        %1875 = vmatprep.subr.mxu0 0.0
        %1876 = vmatpush1.xpose.msra.mxu0 0.0
        %1877 = vmatprep.subr.mxu0 0.0
        %1878 = vmatpush1.xpose.msra.mxu0 0.0
        %1879 = vmatprep.subr.mxu0 0.0
        %1880 = vmatpush1.xpose.msra.mxu0 0.0
        %1881 = vmatprep.subr.mxu0 0.0
        %1882 = vmatpush1.xpose.msra.mxu0 0.0
        %1883 = vmatprep.subr.mxu0 0.0
        %1884 = vmatpush1.xpose.msra.mxu0 0.0
        %1885 = vmatprep.subr.mxu0 0.0
        %1886 = vmatpush1.xpose.msra.mxu0 0.0
        %1887 = vmatprep.subr.mxu0 0.0
        %1888 = vmatpush1.xpose.msra.mxu0 0.0
        %1889 = vmatprep.subr.mxu0 0.0
        %1890 = vmatpush1.xpose.msra.mxu0 0.0
        %1891 = vmatprep.subr.mxu0 0.0
        %1892 = vmatpush1.xpose.msra.mxu0 0.0
        %1893 = vmatprep.subr.mxu0 0.0
        %1894 = vmatpush1.xpose.msra.mxu0 0.0
        %1895 = vmatprep.subr.mxu0 0.0
        %1896 = vmatpush1.xpose.msra.mxu0 0.0
        %1897 = vmatprep.subr.mxu0 0.0
        %1898 = vmatpush1.xpose.msra.mxu0 0.0
        %1899 = vmatprep.subr.mxu0 0.0
        %1900 = vmatpush1.xpose.msra.mxu0 0.0
        %1901 = vmatprep.subr.mxu0 0.0
        %1902 = vmatpush1.xpose.msra.mxu0 0.0
        %1903 = vmatprep.subr.mxu0 0.0
        %1904 = vmatpush1.xpose.msra.mxu0 0.0
        %1905 = vmatprep.subr.mxu0 0.0
        %1906 = vmatpush1.xpose.msra.mxu0 0.0
        %1907 = vmatprep.subr.mxu0 0.0
        %1908 = vmatpush1.xpose.msra.mxu0 0.0
        %1909 = vmatprep.subr.mxu0 0.0
        %1910 = vmatpush1.xpose.msra.mxu0 0.0
        %1911 = vmatprep.subr.mxu0 0.0
        %1912 = vmatpush1.xpose.msra.mxu0 0.0
        %1913 = vmatprep.subr.mxu0 0.0
        %1914 = vmatpush1.xpose.msra.mxu0 0.0
        %1915 = vmatprep.subr.mxu0 0.0
        %1916 = vmatpush1.xpose.msra.mxu0 0.0
        %1917 = vmatprep.subr.mxu0 0.0
        %1918 = vmatpush1.xpose.msra.mxu0 0.0
        %1919 = vmatprep.subr.mxu0 0.0
        %1920 = vmatpush1.xpose.msra.mxu0 0.0
        %1921 = vmatprep.subr.mxu0 0.0
        %1922 = vmatpush1.xpose.msra.mxu0 0.0
        %1923 = vmatprep.subr.mxu0 0.0
        %1924 = vmatpush1.xpose.msra.mxu0 0.0
        %1925 = vmatprep.subr.mxu0 0.0
        %1926 = vmatpush1.xpose.msra.mxu0 0.0
        %1927 = vmatprep.subr.mxu0 0.0
        %1928 = vmatpush1.xpose.msra.mxu0 0.0
        %1929 = vmatprep.mubr.f32.mxu0 0.0
        %1930 = vmatmul.mubr.f32.gmra.mrb[0].mxu0 %v1860
        %v1931 = vpop.f32.mrb[0].mxu0
        %v1932 = vadd.f32 0.0, %v1931
        %v1933 = vpop.f32.mrb[0].mxu0
        %1934 = vdwg.mxu0
        %v1935 = vmul.f32 %v1932, 0.35355338
        %v1936 = vadd.f32 %v1935, %v933
        %v1937 = vsel %vm851, %v1936, -inf
        %1938 = vmax.xlane.f32.xlu0 %v1937
        %v1939 = vpop.xlane.xlu0 %1938
        %v1940 = vsub.f32 %v1936, %v1939
        %v1941 = vmul.f32 %v1940, 1.442695
        %v1942 = vpow.pop %v1941
        %v1943 = vsel %vm851, %v1942, 0.0
        %1944 = vadd.xlane.f32.xlu0 %v1943
        %v1945 = vpop.xlane.xlu0 %1944
        %v1946 = vrcp.pop %v1945
        %v1947 = vmul.f32 %v1942, %v1946
        %v1949 = vsel %vm851, %v1947, 0
        %1951 = vmatprep.subr.mxu0 0.0
        %1952 = vmatpush1.msra.mxu0 %v1856
        %1953 = vmatprep.subr.mxu0 0.0
        %1954 = vmatpush1.msra.mxu0 0.0
        %1955 = vmatprep.subr.mxu0 0.0
        %1956 = vmatpush1.msra.mxu0 0.0
        %1957 = vmatprep.subr.mxu0 0.0
        %1958 = vmatpush1.msra.mxu0 0.0
        %1959 = vmatprep.subr.mxu0 0.0
        %1960 = vmatpush1.msra.mxu0 0.0
        %1961 = vmatprep.subr.mxu0 0.0
        %1962 = vmatpush1.msra.mxu0 0.0
        %1963 = vmatprep.subr.mxu0 0.0
        %1964 = vmatpush1.msra.mxu0 0.0
        %1965 = vmatprep.subr.mxu0 0.0
        %1966 = vmatpush1.msra.mxu0 0.0
        %1967 = vmatprep.subr.mxu0 0.0
        %1968 = vmatpush1.msra.mxu0 0.0
        %1969 = vmatprep.subr.mxu0 0.0
        %1970 = vmatpush1.msra.mxu0 0.0
        %1971 = vmatprep.subr.mxu0 0.0
        %1972 = vmatpush1.msra.mxu0 0.0
        %1973 = vmatprep.subr.mxu0 0.0
        %1974 = vmatpush1.msra.mxu0 0.0
        %1975 = vmatprep.subr.mxu0 0.0
        %1976 = vmatpush1.msra.mxu0 0.0
        %1977 = vmatprep.subr.mxu0 0.0
        %1978 = vmatpush1.msra.mxu0 0.0
        %1979 = vmatprep.subr.mxu0 0.0
        %1980 = vmatpush1.msra.mxu0 0.0
        %1981 = vmatprep.subr.mxu0 0.0
        %1982 = vmatpush1.msra.mxu0 0.0
        %1983 = vmatprep.subr.mxu0 0.0
        %1984 = vmatpush1.msra.mxu0 0.0
        %1985 = vmatprep.subr.mxu0 0.0
        %1986 = vmatpush1.msra.mxu0 0.0
        %1987 = vmatprep.subr.mxu0 0.0
        %1988 = vmatpush1.msra.mxu0 0.0
        %1989 = vmatprep.subr.mxu0 0.0
        %1990 = vmatpush1.msra.mxu0 0.0
        %1991 = vmatprep.subr.mxu0 0.0
        %1992 = vmatpush1.msra.mxu0 0.0
        %1993 = vmatprep.subr.mxu0 0.0
        %1994 = vmatpush1.msra.mxu0 0.0
        %1995 = vmatprep.subr.mxu0 0.0
        %1996 = vmatpush1.msra.mxu0 0.0
        %1997 = vmatprep.subr.mxu0 0.0
        %1998 = vmatpush1.msra.mxu0 0.0
        %1999 = vmatprep.subr.mxu0 0.0
        %2000 = vmatpush1.msra.mxu0 0.0
        %2001 = vmatprep.subr.mxu0 0.0
        %2002 = vmatpush1.msra.mxu0 0.0
        %2003 = vmatprep.subr.mxu0 0.0
        %2004 = vmatpush1.msra.mxu0 0.0
        %2005 = vmatprep.subr.mxu0 0.0
        %2006 = vmatpush1.msra.mxu0 0.0
        %2007 = vmatprep.subr.mxu0 0.0
        %2008 = vmatpush1.msra.mxu0 0.0
        %2009 = vmatprep.subr.mxu0 0.0
        %2010 = vmatpush1.msra.mxu0 0.0
        %2011 = vmatprep.subr.mxu0 0.0
        %2012 = vmatpush1.msra.mxu0 0.0
        %2013 = vmatprep.subr.mxu0 0.0
        %2014 = vmatpush1.msra.mxu0 0.0
        %2015 = vmatprep.mubr.f32.mxu0 0.0
        %2016 = vmatmul.mubr.f32.gmra.mrb[0].mxu0 %v1949
        %v2017 = vpop.f32.mrb[0].mxu0
        %v2018 = vadd.f32 0.0, %v2017
        %v2019 = vpop.f32.mrb[0].mxu0
        %2020 = vdwg.mxu0
        %s2021 = scalar_lea.vmem [#allocation16], 64
        %v2022 = vld [vmem:[%s2021] sm:$0xff]
        %v2023 = vld [vmem:[%s2021 + $0x8] sm:$0xff]
        %v2024 = vld [vmem:[%s2021 + $0x10] sm:$0xff]
        %v2025 = vld [vmem:[%s2021 + $0x18] sm:$0xff]
        %v2027 = vsel %vm851, %v2018, 0
        %v2030 = vsel %vm851, %v2022, 0
        %v2033 = vsel %vm851, %v2023, 0
        %v2036 = vsel %vm851, %v2024, 0
        %v2039 = vsel %vm851, %v2025, 0
        %2041 = vmatprep.subr.mxu0 0.0
        %2042 = vmatpush1.xpose.msra.mxu0 %v2030
        %2043 = vmatprep.subr.mxu0 0.0
        %2044 = vmatpush1.xpose.msra.mxu0 %v2033
        %2045 = vmatprep.subr.mxu0 0.0
        %2046 = vmatpush1.xpose.msra.mxu0 %v2036
        %2047 = vmatprep.subr.mxu0 0.0
        %2048 = vmatpush1.xpose.msra.mxu0 %v2039
        %2049 = vmatprep.subr.mxu0 0.0
        %2050 = vmatpush1.xpose.msra.mxu0 0.0
        %2051 = vmatprep.subr.mxu0 0.0
        %2052 = vmatpush1.xpose.msra.mxu0 0.0
        %2053 = vmatprep.subr.mxu0 0.0
        %2054 = vmatpush1.xpose.msra.mxu0 0.0
        %2055 = vmatprep.subr.mxu0 0.0
        %2056 = vmatpush1.xpose.msra.mxu0 0.0
        %2057 = vmatprep.subr.mxu0 0.0
        %2058 = vmatpush1.xpose.msra.mxu0 0.0
        %2059 = vmatprep.subr.mxu0 0.0
        %2060 = vmatpush1.xpose.msra.mxu0 0.0
        %2061 = vmatprep.subr.mxu0 0.0
        %2062 = vmatpush1.xpose.msra.mxu0 0.0
        %2063 = vmatprep.subr.mxu0 0.0
        %2064 = vmatpush1.xpose.msra.mxu0 0.0
        %2065 = vmatprep.subr.mxu0 0.0
        %2066 = vmatpush1.xpose.msra.mxu0 0.0
        %2067 = vmatprep.subr.mxu0 0.0
        %2068 = vmatpush1.xpose.msra.mxu0 0.0
        %2069 = vmatprep.subr.mxu0 0.0
        %2070 = vmatpush1.xpose.msra.mxu0 0.0
        %2071 = vmatprep.subr.mxu0 0.0
        %2072 = vmatpush1.xpose.msra.mxu0 0.0
        %2073 = vmatprep.subr.mxu0 0.0
        %2074 = vmatpush1.xpose.msra.mxu0 0.0
        %2075 = vmatprep.subr.mxu0 0.0
        %2076 = vmatpush1.xpose.msra.mxu0 0.0
        %2077 = vmatprep.subr.mxu0 0.0
        %2078 = vmatpush1.xpose.msra.mxu0 0.0
        %2079 = vmatprep.subr.mxu0 0.0
        %2080 = vmatpush1.xpose.msra.mxu0 0.0
        %2081 = vmatprep.subr.mxu0 0.0
        %2082 = vmatpush1.xpose.msra.mxu0 0.0
        %2083 = vmatprep.subr.mxu0 0.0
        %2084 = vmatpush1.xpose.msra.mxu0 0.0
        %2085 = vmatprep.subr.mxu0 0.0
        %2086 = vmatpush1.xpose.msra.mxu0 0.0
        %2087 = vmatprep.subr.mxu0 0.0
        %2088 = vmatpush1.xpose.msra.mxu0 0.0
        %2089 = vmatprep.subr.mxu0 0.0
        %2090 = vmatpush1.xpose.msra.mxu0 0.0
        %2091 = vmatprep.subr.mxu0 0.0
        %2092 = vmatpush1.xpose.msra.mxu0 0.0
        %2093 = vmatprep.subr.mxu0 0.0
        %2094 = vmatpush1.xpose.msra.mxu0 0.0
        %2095 = vmatprep.subr.mxu0 0.0
        %2096 = vmatpush1.xpose.msra.mxu0 0.0
        %2097 = vmatprep.subr.mxu0 0.0
        %2098 = vmatpush1.xpose.msra.mxu0 0.0
        %2099 = vmatprep.subr.mxu0 0.0
        %2100 = vmatpush1.xpose.msra.mxu0 0.0
        %2101 = vmatprep.subr.mxu0 0.0
        %2102 = vmatpush1.xpose.msra.mxu0 0.0
        %2103 = vmatprep.subr.mxu0 0.0
        %2104 = vmatpush1.xpose.msra.mxu0 0.0
        %2105 = vmatprep.mubr.f32.mxu0 0.0
        %2106 = vmatmul.mubr.f32.gmra.mrb[0].mxu0 %v2027
        %v2107 = vpop.f32.mrb[0].mxu0
        %v2108 = vadd.f32 0.0, %v2107
        %v2109 = vpop.f32.mrb[0].mxu0
        %2110 = vdwg.mxu0
        %v2111 = vadd.f32 %v1607, %v2108
        %s2112 = scalar_lea.vmem [#allocation7], 24
        %v2113 = vld [vmem:[%s2112] sm:$0xff]
        %s2114 = scalar_lea.vmem [#allocation8], 3
        %v2115 = vld [vmem:[%s2114] sm:$0x1]
        %v2117 = vlaneseq
        %v2118 = vshrl.u32 %v2117, 7
        %v2119 = vsub.s32 0, %v2118
        %v2120 = vrot.slane %v2115, %v2119
        %v2123 = vsel %vm612, %v2113, 0
        %2125 = vmatprep.subr.mxu0 0.0
        %2126 = vmatpush1.xpose.msra.mxu0 %v2123
        %2127 = vmatprep.subr.mxu0 0.0
        %2128 = vmatpush1.xpose.msra.mxu0 0.0
        %2129 = vmatprep.subr.mxu0 0.0
        %2130 = vmatpush1.xpose.msra.mxu0 0.0
        %2131 = vmatprep.subr.mxu0 0.0
        %2132 = vmatpush1.xpose.msra.mxu0 0.0
        %2133 = vmatprep.subr.mxu0 0.0
        %2134 = vmatpush1.xpose.msra.mxu0 0.0
        %2135 = vmatprep.subr.mxu0 0.0
        %2136 = vmatpush1.xpose.msra.mxu0 0.0
        %2137 = vmatprep.subr.mxu0 0.0
        %2138 = vmatpush1.xpose.msra.mxu0 0.0
        %2139 = vmatprep.subr.mxu0 0.0
        %2140 = vmatpush1.xpose.msra.mxu0 0.0
        %2141 = vmatprep.subr.mxu0 0.0
        %2142 = vmatpush1.xpose.msra.mxu0 0.0
        %2143 = vmatprep.subr.mxu0 0.0
        %2144 = vmatpush1.xpose.msra.mxu0 0.0
        %2145 = vmatprep.subr.mxu0 0.0
        %2146 = vmatpush1.xpose.msra.mxu0 0.0
        %2147 = vmatprep.subr.mxu0 0.0
        %2148 = vmatpush1.xpose.msra.mxu0 0.0
        %2149 = vmatprep.subr.mxu0 0.0
        %2150 = vmatpush1.xpose.msra.mxu0 0.0
        %2151 = vmatprep.subr.mxu0 0.0
        %2152 = vmatpush1.xpose.msra.mxu0 0.0
        %2153 = vmatprep.subr.mxu0 0.0
        %2154 = vmatpush1.xpose.msra.mxu0 0.0
        %2155 = vmatprep.subr.mxu0 0.0
        %2156 = vmatpush1.xpose.msra.mxu0 0.0
        %2157 = vmatprep.subr.mxu0 0.0
        %2158 = vmatpush1.xpose.msra.mxu0 0.0
        %2159 = vmatprep.subr.mxu0 0.0
        %2160 = vmatpush1.xpose.msra.mxu0 0.0
        %2161 = vmatprep.subr.mxu0 0.0
        %2162 = vmatpush1.xpose.msra.mxu0 0.0
        %2163 = vmatprep.subr.mxu0 0.0
        %2164 = vmatpush1.xpose.msra.mxu0 0.0
        %2165 = vmatprep.subr.mxu0 0.0
        %2166 = vmatpush1.xpose.msra.mxu0 0.0
        %2167 = vmatprep.subr.mxu0 0.0
        %2168 = vmatpush1.xpose.msra.mxu0 0.0
        %2169 = vmatprep.subr.mxu0 0.0
        %2170 = vmatpush1.xpose.msra.mxu0 0.0
        %2171 = vmatprep.subr.mxu0 0.0
        %2172 = vmatpush1.xpose.msra.mxu0 0.0
        %2173 = vmatprep.subr.mxu0 0.0
        %2174 = vmatpush1.xpose.msra.mxu0 0.0
        %2175 = vmatprep.subr.mxu0 0.0
        %2176 = vmatpush1.xpose.msra.mxu0 0.0
        %2177 = vmatprep.subr.mxu0 0.0
        %2178 = vmatpush1.xpose.msra.mxu0 0.0
        %2179 = vmatprep.subr.mxu0 0.0
        %2180 = vmatpush1.xpose.msra.mxu0 0.0
        %2181 = vmatprep.subr.mxu0 0.0
        %2182 = vmatpush1.xpose.msra.mxu0 0.0
        %2183 = vmatprep.subr.mxu0 0.0
        %2184 = vmatpush1.xpose.msra.mxu0 0.0
        %2185 = vmatprep.subr.mxu0 0.0
        %2186 = vmatpush1.xpose.msra.mxu0 0.0
        %2187 = vmatprep.subr.mxu0 0.0
        %2188 = vmatpush1.xpose.msra.mxu0 0.0
        %2189 = vmatprep.mubr.f32.mxu0 0.0
        %2190 = vmatmul.mubr.f32.gmra.mrb[0].mxu0 %v614
        %v2191 = vpop.f32.mrb[0].mxu0
        %v2192 = vadd.f32 %v2120, %v2191
        %v2193 = vpop.f32.mrb[0].mxu0
        %2194 = vdwg.mxu0
        %s2195 = scalar_lea.vmem [#allocation10], 24
        %v2196 = vld [vmem:[%s2195] sm:$0xff]
        %s2197 = scalar_lea.vmem [#allocation11], 3
        %v2198 = vld [vmem:[%s2197] sm:$0x1]
        %v2200 = vlaneseq
        %v2201 = vshrl.u32 %v2200, 7
        %v2202 = vsub.s32 0, %v2201
        %v2203 = vrot.slane %v2198, %v2202
        %v2206 = vsel %vm612, %v2196, 0
        %2208 = vmatprep.subr.mxu0 0.0
        %2209 = vmatpush1.xpose.msra.mxu0 %v2206
        %2210 = vmatprep.subr.mxu0 0.0
        %2211 = vmatpush1.xpose.msra.mxu0 0.0
        %2212 = vmatprep.subr.mxu0 0.0
        %2213 = vmatpush1.xpose.msra.mxu0 0.0
        %2214 = vmatprep.subr.mxu0 0.0
        %2215 = vmatpush1.xpose.msra.mxu0 0.0
        %2216 = vmatprep.subr.mxu0 0.0
        %2217 = vmatpush1.xpose.msra.mxu0 0.0
        %2218 = vmatprep.subr.mxu0 0.0
        %2219 = vmatpush1.xpose.msra.mxu0 0.0
        %2220 = vmatprep.subr.mxu0 0.0
        %2221 = vmatpush1.xpose.msra.mxu0 0.0
        %2222 = vmatprep.subr.mxu0 0.0
        %2223 = vmatpush1.xpose.msra.mxu0 0.0
        %2224 = vmatprep.subr.mxu0 0.0
        %2225 = vmatpush1.xpose.msra.mxu0 0.0
        %2226 = vmatprep.subr.mxu0 0.0
        %2227 = vmatpush1.xpose.msra.mxu0 0.0
        %2228 = vmatprep.subr.mxu0 0.0
        %2229 = vmatpush1.xpose.msra.mxu0 0.0
        %2230 = vmatprep.subr.mxu0 0.0
        %2231 = vmatpush1.xpose.msra.mxu0 0.0
        %2232 = vmatprep.subr.mxu0 0.0
        %2233 = vmatpush1.xpose.msra.mxu0 0.0
        %2234 = vmatprep.subr.mxu0 0.0
        %2235 = vmatpush1.xpose.msra.mxu0 0.0
        %2236 = vmatprep.subr.mxu0 0.0
        %2237 = vmatpush1.xpose.msra.mxu0 0.0
        %2238 = vmatprep.subr.mxu0 0.0
        %2239 = vmatpush1.xpose.msra.mxu0 0.0
        %2240 = vmatprep.subr.mxu0 0.0
        %2241 = vmatpush1.xpose.msra.mxu0 0.0
        %2242 = vmatprep.subr.mxu0 0.0
        %2243 = vmatpush1.xpose.msra.mxu0 0.0
        %2244 = vmatprep.subr.mxu0 0.0
        %2245 = vmatpush1.xpose.msra.mxu0 0.0
        %2246 = vmatprep.subr.mxu0 0.0
        %2247 = vmatpush1.xpose.msra.mxu0 0.0
        %2248 = vmatprep.subr.mxu0 0.0
        %2249 = vmatpush1.xpose.msra.mxu0 0.0
        %2250 = vmatprep.subr.mxu0 0.0
        %2251 = vmatpush1.xpose.msra.mxu0 0.0
        %2252 = vmatprep.subr.mxu0 0.0
        %2253 = vmatpush1.xpose.msra.mxu0 0.0
        %2254 = vmatprep.subr.mxu0 0.0
        %2255 = vmatpush1.xpose.msra.mxu0 0.0
        %2256 = vmatprep.subr.mxu0 0.0
        %2257 = vmatpush1.xpose.msra.mxu0 0.0
        %2258 = vmatprep.subr.mxu0 0.0
        %2259 = vmatpush1.xpose.msra.mxu0 0.0
        %2260 = vmatprep.subr.mxu0 0.0
        %2261 = vmatpush1.xpose.msra.mxu0 0.0
        %2262 = vmatprep.subr.mxu0 0.0
        %2263 = vmatpush1.xpose.msra.mxu0 0.0
        %2264 = vmatprep.subr.mxu0 0.0
        %2265 = vmatpush1.xpose.msra.mxu0 0.0
        %2266 = vmatprep.subr.mxu0 0.0
        %2267 = vmatpush1.xpose.msra.mxu0 0.0
        %2268 = vmatprep.subr.mxu0 0.0
        %2269 = vmatpush1.xpose.msra.mxu0 0.0
        %2270 = vmatprep.subr.mxu0 0.0
        %2271 = vmatpush1.xpose.msra.mxu0 0.0
        %2272 = vmatprep.mubr.f32.mxu0 0.0
        %2273 = vmatmul.mubr.f32.gmra.mrb[0].mxu0 %v614
        %v2274 = vpop.f32.mrb[0].mxu0
        %v2275 = vadd.f32 %v2203, %v2274
        %v2276 = vpop.f32.mrb[0].mxu0
        %2277 = vdwg.mxu0
        %s2278 = scalar_lea.vmem [#allocation13], 24
        %v2279 = vld [vmem:[%s2278] sm:$0xff]
        %s2280 = scalar_lea.vmem [#allocation14], 3
        %v2281 = vld [vmem:[%s2280] sm:$0x1]
        %v2283 = vlaneseq
        %v2284 = vshrl.u32 %v2283, 7
        %v2285 = vsub.s32 0, %v2284
        %v2286 = vrot.slane %v2281, %v2285
        %v2289 = vsel %vm612, %v2279, 0
        %2291 = vmatprep.subr.mxu0 0.0
        %2292 = vmatpush1.xpose.msra.mxu0 %v2289
        %2293 = vmatprep.subr.mxu0 0.0
        %2294 = vmatpush1.xpose.msra.mxu0 0.0
        %2295 = vmatprep.subr.mxu0 0.0
        %2296 = vmatpush1.xpose.msra.mxu0 0.0
        %2297 = vmatprep.subr.mxu0 0.0
        %2298 = vmatpush1.xpose.msra.mxu0 0.0
        %2299 = vmatprep.subr.mxu0 0.0
        %2300 = vmatpush1.xpose.msra.mxu0 0.0
        %2301 = vmatprep.subr.mxu0 0.0
        %2302 = vmatpush1.xpose.msra.mxu0 0.0
        %2303 = vmatprep.subr.mxu0 0.0
        %2304 = vmatpush1.xpose.msra.mxu0 0.0
        %2305 = vmatprep.subr.mxu0 0.0
        %2306 = vmatpush1.xpose.msra.mxu0 0.0
        %2307 = vmatprep.subr.mxu0 0.0
        %2308 = vmatpush1.xpose.msra.mxu0 0.0
        %2309 = vmatprep.subr.mxu0 0.0
        %2310 = vmatpush1.xpose.msra.mxu0 0.0
        %2311 = vmatprep.subr.mxu0 0.0
        %2312 = vmatpush1.xpose.msra.mxu0 0.0
        %2313 = vmatprep.subr.mxu0 0.0
        %2314 = vmatpush1.xpose.msra.mxu0 0.0
        %2315 = vmatprep.subr.mxu0 0.0
        %2316 = vmatpush1.xpose.msra.mxu0 0.0
        %2317 = vmatprep.subr.mxu0 0.0
        %2318 = vmatpush1.xpose.msra.mxu0 0.0
        %2319 = vmatprep.subr.mxu0 0.0
        %2320 = vmatpush1.xpose.msra.mxu0 0.0
        %2321 = vmatprep.subr.mxu0 0.0
        %2322 = vmatpush1.xpose.msra.mxu0 0.0
        %2323 = vmatprep.subr.mxu0 0.0
        %2324 = vmatpush1.xpose.msra.mxu0 0.0
        %2325 = vmatprep.subr.mxu0 0.0
        %2326 = vmatpush1.xpose.msra.mxu0 0.0
        %2327 = vmatprep.subr.mxu0 0.0
        %2328 = vmatpush1.xpose.msra.mxu0 0.0
        %2329 = vmatprep.subr.mxu0 0.0
        %2330 = vmatpush1.xpose.msra.mxu0 0.0
        %2331 = vmatprep.subr.mxu0 0.0
        %2332 = vmatpush1.xpose.msra.mxu0 0.0
        %2333 = vmatprep.subr.mxu0 0.0
        %2334 = vmatpush1.xpose.msra.mxu0 0.0
        %2335 = vmatprep.subr.mxu0 0.0
        %2336 = vmatpush1.xpose.msra.mxu0 0.0
        %2337 = vmatprep.subr.mxu0 0.0
        %2338 = vmatpush1.xpose.msra.mxu0 0.0
        %2339 = vmatprep.subr.mxu0 0.0
        %2340 = vmatpush1.xpose.msra.mxu0 0.0
        %2341 = vmatprep.subr.mxu0 0.0
        %2342 = vmatpush1.xpose.msra.mxu0 0.0
        %2343 = vmatprep.subr.mxu0 0.0
        %2344 = vmatpush1.xpose.msra.mxu0 0.0
        %2345 = vmatprep.subr.mxu0 0.0
        %2346 = vmatpush1.xpose.msra.mxu0 0.0
        %2347 = vmatprep.subr.mxu0 0.0
        %2348 = vmatpush1.xpose.msra.mxu0 0.0
        %2349 = vmatprep.subr.mxu0 0.0
        %2350 = vmatpush1.xpose.msra.mxu0 0.0
        %2351 = vmatprep.subr.mxu0 0.0
        %2352 = vmatpush1.xpose.msra.mxu0 0.0
        %2353 = vmatprep.subr.mxu0 0.0
        %2354 = vmatpush1.xpose.msra.mxu0 0.0
        %2355 = vmatprep.mubr.f32.mxu0 0.0
        %2356 = vmatmul.mubr.f32.gmra.mrb[0].mxu0 %v614
        %v2357 = vpop.f32.mrb[0].mxu0
        %v2358 = vadd.f32 %v2286, %v2357
        %v2359 = vpop.f32.mrb[0].mxu0
        %2360 = vdwg.mxu0
        %v2362 = vsel %vm851, %v2192, 0
        %v2365 = vsel %vm851, %v2275, 0
        %2367 = vmatprep.subr.mxu0 0.0
        %2368 = vmatpush1.xpose.msra.mxu0 %v2365
        %2369 = vmatprep.subr.mxu0 0.0
        %2370 = vmatpush1.xpose.msra.mxu0 0.0
        %2371 = vmatprep.subr.mxu0 0.0
        %2372 = vmatpush1.xpose.msra.mxu0 0.0
        %2373 = vmatprep.subr.mxu0 0.0
        %2374 = vmatpush1.xpose.msra.mxu0 0.0
        %2375 = vmatprep.subr.mxu0 0.0
        %2376 = vmatpush1.xpose.msra.mxu0 0.0
        %2377 = vmatprep.subr.mxu0 0.0
        %2378 = vmatpush1.xpose.msra.mxu0 0.0
        %2379 = vmatprep.subr.mxu0 0.0
        %2380 = vmatpush1.xpose.msra.mxu0 0.0
        %2381 = vmatprep.subr.mxu0 0.0
        %2382 = vmatpush1.xpose.msra.mxu0 0.0
        %2383 = vmatprep.subr.mxu0 0.0
        %2384 = vmatpush1.xpose.msra.mxu0 0.0
        %2385 = vmatprep.subr.mxu0 0.0
        %2386 = vmatpush1.xpose.msra.mxu0 0.0
        %2387 = vmatprep.subr.mxu0 0.0
        %2388 = vmatpush1.xpose.msra.mxu0 0.0
        %2389 = vmatprep.subr.mxu0 0.0
        %2390 = vmatpush1.xpose.msra.mxu0 0.0
        %2391 = vmatprep.subr.mxu0 0.0
        %2392 = vmatpush1.xpose.msra.mxu0 0.0
        %2393 = vmatprep.subr.mxu0 0.0
        %2394 = vmatpush1.xpose.msra.mxu0 0.0
        %2395 = vmatprep.subr.mxu0 0.0
        %2396 = vmatpush1.xpose.msra.mxu0 0.0
        %2397 = vmatprep.subr.mxu0 0.0
        %2398 = vmatpush1.xpose.msra.mxu0 0.0
        %2399 = vmatprep.subr.mxu0 0.0
        %2400 = vmatpush1.xpose.msra.mxu0 0.0
        %2401 = vmatprep.subr.mxu0 0.0
        %2402 = vmatpush1.xpose.msra.mxu0 0.0
        %2403 = vmatprep.subr.mxu0 0.0
        %2404 = vmatpush1.xpose.msra.mxu0 0.0
        %2405 = vmatprep.subr.mxu0 0.0
        %2406 = vmatpush1.xpose.msra.mxu0 0.0
        %2407 = vmatprep.subr.mxu0 0.0
        %2408 = vmatpush1.xpose.msra.mxu0 0.0
        %2409 = vmatprep.subr.mxu0 0.0
        %2410 = vmatpush1.xpose.msra.mxu0 0.0
        %2411 = vmatprep.subr.mxu0 0.0
        %2412 = vmatpush1.xpose.msra.mxu0 0.0
        %2413 = vmatprep.subr.mxu0 0.0
        %2414 = vmatpush1.xpose.msra.mxu0 0.0
        %2415 = vmatprep.subr.mxu0 0.0
        %2416 = vmatpush1.xpose.msra.mxu0 0.0
        %2417 = vmatprep.subr.mxu0 0.0
        %2418 = vmatpush1.xpose.msra.mxu0 0.0
        %2419 = vmatprep.subr.mxu0 0.0
        %2420 = vmatpush1.xpose.msra.mxu0 0.0
        %2421 = vmatprep.subr.mxu0 0.0
        %2422 = vmatpush1.xpose.msra.mxu0 0.0
        %2423 = vmatprep.subr.mxu0 0.0
        %2424 = vmatpush1.xpose.msra.mxu0 0.0
        %2425 = vmatprep.subr.mxu0 0.0
        %2426 = vmatpush1.xpose.msra.mxu0 0.0
        %2427 = vmatprep.subr.mxu0 0.0
        %2428 = vmatpush1.xpose.msra.mxu0 0.0
        %2429 = vmatprep.subr.mxu0 0.0
        %2430 = vmatpush1.xpose.msra.mxu0 0.0
        %2431 = vmatprep.mubr.f32.mxu0 0.0
        %2432 = vmatmul.mubr.f32.gmra.mrb[0].mxu0 %v2362
        %v2433 = vpop.f32.mrb[0].mxu0
        %v2434 = vadd.f32 0.0, %v2433
        %v2435 = vpop.f32.mrb[0].mxu0
        %2436 = vdwg.mxu0
        %v2437 = vmul.f32 %v2434, 0.35355338
        %v2438 = vadd.f32 %v2437, %v933
        %v2439 = vsel %vm851, %v2438, -inf
        %2440 = vmax.xlane.f32.xlu0 %v2439
        %v2441 = vpop.xlane.xlu0 %2440
        %v2442 = vsub.f32 %v2438, %v2441
        %v2443 = vmul.f32 %v2442, 1.442695
        %v2444 = vpow.pop %v2443
        %v2445 = vsel %vm851, %v2444, 0.0
        %2446 = vadd.xlane.f32.xlu0 %v2445
        %v2447 = vpop.xlane.xlu0 %2446
        %v2448 = vrcp.pop %v2447
        %v2449 = vmul.f32 %v2444, %v2448
        %v2451 = vsel %vm851, %v2449, 0
        %2453 = vmatprep.subr.mxu0 0.0
        %2454 = vmatpush1.msra.mxu0 %v2358
        %2455 = vmatprep.subr.mxu0 0.0
        %2456 = vmatpush1.msra.mxu0 0.0
        %2457 = vmatprep.subr.mxu0 0.0
        %2458 = vmatpush1.msra.mxu0 0.0
        %2459 = vmatprep.subr.mxu0 0.0
        %2460 = vmatpush1.msra.mxu0 0.0
        %2461 = vmatprep.subr.mxu0 0.0
        %2462 = vmatpush1.msra.mxu0 0.0
        %2463 = vmatprep.subr.mxu0 0.0
        %2464 = vmatpush1.msra.mxu0 0.0
        %2465 = vmatprep.subr.mxu0 0.0
        %2466 = vmatpush1.msra.mxu0 0.0
        %2467 = vmatprep.subr.mxu0 0.0
        %2468 = vmatpush1.msra.mxu0 0.0
        %2469 = vmatprep.subr.mxu0 0.0
        %2470 = vmatpush1.msra.mxu0 0.0
        %2471 = vmatprep.subr.mxu0 0.0
        %2472 = vmatpush1.msra.mxu0 0.0
        %2473 = vmatprep.subr.mxu0 0.0
        %2474 = vmatpush1.msra.mxu0 0.0
        %2475 = vmatprep.subr.mxu0 0.0
        %2476 = vmatpush1.msra.mxu0 0.0
        %2477 = vmatprep.subr.mxu0 0.0
        %2478 = vmatpush1.msra.mxu0 0.0
        %2479 = vmatprep.subr.mxu0 0.0
        %2480 = vmatpush1.msra.mxu0 0.0
        %2481 = vmatprep.subr.mxu0 0.0
        %2482 = vmatpush1.msra.mxu0 0.0
        %2483 = vmatprep.subr.mxu0 0.0
        %2484 = vmatpush1.msra.mxu0 0.0
        %2485 = vmatprep.subr.mxu0 0.0
        %2486 = vmatpush1.msra.mxu0 0.0
        %2487 = vmatprep.subr.mxu0 0.0
        %2488 = vmatpush1.msra.mxu0 0.0
        %2489 = vmatprep.subr.mxu0 0.0
        %2490 = vmatpush1.msra.mxu0 0.0
        %2491 = vmatprep.subr.mxu0 0.0
        %2492 = vmatpush1.msra.mxu0 0.0
        %2493 = vmatprep.subr.mxu0 0.0
        %2494 = vmatpush1.msra.mxu0 0.0
        %2495 = vmatprep.subr.mxu0 0.0
        %2496 = vmatpush1.msra.mxu0 0.0
        %2497 = vmatprep.subr.mxu0 0.0
        %2498 = vmatpush1.msra.mxu0 0.0
        %2499 = vmatprep.subr.mxu0 0.0
        %2500 = vmatpush1.msra.mxu0 0.0
        %2501 = vmatprep.subr.mxu0 0.0
        %2502 = vmatpush1.msra.mxu0 0.0
        %2503 = vmatprep.subr.mxu0 0.0
        %2504 = vmatpush1.msra.mxu0 0.0
        %2505 = vmatprep.subr.mxu0 0.0
        %2506 = vmatpush1.msra.mxu0 0.0
        %2507 = vmatprep.subr.mxu0 0.0
        %2508 = vmatpush1.msra.mxu0 0.0
        %2509 = vmatprep.subr.mxu0 0.0
        %2510 = vmatpush1.msra.mxu0 0.0
        %2511 = vmatprep.subr.mxu0 0.0
        %2512 = vmatpush1.msra.mxu0 0.0
        %2513 = vmatprep.subr.mxu0 0.0
        %2514 = vmatpush1.msra.mxu0 0.0
        %2515 = vmatprep.subr.mxu0 0.0
        %2516 = vmatpush1.msra.mxu0 0.0
        %2517 = vmatprep.mubr.f32.mxu0 0.0
        %2518 = vmatmul.mubr.f32.gmra.mrb[0].mxu0 %v2451
        %v2519 = vpop.f32.mrb[0].mxu0
        %v2520 = vadd.f32 0.0, %v2519
        %v2521 = vpop.f32.mrb[0].mxu0
        %2522 = vdwg.mxu0
        %s2523 = scalar_lea.vmem [#allocation16], 96
        %v2524 = vld [vmem:[%s2523] sm:$0xff]
        %v2525 = vld [vmem:[%s2523 + $0x8] sm:$0xff]
        %v2526 = vld [vmem:[%s2523 + $0x10] sm:$0xff]
        %v2527 = vld [vmem:[%s2523 + $0x18] sm:$0xff]
        %v2529 = vsel %vm851, %v2520, 0
        %v2532 = vsel %vm851, %v2524, 0
        %v2535 = vsel %vm851, %v2525, 0
        %v2538 = vsel %vm851, %v2526, 0
        %v2541 = vsel %vm851, %v2527, 0
        %2543 = vmatprep.subr.mxu0 0.0
        %2544 = vmatpush1.xpose.msra.mxu0 %v2532
        %2545 = vmatprep.subr.mxu0 0.0
        %2546 = vmatpush1.xpose.msra.mxu0 %v2535
        %2547 = vmatprep.subr.mxu0 0.0
        %2548 = vmatpush1.xpose.msra.mxu0 %v2538
        %2549 = vmatprep.subr.mxu0 0.0
        %2550 = vmatpush1.xpose.msra.mxu0 %v2541
        %2551 = vmatprep.subr.mxu0 0.0
        %2552 = vmatpush1.xpose.msra.mxu0 0.0
        %2553 = vmatprep.subr.mxu0 0.0
        %2554 = vmatpush1.xpose.msra.mxu0 0.0
        %2555 = vmatprep.subr.mxu0 0.0
        %2556 = vmatpush1.xpose.msra.mxu0 0.0
        %2557 = vmatprep.subr.mxu0 0.0
        %2558 = vmatpush1.xpose.msra.mxu0 0.0
        %2559 = vmatprep.subr.mxu0 0.0
        %2560 = vmatpush1.xpose.msra.mxu0 0.0
        %2561 = vmatprep.subr.mxu0 0.0
        %2562 = vmatpush1.xpose.msra.mxu0 0.0
        %2563 = vmatprep.subr.mxu0 0.0
        %2564 = vmatpush1.xpose.msra.mxu0 0.0
        %2565 = vmatprep.subr.mxu0 0.0
        %2566 = vmatpush1.xpose.msra.mxu0 0.0
        %2567 = vmatprep.subr.mxu0 0.0
        %2568 = vmatpush1.xpose.msra.mxu0 0.0
        %2569 = vmatprep.subr.mxu0 0.0
        %2570 = vmatpush1.xpose.msra.mxu0 0.0
        %2571 = vmatprep.subr.mxu0 0.0
        %2572 = vmatpush1.xpose.msra.mxu0 0.0
        %2573 = vmatprep.subr.mxu0 0.0
        %2574 = vmatpush1.xpose.msra.mxu0 0.0
        %2575 = vmatprep.subr.mxu0 0.0
        %2576 = vmatpush1.xpose.msra.mxu0 0.0
        %2577 = vmatprep.subr.mxu0 0.0
        %2578 = vmatpush1.xpose.msra.mxu0 0.0
        %2579 = vmatprep.subr.mxu0 0.0
        %2580 = vmatpush1.xpose.msra.mxu0 0.0
        %2581 = vmatprep.subr.mxu0 0.0
        %2582 = vmatpush1.xpose.msra.mxu0 0.0
        %2583 = vmatprep.subr.mxu0 0.0
        %2584 = vmatpush1.xpose.msra.mxu0 0.0
        %2585 = vmatprep.subr.mxu0 0.0
        %2586 = vmatpush1.xpose.msra.mxu0 0.0
        %2587 = vmatprep.subr.mxu0 0.0
        %2588 = vmatpush1.xpose.msra.mxu0 0.0
        %2589 = vmatprep.subr.mxu0 0.0
        %2590 = vmatpush1.xpose.msra.mxu0 0.0
        %2591 = vmatprep.subr.mxu0 0.0
        %2592 = vmatpush1.xpose.msra.mxu0 0.0
        %2593 = vmatprep.subr.mxu0 0.0
        %2594 = vmatpush1.xpose.msra.mxu0 0.0
        %2595 = vmatprep.subr.mxu0 0.0
        %2596 = vmatpush1.xpose.msra.mxu0 0.0
        %2597 = vmatprep.subr.mxu0 0.0
        %2598 = vmatpush1.xpose.msra.mxu0 0.0
        %2599 = vmatprep.subr.mxu0 0.0
        %2600 = vmatpush1.xpose.msra.mxu0 0.0
        %2601 = vmatprep.subr.mxu0 0.0
        %2602 = vmatpush1.xpose.msra.mxu0 0.0
        %2603 = vmatprep.subr.mxu0 0.0
        %2604 = vmatpush1.xpose.msra.mxu0 0.0
        %2605 = vmatprep.subr.mxu0 0.0
        %2606 = vmatpush1.xpose.msra.mxu0 0.0
        %2607 = vmatprep.mubr.f32.mxu0 0.0
        %2608 = vmatmul.mubr.f32.gmra.mrb[0].mxu0 %v2529
        %v2609 = vpop.f32.mrb[0].mxu0
        %v2610 = vadd.f32 0.0, %v2609
        %v2611 = vpop.f32.mrb[0].mxu0
        %2612 = vdwg.mxu0
        %v2613 = vadd.f32 %v2111, %v2610
        %v2614 = vld [vmem:[#allocation17] sm:$0x1]
        %v2616 = vlaneseq
        %v2617 = vshrl.u32 %v2616, 7
        %v2618 = vsub.s32 0, %v2617
        %v2619 = vrot.slane %v2614, %v2618
        %v2621 = vadd.f32 %v2613, %v2619
        %v2622 = vadd.f32 %v2621, %v602
        %v2623 = vsel %vm612, %v2622, 0.0
        %2624 = vadd.xlane.f32.xlu0 %v2623
        %v2625 = vpop.xlane.xlu0 %2624
        %v2626 = vrcp.pop 32.0
        %v2627 = vmul.f32 %v2625, %v2626
        %v2628 = vsub.f32 %v2622, %v2627
        %v2629 = vmul.f32 %v2628, %v2628
        %v2630 = vsel %vm612, %v2629, 0.0
        %2631 = vadd.xlane.f32.xlu0 %v2630
        %v2632 = vpop.xlane.xlu0 %2631
        %v2633 = vmul.f32 %v2632, %v2626
        %v2634 = vadd.f32 %v2633, 1e-12
        %v2635 = vrsqrt.pop %v2634
        %v2636 = vmul.f32 %v2628, %v2635
        %v2637 = vld [vmem:[#allocation19] sm:$0x1]
        %v2639 = vlaneseq
        %v2640 = vshrl.u32 %v2639, 7
        %v2641 = vsub.s32 0, %v2640
        %v2642 = vrot.slane %v2637, %v2641
        %v2644 = vmul.f32 %v2636, %v2642
        %v2645 = vld [vmem:[#allocation20] sm:$0x1]
        %v2647 = vlaneseq
        %v2648 = vshrl.u32 %v2647, 7
        %v2649 = vsub.s32 0, %v2648
        %v2650 = vrot.slane %v2645, %v2649
        %v2652 = vadd.f32 %v2644, %v2650
        %2653 = vst.msk [vmem:[%s601] sm:$0xff] %vm612, %v2652
        %s2654 = sand.u32 %s307, 1
        %s2655 = scalar_lea.sflag [#allocation4], %s2654
        %s2656 = sand.u32 %s307, 1
        %s2657 = smul.addr %s2656, 8
        %s2658 = scalar_lea.vmem [#allocation22], %s2657
        // Predicated region
        $region117: #{tpu_custom_call.1} parent=67 // pred_check
          %p2659 = pneg %p317
        $region118: #{tpu_custom_call.1} parent=67 // pred_check_branch
          %2661 = sbr.rel (%p2659) target = $region120
        $region119: #{tpu_custom_call.1} parent=67 // pred_region
          %s2663 = ssub.s32 128, 128
          %2664 = vsyncadd %s2655, %s2663
          %s2665 = smul.addr %s37, 128
          %s2666 = scalar_lea.hbm %s12, %s2665
          %s2668 = sshll.u32 %s2658, 4
          %s2669 = int_to_ptr.vmem [resolvable:$true] %s2668
          %2671 = dma.vmem_to_hbm [thread:$0]  %s2669, 128, %s2666, %s2655
        $region120: #{tpu_custom_call.1} parent=67 // pred_fallthru
          _
      $region68: #{tpu_custom_call.1} parent=5 // pred_fallthru
        _
      %p2672 = scmp.le.s32.totalorder 2, %s32
      // Predicated region
      $region121: #{tpu_custom_call.1} parent=5 // pred_check
        %p2673 = pneg %p2672
      $region122: #{tpu_custom_call.1} parent=5 // pred_check_branch
        %2675 = sbr.rel (%p2673) target = $region124
      $region123: #{tpu_custom_call.1} parent=5 // pred_region
        %s2676 = ssub.s32 %s32, 2
        // Predicated region
        $region125: #{tpu_custom_call.1} parent=123 // pred_check
          %p2677 = pneg %p323
        $region126: #{tpu_custom_call.1} parent=123 // pred_check_branch
          %2679 = sbr.rel (%p2677) target = $region128
        $region127: #{tpu_custom_call.1} parent=123 // pred_region
          %s2680 = sand.u32 %s308, 1
          %s2681 = scalar_lea.sflag [#allocation4], %s2680
          %s2682 = sand.u32 %s308, 1
          %s2683 = smul.addr %s2682, 8
          %s2684 = scalar_lea.vmem [#allocation22], %s2683
          %2685 = dma.done %s2681, 128
        $region128: #{tpu_custom_call.1} parent=123 // pred_fallthru
          _
      $region124: #{tpu_custom_call.1} parent=5 // pred_fallthru
        _
    $region6: #{tpu_custom_call.1} parent=1 // loop_footer
      %s36 = sadd.s32 1, %s32
    $region7: #{tpu_custom_call.1} parent=1 // loop_footer_branch
      %31 = sbr.rel target = $region3
    $region8: #{tpu_custom_call.1} parent=1 // loop_exit
      _
    %2686 = vsyncpa [#allocation3], 1
    %s2687 = scalar_lea.sflag [#allocation3], 1
    %2688 = vsyncpa %s2687, 1
    %2689 = vsyncpa [#allocation6], 1
    %s2690 = scalar_lea.sflag [#allocation6], 1
    %2691 = vsyncpa %s2690, 1
    %2692 = vsyncpa [#allocation9], 1
    %2693 = vsyncpa [#allocation12], 1
    %2694 = vsyncpa [#allocation15], 1
    %2695 = vsyncpa [#allocation18], 1
    %2696 = vsyncpa [#allocation21], 1
    %2697 = vsyncpa [#allocation4], 1
    %s2698 = scalar_lea.sflag [#allocation4], 1
    %2699 = vsyncpa %s2698, 1

</llo_original>
